<compile_context>
chip_gen: v7x
topology: tpu7x:2x2x1
jax: 0.10.0
libtpu: 0.0.40
codegen_flags: <defaults>
</compile_context>

<pallas_src>
import math
import functools

import jax
import jax.numpy as jnp
from jax.experimental import pallas as pl
from jax.experimental.pallas import tpu as pltpu


def _rup(x, m):
    return ((x + m - 1) // m) * m


def decoder_kernel(x_ref, h0_ref, c0_ref, enc_ref,
                   wih_ref, whh_ref, bg_ref,
                   win_ref, wo_mix_ref, wo_in_ref,
                   wcls_ref, bcls_ref,
                   out_ref,
                   y_scr, *, hidden, tgt_len, btile):
    H, T, Bt = hidden, tgt_len, btile          # H is the padded hidden (Hp)
    scale = jnp.float32(math.sqrt(0.5))
    bf16 = jnp.bfloat16

    x_tm = x_ref[0]                            # (T*Bt, Hp) f32, time-major
    enc = enc_ref[0]                           # (Bt, S, Hp) bf16
    whh = whh_ref[...]                         # (Hp, 4Hp)  bf16

    # ---- hoisted input-gate matmul: one dense bf16 MXU matmul for the block ----
    gx = (jnp.dot(x_tm.astype(bf16), wih_ref[...],
                  preferred_element_type=jnp.float32)
          + bg_ref[...])                       # (T*Bt, 4Hp) f32

    # ---- LSTM recurrence over time, fully unrolled, batched carries (Bt, Hp) ----
    h = h0_ref[0]                              # (Bt, Hp) f32
    c = c0_ref[0]                              # (Bt, Hp) f32
    for t in range(T):                         # T small & static -> full unroll
        g = gx[t * Bt:(t + 1) * Bt, :] + jnp.dot(
            h.astype(bf16), whh, preferred_element_type=jnp.float32)   # (Bt, 4Hp)
        # gates are whole 128-lane slabs thanks to per-gate Hp padding
        i_g = jax.nn.sigmoid(g[:, 0:H])
        f_g = jax.nn.sigmoid(g[:, H:2 * H])
        g_g = jnp.tanh(g[:, 2 * H:3 * H])
        o_g = jax.nn.sigmoid(g[:, 3 * H:4 * H])
        c = f_g * c + i_g * g_g
        h = o_g * jnp.tanh(c)
        y_scr[pl.ds(t * Bt, Bt), :] = h        # Bt multiple of 8 -> aligned stores

    # ---- residual mix 1 (time-major), then the single layout change ----
    x1_tm = (x_tm + y_scr[...]) * scale                       # (T*Bt, Hp) f32
    x1 = jnp.transpose(x1_tm.reshape(T, Bt, H), (1, 0, 2))    # (Bt, T, Hp)
    x1_flat = x1.reshape(Bt * T, H)                           # free reshape

    # ---- Attention (batch-major, no further transposes) ----
    xp = jnp.dot(x1_flat.astype(bf16), win_ref[...],
                 preferred_element_type=jnp.float32).reshape(Bt, T, H)
    scores = jnp.einsum('bth,bsh->bts', xp.astype(bf16), enc,
                        preferred_element_type=jnp.float32)   # QK^T-style, MXU
    m = jnp.max(scores, axis=-1, keepdims=True)
    p = jnp.exp(scores - m)
    attn = p * pl.reciprocal(jnp.sum(p, axis=-1, keepdims=True), approx=True)
    mix = jnp.einsum('bts,bsh->bth', attn.astype(bf16), enc,
                     preferred_element_type=jnp.float32).reshape(Bt * T, H)
    # output_proj(concat([mix, x1])) == mix @ Wo[:H] + x1 @ Wo[H:]
    att = jnp.tanh(
        jnp.dot(mix.astype(bf16), wo_mix_ref[...], preferred_element_type=jnp.float32)
        + jnp.dot(x1_flat.astype(bf16), wo_in_ref[...],
                  preferred_element_type=jnp.float32))

    # ---- residual mix 2 ----
    x2 = (x1_flat + att) * scale                              # (Bt*T, Hp) f32

    # ---- classifier + log_softmax (lane-dense padded vocab) ----
    logits = (jnp.dot(x2.astype(bf16), wcls_ref[...],
                      preferred_element_type=jnp.float32)
              + bcls_ref[...])                                # (Bt*T, Vp)
    lmax = jnp.max(logits, axis=-1, keepdims=True)
    lse = jnp.log(jnp.sum(jnp.exp(logits - lmax), axis=-1, keepdims=True)) + lmax
    out_ref[0] = (logits - lse).reshape(Bt, T, -1)            # batch-major store


def _pad_gate_weight(w, H, Hp):
    """(4H, H) torch LSTM weight -> (Hp, 4Hp) transposed, per-gate zero-padded."""
    wt = jnp.asarray(w, jnp.float32).T                        # (H, 4H)
    out = jnp.zeros((Hp, 4 * Hp), jnp.float32)
    for g in range(4):
        out = out.at[:H, g * Hp:g * Hp + H].set(wt[:, g * H:(g + 1) * H])
    return out


def _pad_gate_bias(b, H, Hp):
    out = jnp.zeros((4 * Hp,), jnp.float32)
    for g in range(4):
        out = out.at[g * Hp:g * Hp + H].set(jnp.asarray(b[g * H:(g + 1) * H], jnp.float32))
    return out[None, :]


def decoder_forward(x_ids, enc_h, enc_c, enc_out, params):
    """x_ids: (B,T) int32; enc_h/enc_c: (1,B,H); enc_out: (B,S,H)."""
    # Glue: embedding gather + eval-mode dropout (identity).
    x_emb = params['embedding'][x_ids].astype(jnp.float32)    # (B, T, H)
    B, T, H = x_emb.shape
    S = enc_out.shape[1]
    V = params['out_w'].shape[0]
    Hp = _rup(H, 128)                                         # lane-aligned hidden
    Vp = _rup(max(V, 1), 128)                                 # lane-dense vocab pad

    # ---- batch tiling: Bt multiple of 8, capped so nb >= 2 when batch allows ----
    Bp8 = _rup(B, 8)
    Bt = min(64, Bp8)
    if Bp8 > 8:                                               # v7x: shard across 2 TCs
        Bt = min(Bt, _rup(-(-Bp8 // 2), 8))
    nb = -(-B // Bt)
    Bp = nb * Bt

    # ---- zero-pad batch and feature dims (exact: padded lanes/rows stay inert) ----
    x_p = jnp.zeros((Bp, T, Hp), jnp.float32).at[:B, :, :H].set(x_emb)
    h0 = jnp.zeros((Bp, Hp), jnp.float32).at[:B, :H].set(enc_h[0].astype(jnp.float32))
    c0 = jnp.zeros((Bp, Hp), jnp.float32).at[:B, :H].set(enc_c[0].astype(jnp.float32))
    enc = (jnp.zeros((Bp, S, Hp), jnp.float32)
              .at[:B, :, :H].set(enc_out.astype(jnp.float32))
              .astype(jnp.bfloat16))                          # bf16 encoder (1x DMA)

    # Time-major flattening per batch tile: row = t*Bt + b (contiguous per step).
    x_tm = (x_p.reshape(nb, Bt, T, Hp).transpose(0, 2, 1, 3).reshape(nb, T * Bt, Hp))
    h0 = h0.reshape(nb, Bt, Hp)
    c0 = c0.reshape(nb, Bt, Hp)
    enc = enc.reshape(nb, Bt, S, Hp)

    # ---- weights: per-gate Hp padding, bf16 MXU operands, f32 biases ----
    wih = _pad_gate_weight(params['w_ih'], H, Hp).astype(jnp.bfloat16)   # (Hp, 4Hp)
    whh = _pad_gate_weight(params['w_hh'], H, Hp).astype(jnp.bfloat16)   # (Hp, 4Hp)
    bg = _pad_gate_bias(params['b_ih'] + params['b_hh'], H, Hp)          # (1, 4Hp)
    win = (jnp.zeros((Hp, Hp), jnp.float32)
              .at[:H, :H].set(params['attn_in_w'].T).astype(jnp.bfloat16))
    wo = params['attn_out_w'].T                                          # (2H, H)
    wo_mix = (jnp.zeros((Hp, Hp), jnp.float32)
                 .at[:H, :H].set(wo[:H]).astype(jnp.bfloat16))
    wo_in = (jnp.zeros((Hp, Hp), jnp.float32)
                .at[:H, :H].set(wo[H:]).astype(jnp.bfloat16))
    wcls = (jnp.zeros((Hp, Vp), jnp.float32)
               .at[:H, :V].set(params['out_w'].T).astype(jnp.bfloat16))
    bcls = jnp.full((1, Vp), jnp.float32(-1e30)).at[0, :V].set(params['out_b'])

    kernel = functools.partial(decoder_kernel, hidden=Hp, tgt_len=T, btile=Bt)
    out_bm = pl.pallas_call(
        kernel,
        out_shape=jax.ShapeDtypeStruct((nb, Bt, T, Vp), jnp.float32),
        grid_spec=pltpu.PrefetchScalarGridSpec(
            num_scalar_prefetch=0,
            grid=(nb,),
            in_specs=[
                pl.BlockSpec((1, T * Bt, Hp), lambda i: (i, 0, 0)),      # x (time-major)
                pl.BlockSpec((1, Bt, Hp), lambda i: (i, 0, 0)),          # h0
                pl.BlockSpec((1, Bt, Hp), lambda i: (i, 0, 0)),          # c0
                pl.BlockSpec((1, Bt, S, Hp), lambda i: (i, 0, 0, 0)),    # enc (bf16)
                pl.BlockSpec((Hp, 4 * Hp), lambda i: (0, 0)),            # W_ih^T (padded)
                pl.BlockSpec((Hp, 4 * Hp), lambda i: (0, 0)),            # W_hh^T (padded)
                pl.BlockSpec((1, 4 * Hp), lambda i: (0, 0)),             # gate bias
                pl.BlockSpec((Hp, Hp), lambda i: (0, 0)),                # attn input_proj
                pl.BlockSpec((Hp, Hp), lambda i: (0, 0)),                # attn out_proj (mix)
                pl.BlockSpec((Hp, Hp), lambda i: (0, 0)),                # attn out_proj (input)
                pl.BlockSpec((Hp, Vp), lambda i: (0, 0)),                # classifier W
                pl.BlockSpec((1, Vp), lambda i: (0, 0)),                 # classifier b
            ],
            out_specs=pl.BlockSpec((1, Bt, T, Vp), lambda i: (i, 0, 0, 0)),
            scratch_shapes=[pltpu.VMEM((T * Bt, Hp), jnp.float32)],
        ),
        compiler_params=pltpu.CompilerParams(
            dimension_semantics=("parallel",),
            vmem_limit_bytes=64 * 1024 * 1024),
    )(x_tm, h0, c0, enc, wih, whh, bg, win, wo_mix, wo_in, wcls, bcls)

    # Output is already batch-major: just un-tile and drop batch/vocab padding.
    out = out_bm.reshape(Bp, T, Vp)[:B, :, :V]
    return out


def reference_forward(x_ids, enc_h, enc_c, enc_out, params):
    """Pure-JAX f32 reference matching the PyTorch forward (eval mode)."""
    x = params['embedding'][x_ids].astype(jnp.float32)     # (B,T,H)
    B, T, H = x.shape
    residual = x
    wih, whh = params['w_ih'], params['w_hh']               # (4H,H)
    b = params['b_ih'] + params['b_hh']
    h, c = enc_h[0], enc_c[0]
    ys = []
    for t in range(T):
        g = x[:, t, :] @ wih.T + h @ whh.T + b
        i = jax.nn.sigmoid(g[:, :H]); f = jax.nn.sigmoid(g[:, H:2 * H])
        gg = jnp.tanh(g[:, 2 * H:3 * H]); o = jax.nn.sigmoid(g[:, 3 * H:])
        c = f * c + i * gg
        h = o * jnp.tanh(c)
        ys.append(h)
    y = jnp.stack(ys, axis=1)
    x = (residual + y) * math.sqrt(0.5)
    residual = x
    xp = x @ params['attn_in_w'].T
    attn = jax.nn.softmax(jnp.einsum('bth,bsh->bts', xp, enc_out), axis=-1)
    mix = jnp.einsum('bts,bsh->bth', attn, enc_out)
    out = jnp.tanh(jnp.concatenate([mix, x], axis=-1) @ params['attn_out_w'].T)
    x = (residual + out) * math.sqrt(0.5)
    logits = x @ params['out_w'].T + params['out_b']
    return jax.nn.log_softmax(logits, axis=-1)


if __name__ == "__main__":
    B, T, S, H, V = 2, 8, 8, 64, 9     # batch, tgt_len, src_len, hidden, vocab
    key = jax.random.PRNGKey(0)
    ks = jax.random.split(key, 12)

    def u(k, shape, fan_in):
        bound = 1.0 / math.sqrt(fan_in)
        return jax.random.uniform(k, shape, jnp.float32, -bound, bound)

    params = {
        'embedding':  jax.random.normal(ks[0], (V, H), jnp.float32),
        'w_ih':       u(ks[1], (4 * H, H), H),
        'w_hh':       u(ks[2], (4 * H, H), H),
        'b_ih':       u(ks[3], (4 * H,), H),
        'b_hh':       u(ks[4], (4 * H,), H),
        'attn_in_w':  u(ks[5], (H, H), H),           # input_proj (bias=False)
        'attn_out_w': u(ks[6], (H, 2 * H), 2 * H),   # output_proj (bias=False)
        'out_w':      u(ks[7], (V, H), H),
        'out_b':      u(ks[8], (V,), H),
    }

    x_ids = jax.random.randint(ks[9], (B, T), 0, V, jnp.int32)
    enc_h = jax.random.normal(ks[10], (1, B, H), jnp.float32) * 0.5   # (layers=1, B, H)
    enc_c = jax.random.normal(ks[11], (1, B, H), jnp.float32) * 0.5
    enc_out = jax.random.normal(jax.random.fold_in(key, 99), (B, S, H), jnp.float32)

    got = jax.block_until_ready(decoder_forward(x_ids, enc_h, enc_c, enc_out, params))
    want = jax.block_until_ready(reference_forward(x_ids, enc_h, enc_c, enc_out, params))

    assert got.shape == (B, T, V), got.shape
    # Tolerance accounts for bf16 MXU operands (f32 accumulation) and the
    # approx-reciprocal softmax normalization vs. the pure-f32 reference.
    err = float(jnp.max(jnp.abs(got - want)))
    assert jnp.allclose(got, want, atol=1e-1, rtol=1e-2), err
    print("KERNEL_OK")
</pallas_src>

<mosaic_0001>
module attributes {stable_mosaic.version = 11 : i64} {
  func.func @decoder_kernel(%arg0: i32, %arg1: memref<1x64x128xf32, #tpu.memory_space<vmem>>, %arg2: memref<1x8x128xf32, #tpu.memory_space<vmem>>, %arg3: memref<1x8x128xf32, #tpu.memory_space<vmem>>, %arg4: memref<1x8x8x128xbf16, #tpu.memory_space<vmem>>, %arg5: memref<128x512xbf16, #tpu.memory_space<vmem>>, %arg6: memref<128x512xbf16, #tpu.memory_space<vmem>>, %arg7: memref<1x512xf32, #tpu.memory_space<vmem>>, %arg8: memref<128x128xbf16, #tpu.memory_space<vmem>>, %arg9: memref<128x128xbf16, #tpu.memory_space<vmem>>, %arg10: memref<128x128xbf16, #tpu.memory_space<vmem>>, %arg11: memref<128x128xbf16, #tpu.memory_space<vmem>>, %arg12: memref<1x128xf32, #tpu.memory_space<vmem>>, %arg13: memref<1x8x8x128xf32, #tpu.memory_space<vmem>>, %arg14: memref<64x128xf32, #tpu.memory_space<vmem>>) attributes {dimension_semantics = [#tpu.dimension_semantics<parallel>], iteration_bounds = array<i64: 1>, scalar_prefetch = 0 : i64, scratch_operands = 1 : i64, tpu.core_type = #tpu.core_type<tc>, window_params = [{transform_indices = @transform_0, window_bounds = array<i64: 1, 64, 128>}, {transform_indices = @transform_1, window_bounds = array<i64: 1, 8, 128>}, {transform_indices = @transform_2, window_bounds = array<i64: 1, 8, 128>}, {transform_indices = @transform_3, window_bounds = array<i64: 1, 8, 8, 128>}, {pipeline_mode = #tpu.pipeline_mode<synchronous>, transform_indices = @transform_4, window_bounds = array<i64: 128, 512>}, {pipeline_mode = #tpu.pipeline_mode<synchronous>, transform_indices = @transform_5, window_bounds = array<i64: 128, 512>}, {pipeline_mode = #tpu.pipeline_mode<synchronous>, transform_indices = @transform_6, window_bounds = array<i64: 1, 512>}, {pipeline_mode = #tpu.pipeline_mode<synchronous>, transform_indices = @transform_7, window_bounds = array<i64: 128, 128>}, {pipeline_mode = #tpu.pipeline_mode<synchronous>, transform_indices = @transform_8, window_bounds = array<i64: 128, 128>}, {pipeline_mode = #tpu.pipeline_mode<synchronous>, transform_indices = @transform_9, window_bounds = array<i64: 128, 128>}, {pipeline_mode = #tpu.pipeline_mode<synchronous>, transform_indices = @transform_10, window_bounds = array<i64: 128, 128>}, {pipeline_mode = #tpu.pipeline_mode<synchronous>, transform_indices = @transform_11, window_bounds = array<i64: 1, 128>}, {transform_indices = @transform_12, window_bounds = array<i64: 1, 8, 8, 128>}]} {
    %c0 = arith.constant 0 : index
    %c0_0 = arith.constant 0 : index
    %c0_1 = arith.constant 0 : index
    %0 = vector.load %arg1[%c0, %c0_0, %c0_1] : memref<1x64x128xf32, #tpu.memory_space<vmem>>, vector<1x64x128xf32>
    %1 = vector.shape_cast %0 : vector<1x64x128xf32> to vector<64x128xf32>
    %c0_2 = arith.constant 0 : index
    %c0_3 = arith.constant 0 : index
    %c0_4 = arith.constant 0 : index
    %c0_5 = arith.constant 0 : index
    %2 = vector.load %arg4[%c0_2, %c0_3, %c0_4, %c0_5] : memref<1x8x8x128xbf16, #tpu.memory_space<vmem>>, vector<1x8x8x128xbf16>
    %3 = vector.shape_cast %2 : vector<1x8x8x128xbf16> to vector<8x8x128xbf16>
    %c0_6 = arith.constant 0 : index
    %c0_7 = arith.constant 0 : index
    %4 = vector.load %arg6[%c0_6, %c0_7] : memref<128x512xbf16, #tpu.memory_space<vmem>>, vector<128x512xbf16>
    %5 = arith.truncf %1 : vector<64x128xf32> to vector<64x128xbf16>
    %c0_8 = arith.constant 0 : index
    %c0_9 = arith.constant 0 : index
    %6 = vector.load %arg5[%c0_8, %c0_9] : memref<128x512xbf16, #tpu.memory_space<vmem>>, vector<128x512xbf16>
    %cst = arith.constant dense<0.000000e+00> : vector<64x512xf32>
    %7 = tpu.matmul %5, %6, %cst {dimension_numbers = #tpu.dot_dimension_numbers<[1], [0], [0], [1], [0, 0, 1, 1], [], []>} : vector<64x128xbf16>, vector<128x512xbf16>, vector<64x512xf32> -> vector<64x512xf32>
    %c0_10 = arith.constant 0 : index
    %c0_11 = arith.constant 0 : index
    %8 = vector.load %arg7[%c0_10, %c0_11] : memref<1x512xf32, #tpu.memory_space<vmem>>, vector<1x512xf32>
    %9 = vector.broadcast %8 : vector<1x512xf32> to vector<64x512xf32>
    %10 = arith.addf %7, %9 : vector<64x512xf32>
    %c0_12 = arith.constant 0 : index
    %c0_13 = arith.constant 0 : index
    %c0_14 = arith.constant 0 : index
    %11 = vector.load %arg2[%c0_12, %c0_13, %c0_14] : memref<1x8x128xf32, #tpu.memory_space<vmem>>, vector<1x8x128xf32>
    %12 = vector.shape_cast %11 : vector<1x8x128xf32> to vector<8x128xf32>
    %c0_15 = arith.constant 0 : index
    %c0_16 = arith.constant 0 : index
    %c0_17 = arith.constant 0 : index
    %13 = vector.load %arg3[%c0_15, %c0_16, %c0_17] : memref<1x8x128xf32, #tpu.memory_space<vmem>>, vector<1x8x128xf32>
    %14 = vector.shape_cast %13 : vector<1x8x128xf32> to vector<8x128xf32>
    %15 = vector.extract_strided_slice %10 {offsets = [0, 0], sizes = [8, 512], strides = [1, 1]} : vector<64x512xf32> to vector<8x512xf32>
    %16 = arith.truncf %12 : vector<8x128xf32> to vector<8x128xbf16>
    %cst_18 = arith.constant dense<0.000000e+00> : vector<8x512xf32>
    %17 = tpu.matmul %16, %4, %cst_18 {dimension_numbers = #tpu.dot_dimension_numbers<[1], [0], [0], [1], [0, 0, 1, 1], [], []>} : vector<8x128xbf16>, vector<128x512xbf16>, vector<8x512xf32> -> vector<8x512xf32>
    %18 = arith.addf %15, %17 : vector<8x512xf32>
    %19 = vector.extract_strided_slice %18 {offsets = [0, 0], sizes = [8, 128], strides = [1, 1]} : vector<8x512xf32> to vector<8x128xf32>
    %20 = arith.negf %19 : vector<8x128xf32>
    %21 = math.exp %20 : vector<8x128xf32>
    %cst_19 = arith.constant 1.000000e+00 : f32
    %22 = vector.broadcast %cst_19 : f32 to vector<8x128xf32>
    %23 = arith.addf %22, %21 : vector<8x128xf32>
    %24 = arith.divf %22, %23 : vector<8x128xf32>
    %25 = vector.extract_strided_slice %18 {offsets = [0, 128], sizes = [8, 128], strides = [1, 1]} : vector<8x512xf32> to vector<8x128xf32>
    %26 = arith.negf %25 : vector<8x128xf32>
    %27 = math.exp %26 : vector<8x128xf32>
    %cst_20 = arith.constant 1.000000e+00 : f32
    %28 = vector.broadcast %cst_20 : f32 to vector<8x128xf32>
    %29 = arith.addf %28, %27 : vector<8x128xf32>
    %30 = arith.divf %28, %29 : vector<8x128xf32>
    %31 = vector.extract_strided_slice %18 {offsets = [0, 256], sizes = [8, 128], strides = [1, 1]} : vector<8x512xf32> to vector<8x128xf32>
    %32 = math.tanh %31 : vector<8x128xf32>
    %33 = vector.extract_strided_slice %18 {offsets = [0, 384], sizes = [8, 128], strides = [1, 1]} : vector<8x512xf32> to vector<8x128xf32>
    %34 = arith.negf %33 : vector<8x128xf32>
    %35 = math.exp %34 : vector<8x128xf32>
    %cst_21 = arith.constant 1.000000e+00 : f32
    %36 = vector.broadcast %cst_21 : f32 to vector<8x128xf32>
    %37 = arith.addf %36, %35 : vector<8x128xf32>
    %38 = arith.divf %36, %37 : vector<8x128xf32>
    %39 = arith.mulf %30, %14 : vector<8x128xf32>
    %40 = arith.mulf %24, %32 : vector<8x128xf32>
    %41 = arith.addf %39, %40 : vector<8x128xf32>
    %42 = math.tanh %41 : vector<8x128xf32>
    %43 = arith.mulf %38, %42 : vector<8x128xf32>
    %c0_22 = arith.constant 0 : index
    %c0_23 = arith.constant 0 : index
    %44 = vector.load %arg14[%c0_22, %c0_23] : memref<64x128xf32, #tpu.memory_space<vmem>>, vector<8x128xf32>
    tpu.vector_store %arg14[%c0_22, %c0_23], %43 {strides = array<i32>} : memref<64x128xf32, #tpu.memory_space<vmem>>, vector<8x128xf32>,
    %45 = vector.extract_strided_slice %10 {offsets = [8, 0], sizes = [8, 512], strides = [1, 1]} : vector<64x512xf32> to vector<8x512xf32>
    %46 = arith.truncf %43 : vector<8x128xf32> to vector<8x128xbf16>
    %cst_24 = arith.constant dense<0.000000e+00> : vector<8x512xf32>
    %47 = tpu.matmul %46, %4, %cst_24 {dimension_numbers = #tpu.dot_dimension_numbers<[1], [0], [0], [1], [0, 0, 1, 1], [], []>} : vector<8x128xbf16>, vector<128x512xbf16>, vector<8x512xf32> -> vector<8x512xf32>
    %48 = arith.addf %45, %47 : vector<8x512xf32>
    %49 = vector.extract_strided_slice %48 {offsets = [0, 0], sizes = [8, 128], strides = [1, 1]} : vector<8x512xf32> to vector<8x128xf32>
    %50 = arith.negf %49 : vector<8x128xf32>
    %51 = math.exp %50 : vector<8x128xf32>
    %cst_25 = arith.constant 1.000000e+00 : f32
    %52 = vector.broadcast %cst_25 : f32 to vector<8x128xf32>
    %53 = arith.addf %52, %51 : vector<8x128xf32>
    %54 = arith.divf %52, %53 : vector<8x128xf32>
    %55 = vector.extract_strided_slice %48 {offsets = [0, 128], sizes = [8, 128], strides = [1, 1]} : vector<8x512xf32> to vector<8x128xf32>
    %56 = arith.negf %55 : vector<8x128xf32>
    %57 = math.exp %56 : vector<8x128xf32>
    %cst_26 = arith.constant 1.000000e+00 : f32
    %58 = vector.broadcast %cst_26 : f32 to vector<8x128xf32>
    %59 = arith.addf %58, %57 : vector<8x128xf32>
    %60 = arith.divf %58, %59 : vector<8x128xf32>
    %61 = vector.extract_strided_slice %48 {offsets = [0, 256], sizes = [8, 128], strides = [1, 1]} : vector<8x512xf32> to vector<8x128xf32>
    %62 = math.tanh %61 : vector<8x128xf32>
    %63 = vector.extract_strided_slice %48 {offsets = [0, 384], sizes = [8, 128], strides = [1, 1]} : vector<8x512xf32> to vector<8x128xf32>
    %64 = arith.negf %63 : vector<8x128xf32>
    %65 = math.exp %64 : vector<8x128xf32>
    %cst_27 = arith.constant 1.000000e+00 : f32
    %66 = vector.broadcast %cst_27 : f32 to vector<8x128xf32>
    %67 = arith.addf %66, %65 : vector<8x128xf32>
    %68 = arith.divf %66, %67 : vector<8x128xf32>
    %69 = arith.mulf %60, %41 : vector<8x128xf32>
    %70 = arith.mulf %54, %62 : vector<8x128xf32>
    %71 = arith.addf %69, %70 : vector<8x128xf32>
    %72 = math.tanh %71 : vector<8x128xf32>
    %73 = arith.mulf %68, %72 : vector<8x128xf32>
    %c8 = arith.constant 8 : index
    %c0_28 = arith.constant 0 : index
    %74 = vector.load %arg14[%c8, %c0_28] : memref<64x128xf32, #tpu.memory_space<vmem>>, vector<8x128xf32>
    tpu.vector_store %arg14[%c8, %c0_28], %73 {strides = array<i32>} : memref<64x128xf32, #tpu.memory_space<vmem>>, vector<8x128xf32>,
    %75 = vector.extract_strided_slice %10 {offsets = [16, 0], sizes = [8, 512], strides = [1, 1]} : vector<64x512xf32> to vector<8x512xf32>
    %76 = arith.truncf %73 : vector<8x128xf32> to vector<8x128xbf16>
    %cst_29 = arith.constant dense<0.000000e+00> : vector<8x512xf32>
    %77 = tpu.matmul %76, %4, %cst_29 {dimension_numbers = #tpu.dot_dimension_numbers<[1], [0], [0], [1], [0, 0, 1, 1], [], []>} : vector<8x128xbf16>, vector<128x512xbf16>, vector<8x512xf32> -> vector<8x512xf32>
    %78 = arith.addf %75, %77 : vector<8x512xf32>
    %79 = vector.extract_strided_slice %78 {offsets = [0, 0], sizes = [8, 128], strides = [1, 1]} : vector<8x512xf32> to vector<8x128xf32>
    %80 = arith.negf %79 : vector<8x128xf32>
    %81 = math.exp %80 : vector<8x128xf32>
    %cst_30 = arith.constant 1.000000e+00 : f32
    %82 = vector.broadcast %cst_30 : f32 to vector<8x128xf32>
    %83 = arith.addf %82, %81 : vector<8x128xf32>
    %84 = arith.divf %82, %83 : vector<8x128xf32>
    %85 = vector.extract_strided_slice %78 {offsets = [0, 128], sizes = [8, 128], strides = [1, 1]} : vector<8x512xf32> to vector<8x128xf32>
    %86 = arith.negf %85 : vector<8x128xf32>
    %87 = math.exp %86 : vector<8x128xf32>
    %cst_31 = arith.constant 1.000000e+00 : f32
    %88 = vector.broadcast %cst_31 : f32 to vector<8x128xf32>
    %89 = arith.addf %88, %87 : vector<8x128xf32>
    %90 = arith.divf %88, %89 : vector<8x128xf32>
    %91 = vector.extract_strided_slice %78 {offsets = [0, 256], sizes = [8, 128], strides = [1, 1]} : vector<8x512xf32> to vector<8x128xf32>
    %92 = math.tanh %91 : vector<8x128xf32>
    %93 = vector.extract_strided_slice %78 {offsets = [0, 384], sizes = [8, 128], strides = [1, 1]} : vector<8x512xf32> to vector<8x128xf32>
    %94 = arith.negf %93 : vector<8x128xf32>
    %95 = math.exp %94 : vector<8x128xf32>
    %cst_32 = arith.constant 1.000000e+00 : f32
    %96 = vector.broadcast %cst_32 : f32 to vector<8x128xf32>
    %97 = arith.addf %96, %95 : vector<8x128xf32>
    %98 = arith.divf %96, %97 : vector<8x128xf32>
    %99 = arith.mulf %90, %71 : vector<8x128xf32>
    %100 = arith.mulf %84, %92 : vector<8x128xf32>
    %101 = arith.addf %99, %100 : vector<8x128xf32>
    %102 = math.tanh %101 : vector<8x128xf32>
    %103 = arith.mulf %98, %102 : vector<8x128xf32>
    %c16 = arith.constant 16 : index
    %c0_33 = arith.constant 0 : index
    %104 = vector.load %arg14[%c16, %c0_33] : memref<64x128xf32, #tpu.memory_space<vmem>>, vector<8x128xf32>
    tpu.vector_store %arg14[%c16, %c0_33], %103 {strides = array<i32>} : memref<64x128xf32, #tpu.memory_space<vmem>>, vector<8x128xf32>,
    %105 = vector.extract_strided_slice %10 {offsets = [24, 0], sizes = [8, 512], strides = [1, 1]} : vector<64x512xf32> to vector<8x512xf32>
    %106 = arith.truncf %103 : vector<8x128xf32> to vector<8x128xbf16>
    %cst_34 = arith.constant dense<0.000000e+00> : vector<8x512xf32>
    %107 = tpu.matmul %106, %4, %cst_34 {dimension_numbers = #tpu.dot_dimension_numbers<[1], [0], [0], [1], [0, 0, 1, 1], [], []>} : vector<8x128xbf16>, vector<128x512xbf16>, vector<8x512xf32> -> vector<8x512xf32>
    %108 = arith.addf %105, %107 : vector<8x512xf32>
    %109 = vector.extract_strided_slice %108 {offsets = [0, 0], sizes = [8, 128], strides = [1, 1]} : vector<8x512xf32> to vector<8x128xf32>
    %110 = arith.negf %109 : vector<8x128xf32>
    %111 = math.exp %110 : vector<8x128xf32>
    %cst_35 = arith.constant 1.000000e+00 : f32
    %112 = vector.broadcast %cst_35 : f32 to vector<8x128xf32>
    %113 = arith.addf %112, %111 : vector<8x128xf32>
    %114 = arith.divf %112, %113 : vector<8x128xf32>
    %115 = vector.extract_strided_slice %108 {offsets = [0, 128], sizes = [8, 128], strides = [1, 1]} : vector<8x512xf32> to vector<8x128xf32>
    %116 = arith.negf %115 : vector<8x128xf32>
    %117 = math.exp %116 : vector<8x128xf32>
    %cst_36 = arith.constant 1.000000e+00 : f32
    %118 = vector.broadcast %cst_36 : f32 to vector<8x128xf32>
    %119 = arith.addf %118, %117 : vector<8x128xf32>
    %120 = arith.divf %118, %119 : vector<8x128xf32>
    %121 = vector.extract_strided_slice %108 {offsets = [0, 256], sizes = [8, 128], strides = [1, 1]} : vector<8x512xf32> to vector<8x128xf32>
    %122 = math.tanh %121 : vector<8x128xf32>
    %123 = vector.extract_strided_slice %108 {offsets = [0, 384], sizes = [8, 128], strides = [1, 1]} : vector<8x512xf32> to vector<8x128xf32>
    %124 = arith.negf %123 : vector<8x128xf32>
    %125 = math.exp %124 : vector<8x128xf32>
    %cst_37 = arith.constant 1.000000e+00 : f32
    %126 = vector.broadcast %cst_37 : f32 to vector<8x128xf32>
    %127 = arith.addf %126, %125 : vector<8x128xf32>
    %128 = arith.divf %126, %127 : vector<8x128xf32>
    %129 = arith.mulf %120, %101 : vector<8x128xf32>
    %130 = arith.mulf %114, %122 : vector<8x128xf32>
    %131 = arith.addf %129, %130 : vector<8x128xf32>
    %132 = math.tanh %131 : vector<8x128xf32>
    %133 = arith.mulf %128, %132 : vector<8x128xf32>
    %c24 = arith.constant 24 : index
    %c0_38 = arith.constant 0 : index
    %134 = vector.load %arg14[%c24, %c0_38] : memref<64x128xf32, #tpu.memory_space<vmem>>, vector<8x128xf32>
    tpu.vector_store %arg14[%c24, %c0_38], %133 {strides = array<i32>} : memref<64x128xf32, #tpu.memory_space<vmem>>, vector<8x128xf32>,
    %135 = vector.extract_strided_slice %10 {offsets = [32, 0], sizes = [8, 512], strides = [1, 1]} : vector<64x512xf32> to vector<8x512xf32>
    %136 = arith.truncf %133 : vector<8x128xf32> to vector<8x128xbf16>
    %cst_39 = arith.constant dense<0.000000e+00> : vector<8x512xf32>
    %137 = tpu.matmul %136, %4, %cst_39 {dimension_numbers = #tpu.dot_dimension_numbers<[1], [0], [0], [1], [0, 0, 1, 1], [], []>} : vector<8x128xbf16>, vector<128x512xbf16>, vector<8x512xf32> -> vector<8x512xf32>
    %138 = arith.addf %135, %137 : vector<8x512xf32>
    %139 = vector.extract_strided_slice %138 {offsets = [0, 0], sizes = [8, 128], strides = [1, 1]} : vector<8x512xf32> to vector<8x128xf32>
    %140 = arith.negf %139 : vector<8x128xf32>
    %141 = math.exp %140 : vector<8x128xf32>
    %cst_40 = arith.constant 1.000000e+00 : f32
    %142 = vector.broadcast %cst_40 : f32 to vector<8x128xf32>
    %143 = arith.addf %142, %141 : vector<8x128xf32>
    %144 = arith.divf %142, %143 : vector<8x128xf32>
    %145 = vector.extract_strided_slice %138 {offsets = [0, 128], sizes = [8, 128], strides = [1, 1]} : vector<8x512xf32> to vector<8x128xf32>
    %146 = arith.negf %145 : vector<8x128xf32>
    %147 = math.exp %146 : vector<8x128xf32>
    %cst_41 = arith.constant 1.000000e+00 : f32
    %148 = vector.broadcast %cst_41 : f32 to vector<8x128xf32>
    %149 = arith.addf %148, %147 : vector<8x128xf32>
    %150 = arith.divf %148, %149 : vector<8x128xf32>
    %151 = vector.extract_strided_slice %138 {offsets = [0, 256], sizes = [8, 128], strides = [1, 1]} : vector<8x512xf32> to vector<8x128xf32>
    %152 = math.tanh %151 : vector<8x128xf32>
    %153 = vector.extract_strided_slice %138 {offsets = [0, 384], sizes = [8, 128], strides = [1, 1]} : vector<8x512xf32> to vector<8x128xf32>
    %154 = arith.negf %153 : vector<8x128xf32>
    %155 = math.exp %154 : vector<8x128xf32>
    %cst_42 = arith.constant 1.000000e+00 : f32
    %156 = vector.broadcast %cst_42 : f32 to vector<8x128xf32>
    %157 = arith.addf %156, %155 : vector<8x128xf32>
    %158 = arith.divf %156, %157 : vector<8x128xf32>
    %159 = arith.mulf %150, %131 : vector<8x128xf32>
    %160 = arith.mulf %144, %152 : vector<8x128xf32>
    %161 = arith.addf %159, %160 : vector<8x128xf32>
    %162 = math.tanh %161 : vector<8x128xf32>
    %163 = arith.mulf %158, %162 : vector<8x128xf32>
    %c32 = arith.constant 32 : index
    %c0_43 = arith.constant 0 : index
    %164 = vector.load %arg14[%c32, %c0_43] : memref<64x128xf32, #tpu.memory_space<vmem>>, vector<8x128xf32>
    tpu.vector_store %arg14[%c32, %c0_43], %163 {strides = array<i32>} : memref<64x128xf32, #tpu.memory_space<vmem>>, vector<8x128xf32>,
    %165 = vector.extract_strided_slice %10 {offsets = [40, 0], sizes = [8, 512], strides = [1, 1]} : vector<64x512xf32> to vector<8x512xf32>
    %166 = arith.truncf %163 : vector<8x128xf32> to vector<8x128xbf16>
    %cst_44 = arith.constant dense<0.000000e+00> : vector<8x512xf32>
    %167 = tpu.matmul %166, %4, %cst_44 {dimension_numbers = #tpu.dot_dimension_numbers<[1], [0], [0], [1], [0, 0, 1, 1], [], []>} : vector<8x128xbf16>, vector<128x512xbf16>, vector<8x512xf32> -> vector<8x512xf32>
    %168 = arith.addf %165, %167 : vector<8x512xf32>
    %169 = vector.extract_strided_slice %168 {offsets = [0, 0], sizes = [8, 128], strides = [1, 1]} : vector<8x512xf32> to vector<8x128xf32>
    %170 = arith.negf %169 : vector<8x128xf32>
    %171 = math.exp %170 : vector<8x128xf32>
    %cst_45 = arith.constant 1.000000e+00 : f32
    %172 = vector.broadcast %cst_45 : f32 to vector<8x128xf32>
    %173 = arith.addf %172, %171 : vector<8x128xf32>
    %174 = arith.divf %172, %173 : vector<8x128xf32>
    %175 = vector.extract_strided_slice %168 {offsets = [0, 128], sizes = [8, 128], strides = [1, 1]} : vector<8x512xf32> to vector<8x128xf32>
    %176 = arith.negf %175 : vector<8x128xf32>
    %177 = math.exp %176 : vector<8x128xf32>
    %cst_46 = arith.constant 1.000000e+00 : f32
    %178 = vector.broadcast %cst_46 : f32 to vector<8x128xf32>
    %179 = arith.addf %178, %177 : vector<8x128xf32>
    %180 = arith.divf %178, %179 : vector<8x128xf32>
    %181 = vector.extract_strided_slice %168 {offsets = [0, 256], sizes = [8, 128], strides = [1, 1]} : vector<8x512xf32> to vector<8x128xf32>
    %182 = math.tanh %181 : vector<8x128xf32>
    %183 = vector.extract_strided_slice %168 {offsets = [0, 384], sizes = [8, 128], strides = [1, 1]} : vector<8x512xf32> to vector<8x128xf32>
    %184 = arith.negf %183 : vector<8x128xf32>
    %185 = math.exp %184 : vector<8x128xf32>
    %cst_47 = arith.constant 1.000000e+00 : f32
    %186 = vector.broadcast %cst_47 : f32 to vector<8x128xf32>
    %187 = arith.addf %186, %185 : vector<8x128xf32>
    %188 = arith.divf %186, %187 : vector<8x128xf32>
    %189 = arith.mulf %180, %161 : vector<8x128xf32>
    %190 = arith.mulf %174, %182 : vector<8x128xf32>
    %191 = arith.addf %189, %190 : vector<8x128xf32>
    %192 = math.tanh %191 : vector<8x128xf32>
    %193 = arith.mulf %188, %192 : vector<8x128xf32>
    %c40 = arith.constant 40 : index
    %c0_48 = arith.constant 0 : index
    %194 = vector.load %arg14[%c40, %c0_48] : memref<64x128xf32, #tpu.memory_space<vmem>>, vector<8x128xf32>
    tpu.vector_store %arg14[%c40, %c0_48], %193 {strides = array<i32>} : memref<64x128xf32, #tpu.memory_space<vmem>>, vector<8x128xf32>,
    %195 = vector.extract_strided_slice %10 {offsets = [48, 0], sizes = [8, 512], strides = [1, 1]} : vector<64x512xf32> to vector<8x512xf32>
    %196 = arith.truncf %193 : vector<8x128xf32> to vector<8x128xbf16>
    %cst_49 = arith.constant dense<0.000000e+00> : vector<8x512xf32>
    %197 = tpu.matmul %196, %4, %cst_49 {dimension_numbers = #tpu.dot_dimension_numbers<[1], [0], [0], [1], [0, 0, 1, 1], [], []>} : vector<8x128xbf16>, vector<128x512xbf16>, vector<8x512xf32> -> vector<8x512xf32>
    %198 = arith.addf %195, %197 : vector<8x512xf32>
    %199 = vector.extract_strided_slice %198 {offsets = [0, 0], sizes = [8, 128], strides = [1, 1]} : vector<8x512xf32> to vector<8x128xf32>
    %200 = arith.negf %199 : vector<8x128xf32>
    %201 = math.exp %200 : vector<8x128xf32>
    %cst_50 = arith.constant 1.000000e+00 : f32
    %202 = vector.broadcast %cst_50 : f32 to vector<8x128xf32>
    %203 = arith.addf %202, %201 : vector<8x128xf32>
    %204 = arith.divf %202, %203 : vector<8x128xf32>
    %205 = vector.extract_strided_slice %198 {offsets = [0, 128], sizes = [8, 128], strides = [1, 1]} : vector<8x512xf32> to vector<8x128xf32>
    %206 = arith.negf %205 : vector<8x128xf32>
    %207 = math.exp %206 : vector<8x128xf32>
    %cst_51 = arith.constant 1.000000e+00 : f32
    %208 = vector.broadcast %cst_51 : f32 to vector<8x128xf32>
    %209 = arith.addf %208, %207 : vector<8x128xf32>
    %210 = arith.divf %208, %209 : vector<8x128xf32>
    %211 = vector.extract_strided_slice %198 {offsets = [0, 256], sizes = [8, 128], strides = [1, 1]} : vector<8x512xf32> to vector<8x128xf32>
    %212 = math.tanh %211 : vector<8x128xf32>
    %213 = vector.extract_strided_slice %198 {offsets = [0, 384], sizes = [8, 128], strides = [1, 1]} : vector<8x512xf32> to vector<8x128xf32>
    %214 = arith.negf %213 : vector<8x128xf32>
    %215 = math.exp %214 : vector<8x128xf32>
    %cst_52 = arith.constant 1.000000e+00 : f32
    %216 = vector.broadcast %cst_52 : f32 to vector<8x128xf32>
    %217 = arith.addf %216, %215 : vector<8x128xf32>
    %218 = arith.divf %216, %217 : vector<8x128xf32>
    %219 = arith.mulf %210, %191 : vector<8x128xf32>
    %220 = arith.mulf %204, %212 : vector<8x128xf32>
    %221 = arith.addf %219, %220 : vector<8x128xf32>
    %222 = math.tanh %221 : vector<8x128xf32>
    %223 = arith.mulf %218, %222 : vector<8x128xf32>
    %c48 = arith.constant 48 : index
    %c0_53 = arith.constant 0 : index
    %224 = vector.load %arg14[%c48, %c0_53] : memref<64x128xf32, #tpu.memory_space<vmem>>, vector<8x128xf32>
    tpu.vector_store %arg14[%c48, %c0_53], %223 {strides = array<i32>} : memref<64x128xf32, #tpu.memory_space<vmem>>, vector<8x128xf32>,
    %225 = vector.extract_strided_slice %10 {offsets = [56, 0], sizes = [8, 512], strides = [1, 1]} : vector<64x512xf32> to vector<8x512xf32>
    %226 = arith.truncf %223 : vector<8x128xf32> to vector<8x128xbf16>
    %cst_54 = arith.constant dense<0.000000e+00> : vector<8x512xf32>
    %227 = tpu.matmul %226, %4, %cst_54 {dimension_numbers = #tpu.dot_dimension_numbers<[1], [0], [0], [1], [0, 0, 1, 1], [], []>} : vector<8x128xbf16>, vector<128x512xbf16>, vector<8x512xf32> -> vector<8x512xf32>
    %228 = arith.addf %225, %227 : vector<8x512xf32>
    %229 = vector.extract_strided_slice %228 {offsets = [0, 0], sizes = [8, 128], strides = [1, 1]} : vector<8x512xf32> to vector<8x128xf32>
    %230 = arith.negf %229 : vector<8x128xf32>
    %231 = math.exp %230 : vector<8x128xf32>
    %cst_55 = arith.constant 1.000000e+00 : f32
    %232 = vector.broadcast %cst_55 : f32 to vector<8x128xf32>
    %233 = arith.addf %232, %231 : vector<8x128xf32>
    %234 = arith.divf %232, %233 : vector<8x128xf32>
    %235 = vector.extract_strided_slice %228 {offsets = [0, 128], sizes = [8, 128], strides = [1, 1]} : vector<8x512xf32> to vector<8x128xf32>
    %236 = arith.negf %235 : vector<8x128xf32>
    %237 = math.exp %236 : vector<8x128xf32>
    %cst_56 = arith.constant 1.000000e+00 : f32
    %238 = vector.broadcast %cst_56 : f32 to vector<8x128xf32>
    %239 = arith.addf %238, %237 : vector<8x128xf32>
    %240 = arith.divf %238, %239 : vector<8x128xf32>
    %241 = vector.extract_strided_slice %228 {offsets = [0, 256], sizes = [8, 128], strides = [1, 1]} : vector<8x512xf32> to vector<8x128xf32>
    %242 = math.tanh %241 : vector<8x128xf32>
    %243 = vector.extract_strided_slice %228 {offsets = [0, 384], sizes = [8, 128], strides = [1, 1]} : vector<8x512xf32> to vector<8x128xf32>
    %244 = arith.negf %243 : vector<8x128xf32>
    %245 = math.exp %244 : vector<8x128xf32>
    %cst_57 = arith.constant 1.000000e+00 : f32
    %246 = vector.broadcast %cst_57 : f32 to vector<8x128xf32>
    %247 = arith.addf %246, %245 : vector<8x128xf32>
    %248 = arith.divf %246, %247 : vector<8x128xf32>
    %249 = arith.mulf %240, %221 : vector<8x128xf32>
    %250 = arith.mulf %234, %242 : vector<8x128xf32>
    %251 = arith.addf %249, %250 : vector<8x128xf32>
    %252 = math.tanh %251 : vector<8x128xf32>
    %253 = arith.mulf %248, %252 : vector<8x128xf32>
    %c56 = arith.constant 56 : index
    %c0_58 = arith.constant 0 : index
    %254 = vector.load %arg14[%c56, %c0_58] : memref<64x128xf32, #tpu.memory_space<vmem>>, vector<8x128xf32>
    tpu.vector_store %arg14[%c56, %c0_58], %253 {strides = array<i32>} : memref<64x128xf32, #tpu.memory_space<vmem>>, vector<8x128xf32>,
    %c0_59 = arith.constant 0 : index
    %c0_60 = arith.constant 0 : index
    %255 = vector.load %arg14[%c0_59, %c0_60] : memref<64x128xf32, #tpu.memory_space<vmem>>, vector<64x128xf32>
    %256 = arith.addf %1, %255 : vector<64x128xf32>
    %cst_61 = arith.constant 0.707106769 : f32
    %257 = vector.broadcast %cst_61 : f32 to vector<64x128xf32>
    %258 = arith.mulf %256, %257 : vector<64x128xf32>
    %259 = vector.shape_cast %258 : vector<64x128xf32> to vector<8x8x128xf32>
    %260 = tpu.transpose %259, [1, 0, 2] : vector<8x8x128xf32> -> vector<8x8x128xf32>
    %261 = vector.shape_cast %260 : vector<8x8x128xf32> to vector<64x128xf32>
    %262 = arith.truncf %261 : vector<64x128xf32> to vector<64x128xbf16>
    %c0_62 = arith.constant 0 : index
    %c0_63 = arith.constant 0 : index
    %263 = vector.load %arg8[%c0_62, %c0_63] : memref<128x128xbf16, #tpu.memory_space<vmem>>, vector<128x128xbf16>
    %cst_64 = arith.constant dense<0.000000e+00> : vector<64x128xf32>
    %264 = tpu.matmul %262, %263, %cst_64 {dimension_numbers = #tpu.dot_dimension_numbers<[1], [0], [0], [1], [0, 0, 1, 1], [], []>} : vector<64x128xbf16>, vector<128x128xbf16>, vector<64x128xf32> -> vector<64x128xf32>
    %265 = vector.shape_cast %264 : vector<64x128xf32> to vector<8x8x128xf32>
    %266 = arith.truncf %265 : vector<8x8x128xf32> to vector<8x8x128xbf16>
    "tpu.trace_start"() <{level = 10 : i32, message = "bth,bsh->bts"}> : () -> ()
    %cst_65 = arith.constant dense<0.000000e+00> : vector<8x8x8xf32>
    %267 = tpu.matmul %266, %3, %cst_65 {dimension_numbers = #tpu.dot_dimension_numbers<[2], [2], [1], [1], [0, 0, 0, 1, 1, 1], [0], [0]>} : vector<8x8x128xbf16>, vector<8x8x128xbf16>, vector<8x8x8xf32> -> vector<8x8x8xf32>
    "tpu.trace_stop"() : () -> ()
    %cst_66 = arith.constant dense<0xFF800000> : vector<8x8xf32>
    %268 = vector.multi_reduction <maximumf>, %267, %cst_66 [2] : vector<8x8x8xf32> to vector<8x8xf32>
    %269 = vector.shape_cast %268 : vector<8x8xf32> to vector<8x8x1xf32>
    %270 = vector.broadcast %269 : vector<8x8x1xf32> to vector<8x8x8xf32>
    %271 = arith.subf %267, %270 : vector<8x8x8xf32>
    %272 = math.exp %271 : vector<8x8x8xf32>
    %cst_67 = arith.constant dense<0.000000e+00> : vector<8x8xf32>
    %273 = vector.multi_reduction <add>, %272, %cst_67 [2] : vector<8x8x8xf32> to vector<8x8xf32>
    %274 = vector.shape_cast %273 : vector<8x8xf32> to vector<8x8x1xf32>
    %275 = tpu.reciprocal %274 {approx = true} : vector<8x8x1xf32> -> vector<8x8x1xf32>
    %276 = vector.broadcast %275 : vector<8x8x1xf32> to vector<8x8x8xf32>
    %277 = arith.mulf %272, %276 : vector<8x8x8xf32>
    %278 = arith.truncf %277 : vector<8x8x8xf32> to vector<8x8x8xbf16>
    "tpu.trace_start"() <{level = 10 : i32, message = "bts,bsh->bth"}> : () -> ()
    %cst_68 = arith.constant dense<0.000000e+00> : vector<8x8x128xf32>
    %279 = tpu.matmul %278, %3, %cst_68 {dimension_numbers = #tpu.dot_dimension_numbers<[2], [1], [1], [2], [0, 0, 0, 1, 1, 2], [0], [0]>} : vector<8x8x8xbf16>, vector<8x8x128xbf16>, vector<8x8x128xf32> -> vector<8x8x128xf32>
    "tpu.trace_stop"() : () -> ()
    %280 = vector.shape_cast %279 : vector<8x8x128xf32> to vector<64x128xf32>
    %281 = arith.truncf %280 : vector<64x128xf32> to vector<64x128xbf16>
    %c0_69 = arith.constant 0 : index
    %c0_70 = arith.constant 0 : index
    %282 = vector.load %arg9[%c0_69, %c0_70] : memref<128x128xbf16, #tpu.memory_space<vmem>>, vector<128x128xbf16>
    %cst_71 = arith.constant dense<0.000000e+00> : vector<64x128xf32>
    %283 = tpu.matmul %281, %282, %cst_71 {dimension_numbers = #tpu.dot_dimension_numbers<[1], [0], [0], [1], [0, 0, 1, 1], [], []>} : vector<64x128xbf16>, vector<128x128xbf16>, vector<64x128xf32> -> vector<64x128xf32>
    %284 = arith.truncf %261 : vector<64x128xf32> to vector<64x128xbf16>
    %c0_72 = arith.constant 0 : index
    %c0_73 = arith.constant 0 : index
    %285 = vector.load %arg10[%c0_72, %c0_73] : memref<128x128xbf16, #tpu.memory_space<vmem>>, vector<128x128xbf16>
    %cst_74 = arith.constant dense<0.000000e+00> : vector<64x128xf32>
    %286 = tpu.matmul %284, %285, %cst_74 {dimension_numbers = #tpu.dot_dimension_numbers<[1], [0], [0], [1], [0, 0, 1, 1], [], []>} : vector<64x128xbf16>, vector<128x128xbf16>, vector<64x128xf32> -> vector<64x128xf32>
    %287 = arith.addf %283, %286 : vector<64x128xf32>
    %288 = math.tanh %287 : vector<64x128xf32>
    %289 = arith.addf %261, %288 : vector<64x128xf32>
    %cst_75 = arith.constant 0.707106769 : f32
    %290 = vector.broadcast %cst_75 : f32 to vector<64x128xf32>
    %291 = arith.mulf %289, %290 : vector<64x128xf32>
    %292 = arith.truncf %291 : vector<64x128xf32> to vector<64x128xbf16>
    %c0_76 = arith.constant 0 : index
    %c0_77 = arith.constant 0 : index
    %293 = vector.load %arg11[%c0_76, %c0_77] : memref<128x128xbf16, #tpu.memory_space<vmem>>, vector<128x128xbf16>
    %cst_78 = arith.constant dense<0.000000e+00> : vector<64x128xf32>
    %294 = tpu.matmul %292, %293, %cst_78 {dimension_numbers = #tpu.dot_dimension_numbers<[1], [0], [0], [1], [0, 0, 1, 1], [], []>} : vector<64x128xbf16>, vector<128x128xbf16>, vector<64x128xf32> -> vector<64x128xf32>
    %c0_79 = arith.constant 0 : index
    %c0_80 = arith.constant 0 : index
    %295 = vector.load %arg12[%c0_79, %c0_80] : memref<1x128xf32, #tpu.memory_space<vmem>>, vector<1x128xf32>
    %296 = vector.broadcast %295 : vector<1x128xf32> to vector<64x128xf32>
    %297 = arith.addf %294, %296 : vector<64x128xf32>
    %cst_81 = arith.constant dense<0xFF800000> : vector<64xf32>
    %298 = vector.multi_reduction <maximumf>, %297, %cst_81 [1] : vector<64x128xf32> to vector<64xf32>
    %299 = vector.shape_cast %298 : vector<64xf32> to vector<64x1xf32>
    %300 = vector.broadcast %299 : vector<64x1xf32> to vector<64x128xf32>
    %301 = arith.subf %297, %300 : vector<64x128xf32>
    %302 = math.exp %301 : vector<64x128xf32>
    %cst_82 = arith.constant dense<0.000000e+00> : vector<64xf32>
    %303 = vector.multi_reduction <add>, %302, %cst_82 [1] : vector<64x128xf32> to vector<64xf32>
    %304 = vector.shape_cast %303 : vector<64xf32> to vector<64x1xf32>
    %305 = math.log %304 : vector<64x1xf32>
    %306 = arith.addf %305, %299 : vector<64x1xf32>
    %307 = vector.broadcast %306 : vector<64x1xf32> to vector<64x128xf32>
    %308 = arith.subf %297, %307 : vector<64x128xf32>
    %309 = vector.shape_cast %308 : vector<64x128xf32> to vector<8x8x128xf32>
    %c0_83 = arith.constant 0 : index
    %c0_84 = arith.constant 0 : index
    %c0_85 = arith.constant 0 : index
    %c0_86 = arith.constant 0 : index
    %310 = vector.load %arg13[%c0_83, %c0_84, %c0_85, %c0_86] : memref<1x8x8x128xf32, #tpu.memory_space<vmem>>, vector<1x8x8x128xf32>
    %311 = vector.shape_cast %310 : vector<1x8x8x128xf32> to vector<8x8x128xf32>
    %312 = vector.shape_cast %309 : vector<8x8x128xf32> to vector<1x8x8x128xf32>
    tpu.vector_store %arg13[%c0_83, %c0_84, %c0_85, %c0_86], %312 {strides = array<i32>} : memref<1x8x8x128xf32, #tpu.memory_space<vmem>>, vector<1x8x8x128xf32>,
    return
  }
  func.func @transform_0(%arg0: i32) -> (i32, i32, i32) {
    %c0_i32 = arith.constant 0 : i32
    %c0_i32_0 = arith.constant 0 : i32
    %c0_i32_1 = arith.constant 0 : i32
    return %arg0, %c0_i32, %c0_i32_0 : i32, i32, i32
  }
  func.func @transform_1(%arg0: i32) -> (i32, i32, i32) {
    %c0_i32 = arith.constant 0 : i32
    %c0_i32_0 = arith.constant 0 : i32
    %c0_i32_1 = arith.constant 0 : i32
    return %arg0, %c0_i32, %c0_i32_0 : i32, i32, i32
  }
  func.func @transform_2(%arg0: i32) -> (i32, i32, i32) {
    %c0_i32 = arith.constant 0 : i32
    %c0_i32_0 = arith.constant 0 : i32
    %c0_i32_1 = arith.constant 0 : i32
    return %arg0, %c0_i32, %c0_i32_0 : i32, i32, i32
  }
  func.func @transform_3(%arg0: i32) -> (i32, i32, i32, i32) {
    %c0_i32 = arith.constant 0 : i32
    %c0_i32_0 = arith.constant 0 : i32
    %c0_i32_1 = arith.constant 0 : i32
    %c0_i32_2 = arith.constant 0 : i32
    return %arg0, %c0_i32, %c0_i32_0, %c0_i32_1 : i32, i32, i32, i32
  }
  func.func @transform_4(%arg0: i32) -> (i32, i32) {
    %c0_i32 = arith.constant 0 : i32
    %c0_i32_0 = arith.constant 0 : i32
    %c0_i32_1 = arith.constant 0 : i32
    return %c0_i32, %c0_i32_0 : i32, i32
  }
  func.func @transform_5(%arg0: i32) -> (i32, i32) {
    %c0_i32 = arith.constant 0 : i32
    %c0_i32_0 = arith.constant 0 : i32
    %c0_i32_1 = arith.constant 0 : i32
    return %c0_i32, %c0_i32_0 : i32, i32
  }
  func.func @transform_6(%arg0: i32) -> (i32, i32) {
    %c0_i32 = arith.constant 0 : i32
    %c0_i32_0 = arith.constant 0 : i32
    %c0_i32_1 = arith.constant 0 : i32
    return %c0_i32, %c0_i32_0 : i32, i32
  }
  func.func @transform_7(%arg0: i32) -> (i32, i32) {
    %c0_i32 = arith.constant 0 : i32
    %c0_i32_0 = arith.constant 0 : i32
    %c0_i32_1 = arith.constant 0 : i32
    return %c0_i32, %c0_i32_0 : i32, i32
  }
  func.func @transform_8(%arg0: i32) -> (i32, i32) {
    %c0_i32 = arith.constant 0 : i32
    %c0_i32_0 = arith.constant 0 : i32
    %c0_i32_1 = arith.constant 0 : i32
    return %c0_i32, %c0_i32_0 : i32, i32
  }
  func.func @transform_9(%arg0: i32) -> (i32, i32) {
    %c0_i32 = arith.constant 0 : i32
    %c0_i32_0 = arith.constant 0 : i32
    %c0_i32_1 = arith.constant 0 : i32
    return %c0_i32, %c0_i32_0 : i32, i32
  }
  func.func @transform_10(%arg0: i32) -> (i32, i32) {
    %c0_i32 = arith.constant 0 : i32
    %c0_i32_0 = arith.constant 0 : i32
    %c0_i32_1 = arith.constant 0 : i32
    return %c0_i32, %c0_i32_0 : i32, i32
  }
  func.func @transform_11(%arg0: i32) -> (i32, i32) {
    %c0_i32 = arith.constant 0 : i32
    %c0_i32_0 = arith.constant 0 : i32
    %c0_i32_1 = arith.constant 0 : i32
    return %c0_i32, %c0_i32_0 : i32, i32
  }
  func.func @transform_12(%arg0: i32) -> (i32, i32, i32, i32) {
    %c0_i32 = arith.constant 0 : i32
    %c0_i32_0 = arith.constant 0 : i32
    %c0_i32_1 = arith.constant 0 : i32
    %c0_i32_2 = arith.constant 0 : i32
    return %arg0, %c0_i32, %c0_i32_0, %c0_i32_1 : i32, i32, i32, i32
  }
}

</mosaic_0001>

<llo_original>
// kernel: tpu_custom_call.1
$region0: #{tpu_custom_call.1}
  #allocation0 [shape = 'u32[]', space=smem, size = 0x4, offset = 0x4, fixed_abs, tag = 'smem constant byte address 0x4 - core index']
  #allocation1 [shape = 'u32[144,128]{1,0:T(1,128)}', space=vmem, size = 0x12000, scoped, tag = 'internal scratch']
  #allocation2 [shape = 'f32[64,128]{1,0:T(8,128)}', space=vmem, size = 0x8000, scoped, tag = 'scratch operand']
  %s0 = inlined_call_operand.hbm [shape: f32[1,64,128], index: 0, kind: input, shape index: {}]
  %s1 = inlined_call_operand.hbm [shape: f32[1,8,128], index: 1, kind: input, shape index: {}]
  %s2 = inlined_call_operand.hbm [shape: f32[1,8,128], index: 2, kind: input, shape index: {}]
  %s3 = inlined_call_operand.hbm [shape: bf16[1,8,8,128], index: 3, kind: input, shape index: {}]
  %s4 = inlined_call_operand.hbm [shape: bf16[128,512], index: 4, kind: input, shape index: {}]
  %s5 = inlined_call_operand.hbm [shape: bf16[128,512], index: 5, kind: input, shape index: {}]
  %s6 = inlined_call_operand.hbm [shape: f32[1,512], index: 6, kind: input, shape index: {}]
  %s7 = inlined_call_operand.hbm [shape: bf16[128,128], index: 7, kind: input, shape index: {}]
  %s8 = inlined_call_operand.hbm [shape: bf16[128,128], index: 8, kind: input, shape index: {}]
  %s9 = inlined_call_operand.hbm [shape: bf16[128,128], index: 9, kind: input, shape index: {}]
  %s10 = inlined_call_operand.hbm [shape: bf16[128,128], index: 10, kind: input, shape index: {}]
  %s11 = inlined_call_operand.hbm [shape: f32[1,128], index: 11, kind: input, shape index: {}]
  %s12 = inlined_call_operand.hbm [shape: f32[1,8,8,128], index: 12, kind: output, shape index: {}]
  %s13 = sld [smem:[#allocation0]]
  $region106: #{tpu_custom_call.1} parent=0
    _
  %s15 = ssub.s32 1, %s13
  %s16 = scalar_select 0, %s15, %s13
  $region1: #{tpu_custom_call.1} parent=0
    #allocation3 [shape = 'u8[32768]{0}', space=vmem, size = 0x8000, scoped, tag = 'input window, operand 0, single buffered']
    #allocation4 [shape = 's32[1]{0}', space=sflag, size = 0x4, scoped, tag = 'scoped memory for tpu_custom_call.1']
    #allocation5 [shape = 's32[1]{0}', space=sflag, size = 0x4, scoped, tag = 'scoped memory for tpu_custom_call.1']
    #allocation6 [shape = 'u8[4096]{0}', space=vmem, size = 0x1000, scoped, tag = 'input window, operand 1, single buffered']
    #allocation7 [shape = 's32[1]{0}', space=sflag, size = 0x4, scoped, tag = 'scoped memory for tpu_custom_call.1']
    #allocation8 [shape = 'u8[4096]{0}', space=vmem, size = 0x1000, scoped, tag = 'input window, operand 2, single buffered']
    #allocation9 [shape = 'u8[16384]{0}', space=vmem, size = 0x4000, scoped, tag = 'input window, operand 3, single buffered']
    #allocation10 [shape = 's32[1]{0}', space=sflag, size = 0x4, scoped, tag = 'scoped memory for tpu_custom_call.1']
    #allocation11 [shape = 'u8[131072]{0}', space=vmem, size = 0x20000, scoped, tag = 'input window, operand 4, single buffered']
    #allocation12 [shape = 'u8[131072]{0}', space=vmem, size = 0x20000, scoped, tag = 'input window, operand 5, single buffered']
    #allocation13 [shape = 's32[1]{0}', space=sflag, size = 0x4, scoped, tag = 'scoped memory for tpu_custom_call.1']
    #allocation14 [shape = 'u8[2048]{0}', space=vmem, size = 0x800, scoped, tag = 'input window, operand 6, single buffered']
    #allocation15 [shape = 'u8[32768]{0}', space=vmem, size = 0x8000, scoped, tag = 'input window, operand 7, single buffered']
    #allocation16 [shape = 's32[1]{0}', space=sflag, size = 0x4, scoped, tag = 'scoped memory for tpu_custom_call.1']
    #allocation17 [shape = 'u8[32768]{0}', space=vmem, size = 0x8000, scoped, tag = 'input window, operand 8, single buffered']
    #allocation18 [shape = 'u8[32768]{0}', space=vmem, size = 0x8000, scoped, tag = 'input window, operand 9, single buffered']
    #allocation19 [shape = 's32[1]{0}', space=sflag, size = 0x4, scoped, tag = 'scoped memory for tpu_custom_call.1']
    #allocation20 [shape = 'u8[32768]{0}', space=vmem, size = 0x8000, scoped, tag = 'input window, operand 10, single buffered']
    #allocation21 [shape = 'u8[512]{0}', space=vmem, size = 0x400, scoped, tag = 'input window, operand 11, single buffered']
    #allocation22 [shape = 's32[1]{0}', space=sflag, size = 0x4, scoped, tag = 'scoped memory for tpu_custom_call.1']
    #allocation23 [shape = 'u8[32768]{0}', space=vmem, size = 0x8000, scoped, tag = 'output window, operand 0, single buffered']
    %17 = vsyncpa [#allocation4], 0
    %18 = vsyncpa [#allocation7], 0
    %19 = vsyncpa [#allocation10], 0
    %20 = vsyncpa [#allocation13], 0
    %21 = vsyncpa [#allocation16], 0
    %22 = vsyncpa [#allocation19], 0
    %23 = vsyncpa [#allocation22], 0
    %24 = vsyncpa [#allocation5], 0
    // Predicated region
    $region2: #{tpu_custom_call.1} parent=1 // pred_check
      _
    $region3: #{tpu_custom_call.1} parent=1 // pred_check_branch
      %26 = sbr.rel (0) target = $region5
    $region4: #{tpu_custom_call.1} parent=1 // pred_region
      %s28 = ssub.s32 1024, 1024
      %29 = vsyncadd [#allocation4], %s28
      %s30 = sshll.u32 [#allocation3], 4
      %s31 = int_to_ptr.vmem [resolvable:$true] %s30
      %36 = dma.hbm_to_vmem [thread:$0]  %s0, 1024, %s31, [#allocation4], 128, 128, 8
    $region5: #{tpu_custom_call.1} parent=1 // pred_fallthru
      _
    // Predicated region
    $region6: #{tpu_custom_call.1} parent=1 // pred_check
      _
    $region7: #{tpu_custom_call.1} parent=1 // pred_check_branch
      %38 = sbr.rel (0) target = $region9
    $region8: #{tpu_custom_call.1} parent=1 // pred_region
      %s40 = ssub.s32 128, 128
      %41 = vsyncadd [#allocation7], %s40
      %s43 = sshll.u32 [#allocation6], 4
      %s44 = int_to_ptr.vmem [resolvable:$true] %s43
      %46 = dma.hbm_to_vmem [thread:$0]  %s1, 128, %s44, [#allocation7]
    $region9: #{tpu_custom_call.1} parent=1 // pred_fallthru
      _
    // Predicated region
    $region10: #{tpu_custom_call.1} parent=1 // pred_check
      _
    $region11: #{tpu_custom_call.1} parent=1 // pred_check_branch
      %48 = sbr.rel (0) target = $region13
    $region12: #{tpu_custom_call.1} parent=1 // pred_region
      %s50 = ssub.s32 128, 128
      %51 = vsyncadd [#allocation7], %s50
      %s53 = sshll.u32 [#allocation8], 4
      %s54 = int_to_ptr.vmem [resolvable:$true] %s53
      %56 = dma.hbm_to_vmem [thread:$0]  %s2, 128, %s54, [#allocation7]
    $region13: #{tpu_custom_call.1} parent=1 // pred_fallthru
      _
    // Predicated region
    $region14: #{tpu_custom_call.1} parent=1 // pred_check
      _
    $region15: #{tpu_custom_call.1} parent=1 // pred_check_branch
      %58 = sbr.rel (0) target = $region17
    $region16: #{tpu_custom_call.1} parent=1 // pred_region
      %s60 = ssub.s32 512, 512
      %61 = vsyncadd [#allocation10], %s60
      %s62 = sshll.u32 [#allocation9], 4
      %s63 = int_to_ptr.vmem [resolvable:$true] %s62
      %68 = dma.hbm_to_vmem [thread:$0]  %s3, 512, %s63, [#allocation10], 64, 64, 4
    $region17: #{tpu_custom_call.1} parent=1 // pred_fallthru
      _
    // Predicated region
    $region18: #{tpu_custom_call.1} parent=1 // pred_check
      _
    $region19: #{tpu_custom_call.1} parent=1 // pred_check_branch
      %70 = sbr.rel (0) target = $region21
    $region20: #{tpu_custom_call.1} parent=1 // pred_region
      %s72 = ssub.s32 4096, 4096
      %73 = vsyncadd [#allocation10], %s72
      %s74 = sshll.u32 [#allocation11], 4
      %s75 = int_to_ptr.vmem [resolvable:$true] %s74
      %80 = dma.hbm_to_vmem [thread:$0]  %s4, 4096, %s75, [#allocation10], 256, 256, 16
    $region21: #{tpu_custom_call.1} parent=1 // pred_fallthru
      _
    // Predicated region
    $region22: #{tpu_custom_call.1} parent=1 // pred_check
      _
    $region23: #{tpu_custom_call.1} parent=1 // pred_check_branch
      %82 = sbr.rel (0) target = $region25
    $region24: #{tpu_custom_call.1} parent=1 // pred_region
      %s84 = ssub.s32 4096, 4096
      %85 = vsyncadd [#allocation13], %s84
      %s86 = sshll.u32 [#allocation12], 4
      %s87 = int_to_ptr.vmem [resolvable:$true] %s86
      %92 = dma.hbm_to_vmem [thread:$0]  %s5, 4096, %s87, [#allocation13], 256, 256, 16
    $region25: #{tpu_custom_call.1} parent=1 // pred_fallthru
      _
    // Predicated region
    $region26: #{tpu_custom_call.1} parent=1 // pred_check
      _
    $region27: #{tpu_custom_call.1} parent=1 // pred_check_branch
      %94 = sbr.rel (0) target = $region29
    $region28: #{tpu_custom_call.1} parent=1 // pred_region
      %s96 = ssub.s32 64, 64
      %97 = vsyncadd [#allocation13], %s96
      %s99 = sshll.u32 [#allocation14], 4
      %s100 = int_to_ptr.vmem [resolvable:$true] %s99
      %102 = dma.hbm_to_vmem [thread:$0]  %s6, 64, %s100, [#allocation13]
    $region29: #{tpu_custom_call.1} parent=1 // pred_fallthru
      _
    // Predicated region
    $region30: #{tpu_custom_call.1} parent=1 // pred_check
      _
    $region31: #{tpu_custom_call.1} parent=1 // pred_check_branch
      %104 = sbr.rel (0) target = $region33
    $region32: #{tpu_custom_call.1} parent=1 // pred_region
      %s106 = ssub.s32 1024, 1024
      %107 = vsyncadd [#allocation16], %s106
      %s108 = sshll.u32 [#allocation15], 4
      %s109 = int_to_ptr.vmem [resolvable:$true] %s108
      %114 = dma.hbm_to_vmem [thread:$0]  %s7, 1024, %s109, [#allocation16], 64, 64, 4
    $region33: #{tpu_custom_call.1} parent=1 // pred_fallthru
      _
    // Predicated region
    $region34: #{tpu_custom_call.1} parent=1 // pred_check
      _
    $region35: #{tpu_custom_call.1} parent=1 // pred_check_branch
      %116 = sbr.rel (0) target = $region37
    $region36: #{tpu_custom_call.1} parent=1 // pred_region
      %s118 = ssub.s32 1024, 1024
      %119 = vsyncadd [#allocation16], %s118
      %s120 = sshll.u32 [#allocation17], 4
      %s121 = int_to_ptr.vmem [resolvable:$true] %s120
      %126 = dma.hbm_to_vmem [thread:$0]  %s8, 1024, %s121, [#allocation16], 64, 64, 4
    $region37: #{tpu_custom_call.1} parent=1 // pred_fallthru
      _
    // Predicated region
    $region38: #{tpu_custom_call.1} parent=1 // pred_check
      _
    $region39: #{tpu_custom_call.1} parent=1 // pred_check_branch
      %128 = sbr.rel (0) target = $region41
    $region40: #{tpu_custom_call.1} parent=1 // pred_region
      %s130 = ssub.s32 1024, 1024
      %131 = vsyncadd [#allocation19], %s130
      %s132 = sshll.u32 [#allocation18], 4
      %s133 = int_to_ptr.vmem [resolvable:$true] %s132
      %138 = dma.hbm_to_vmem [thread:$0]  %s9, 1024, %s133, [#allocation19], 64, 64, 4
    $region41: #{tpu_custom_call.1} parent=1 // pred_fallthru
      _
    // Predicated region
    $region42: #{tpu_custom_call.1} parent=1 // pred_check
      _
    $region43: #{tpu_custom_call.1} parent=1 // pred_check_branch
      %140 = sbr.rel (0) target = $region45
    $region44: #{tpu_custom_call.1} parent=1 // pred_region
      %s142 = ssub.s32 1024, 1024
      %143 = vsyncadd [#allocation19], %s142
      %s144 = sshll.u32 [#allocation20], 4
      %s145 = int_to_ptr.vmem [resolvable:$true] %s144
      %150 = dma.hbm_to_vmem [thread:$0]  %s10, 1024, %s145, [#allocation19], 64, 64, 4
    $region45: #{tpu_custom_call.1} parent=1 // pred_fallthru
      _
    // Predicated region
    $region46: #{tpu_custom_call.1} parent=1 // pred_check
      _
    $region47: #{tpu_custom_call.1} parent=1 // pred_check_branch
      %152 = sbr.rel (0) target = $region49
    $region48: #{tpu_custom_call.1} parent=1 // pred_region
      %s154 = ssub.s32 16, 16
      %155 = vsyncadd [#allocation22], %s154
      %s157 = sshll.u32 [#allocation21], 4
      %s158 = int_to_ptr.vmem [resolvable:$true] %s157
      %160 = dma.hbm_to_vmem [thread:$0]  %s11, 16, %s158, [#allocation22]
    $region49: #{tpu_custom_call.1} parent=1 // pred_fallthru
      _
    // Predicated region
    $region50: #{tpu_custom_call.1} parent=1 // pred_check
      _
    $region51: #{tpu_custom_call.1} parent=1 // pred_check_branch
      %162 = sbr.rel (0) target = $region53
    $region52: #{tpu_custom_call.1} parent=1 // pred_region
      %163 = dma.done [#allocation4], 1024
    $region53: #{tpu_custom_call.1} parent=1 // pred_fallthru
      _
    // Predicated region
    $region54: #{tpu_custom_call.1} parent=1 // pred_check
      _
    $region55: #{tpu_custom_call.1} parent=1 // pred_check_branch
      %165 = sbr.rel (0) target = $region57
    $region56: #{tpu_custom_call.1} parent=1 // pred_region
      %166 = dma.done [#allocation7], 128
    $region57: #{tpu_custom_call.1} parent=1 // pred_fallthru
      _
    // Predicated region
    $region58: #{tpu_custom_call.1} parent=1 // pred_check
      _
    $region59: #{tpu_custom_call.1} parent=1 // pred_check_branch
      %168 = sbr.rel (0) target = $region61
    $region60: #{tpu_custom_call.1} parent=1 // pred_region
      %169 = dma.done [#allocation7], 128
    $region61: #{tpu_custom_call.1} parent=1 // pred_fallthru
      _
    // Predicated region
    $region62: #{tpu_custom_call.1} parent=1 // pred_check
      _
    $region63: #{tpu_custom_call.1} parent=1 // pred_check_branch
      %171 = sbr.rel (0) target = $region65
    $region64: #{tpu_custom_call.1} parent=1 // pred_region
      %172 = dma.done [#allocation10], 512
    $region65: #{tpu_custom_call.1} parent=1 // pred_fallthru
      _
    // Predicated region
    $region66: #{tpu_custom_call.1} parent=1 // pred_check
      _
    $region67: #{tpu_custom_call.1} parent=1 // pred_check_branch
      %174 = sbr.rel (0) target = $region69
    $region68: #{tpu_custom_call.1} parent=1 // pred_region
      %175 = dma.done [#allocation10], 4096
    $region69: #{tpu_custom_call.1} parent=1 // pred_fallthru
      _
    // Predicated region
    $region70: #{tpu_custom_call.1} parent=1 // pred_check
      _
    $region71: #{tpu_custom_call.1} parent=1 // pred_check_branch
      %177 = sbr.rel (0) target = $region73
    $region72: #{tpu_custom_call.1} parent=1 // pred_region
      %178 = dma.done [#allocation13], 4096
    $region73: #{tpu_custom_call.1} parent=1 // pred_fallthru
      _
    // Predicated region
    $region74: #{tpu_custom_call.1} parent=1 // pred_check
      _
    $region75: #{tpu_custom_call.1} parent=1 // pred_check_branch
      %180 = sbr.rel (0) target = $region77
    $region76: #{tpu_custom_call.1} parent=1 // pred_region
      %181 = dma.done [#allocation13], 64
    $region77: #{tpu_custom_call.1} parent=1 // pred_fallthru
      _
    // Predicated region
    $region78: #{tpu_custom_call.1} parent=1 // pred_check
      _
    $region79: #{tpu_custom_call.1} parent=1 // pred_check_branch
      %183 = sbr.rel (0) target = $region81
    $region80: #{tpu_custom_call.1} parent=1 // pred_region
      %184 = dma.done [#allocation16], 1024
    $region81: #{tpu_custom_call.1} parent=1 // pred_fallthru
      _
    // Predicated region
    $region82: #{tpu_custom_call.1} parent=1 // pred_check
      _
    $region83: #{tpu_custom_call.1} parent=1 // pred_check_branch
      %186 = sbr.rel (0) target = $region85
    $region84: #{tpu_custom_call.1} parent=1 // pred_region
      %187 = dma.done [#allocation16], 1024
    $region85: #{tpu_custom_call.1} parent=1 // pred_fallthru
      _
    // Predicated region
    $region86: #{tpu_custom_call.1} parent=1 // pred_check
      _
    $region87: #{tpu_custom_call.1} parent=1 // pred_check_branch
      %189 = sbr.rel (0) target = $region89
    $region88: #{tpu_custom_call.1} parent=1 // pred_region
      %190 = dma.done [#allocation19], 1024
    $region89: #{tpu_custom_call.1} parent=1 // pred_fallthru
      _
    // Predicated region
    $region90: #{tpu_custom_call.1} parent=1 // pred_check
      _
    $region91: #{tpu_custom_call.1} parent=1 // pred_check_branch
      %192 = sbr.rel (0) target = $region93
    $region92: #{tpu_custom_call.1} parent=1 // pred_region
      %193 = dma.done [#allocation19], 1024
    $region93: #{tpu_custom_call.1} parent=1 // pred_fallthru
      _
    // Predicated region
    $region94: #{tpu_custom_call.1} parent=1 // pred_check
      _
    $region95: #{tpu_custom_call.1} parent=1 // pred_check_branch
      %195 = sbr.rel (0) target = $region97
    $region96: #{tpu_custom_call.1} parent=1 // pred_region
      %196 = dma.done [#allocation22], 16
    $region97: #{tpu_custom_call.1} parent=1 // pred_fallthru
      _
    %v198 = vld [vmem:[#allocation3] sm:$0xff]
    %v199 = vld [vmem:[#allocation3 + $0x8] sm:$0xff]
    %v200 = vld [vmem:[#allocation3 + $0x10] sm:$0xff]
    %v201 = vld [vmem:[#allocation3 + $0x18] sm:$0xff]
    %v202 = vld [vmem:[#allocation3 + $0x20] sm:$0xff]
    %v203 = vld [vmem:[#allocation3 + $0x28] sm:$0xff]
    %v204 = vld [vmem:[#allocation3 + $0x30] sm:$0xff]
    %v205 = vld [vmem:[#allocation3 + $0x38] sm:$0xff]
    %v206 = vld [vmem:[#allocation9] sm:$0xf]
    %v207 = vld [vmem:[#allocation9 + $0x4] sm:$0xf]
    %v208 = vld [vmem:[#allocation9 + $0x8] sm:$0xf]
    %v209 = vld [vmem:[#allocation9 + $0xc] sm:$0xf]
    %v210 = vld [vmem:[#allocation9 + $0x10] sm:$0xf]
    %v211 = vld [vmem:[#allocation9 + $0x14] sm:$0xf]
    %v212 = vld [vmem:[#allocation9 + $0x18] sm:$0xf]
    %v213 = vld [vmem:[#allocation9 + $0x1c] sm:$0xf]
    %v214 = vld [vmem:[#allocation12] sm:$0xff]
    %v215 = vld [vmem:[#allocation12 + $0x8] sm:$0xff]
    %v216 = vld [vmem:[#allocation12 + $0x10] sm:$0xff]
    %v217 = vld [vmem:[#allocation12 + $0x18] sm:$0xff]
    %v218 = vld [vmem:[#allocation12 + $0x20] sm:$0xff]
    %v219 = vld [vmem:[#allocation12 + $0x28] sm:$0xff]
    %v220 = vld [vmem:[#allocation12 + $0x30] sm:$0xff]
    %v221 = vld [vmem:[#allocation12 + $0x38] sm:$0xff]
    %v222 = vld [vmem:[#allocation12 + $0x40] sm:$0xff]
    %v223 = vld [vmem:[#allocation12 + $0x48] sm:$0xff]
    %v224 = vld [vmem:[#allocation12 + $0x50] sm:$0xff]
    %v225 = vld [vmem:[#allocation12 + $0x58] sm:$0xff]
    %v226 = vld [vmem:[#allocation12 + $0x60] sm:$0xff]
    %v227 = vld [vmem:[#allocation12 + $0x68] sm:$0xff]
    %v228 = vld [vmem:[#allocation12 + $0x70] sm:$0xff]
    %v229 = vld [vmem:[#allocation12 + $0x78] sm:$0xff]
    %v230 = vld [vmem:[#allocation12 + $0x80] sm:$0xff]
    %v231 = vld [vmem:[#allocation12 + $0x88] sm:$0xff]
    %v232 = vld [vmem:[#allocation12 + $0x90] sm:$0xff]
    %v233 = vld [vmem:[#allocation12 + $0x98] sm:$0xff]
    %v234 = vld [vmem:[#allocation12 + $0xa0] sm:$0xff]
    %v235 = vld [vmem:[#allocation12 + $0xa8] sm:$0xff]
    %v236 = vld [vmem:[#allocation12 + $0xb0] sm:$0xff]
    %v237 = vld [vmem:[#allocation12 + $0xb8] sm:$0xff]
    %v238 = vld [vmem:[#allocation12 + $0xc0] sm:$0xff]
    %v239 = vld [vmem:[#allocation12 + $0xc8] sm:$0xff]
    %v240 = vld [vmem:[#allocation12 + $0xd0] sm:$0xff]
    %v241 = vld [vmem:[#allocation12 + $0xd8] sm:$0xff]
    %v242 = vld [vmem:[#allocation12 + $0xe0] sm:$0xff]
    %v243 = vld [vmem:[#allocation12 + $0xe8] sm:$0xff]
    %v244 = vld [vmem:[#allocation12 + $0xf0] sm:$0xff]
    %v245 = vld [vmem:[#allocation12 + $0xf8] sm:$0xff]
    %v246 = vpack.c.bf16 %v199, %v198
    %v247 = vpack.c.bf16 %v201, %v200
    %v248 = vpack.c.bf16 %v203, %v202
    %v249 = vpack.c.bf16 %v205, %v204
    %v250 = vld [vmem:[#allocation11] sm:$0xff]
    %v251 = vld [vmem:[#allocation11 + $0x8] sm:$0xff]
    %v252 = vld [vmem:[#allocation11 + $0x10] sm:$0xff]
    %v253 = vld [vmem:[#allocation11 + $0x18] sm:$0xff]
    %v254 = vld [vmem:[#allocation11 + $0x20] sm:$0xff]
    %v255 = vld [vmem:[#allocation11 + $0x28] sm:$0xff]
    %v256 = vld [vmem:[#allocation11 + $0x30] sm:$0xff]
    %v257 = vld [vmem:[#allocation11 + $0x38] sm:$0xff]
    %v258 = vld [vmem:[#allocation11 + $0x40] sm:$0xff]
    %v259 = vld [vmem:[#allocation11 + $0x48] sm:$0xff]
    %v260 = vld [vmem:[#allocation11 + $0x50] sm:$0xff]
    %v261 = vld [vmem:[#allocation11 + $0x58] sm:$0xff]
    %v262 = vld [vmem:[#allocation11 + $0x60] sm:$0xff]
    %v263 = vld [vmem:[#allocation11 + $0x68] sm:$0xff]
    %v264 = vld [vmem:[#allocation11 + $0x70] sm:$0xff]
    %v265 = vld [vmem:[#allocation11 + $0x78] sm:$0xff]
    %v266 = vld [vmem:[#allocation11 + $0x80] sm:$0xff]
    %v267 = vld [vmem:[#allocation11 + $0x88] sm:$0xff]
    %v268 = vld [vmem:[#allocation11 + $0x90] sm:$0xff]
    %v269 = vld [vmem:[#allocation11 + $0x98] sm:$0xff]
    %v270 = vld [vmem:[#allocation11 + $0xa0] sm:$0xff]
    %v271 = vld [vmem:[#allocation11 + $0xa8] sm:$0xff]
    %v272 = vld [vmem:[#allocation11 + $0xb0] sm:$0xff]
    %v273 = vld [vmem:[#allocation11 + $0xb8] sm:$0xff]
    %v274 = vld [vmem:[#allocation11 + $0xc0] sm:$0xff]
    %v275 = vld [vmem:[#allocation11 + $0xc8] sm:$0xff]
    %v276 = vld [vmem:[#allocation11 + $0xd0] sm:$0xff]
    %v277 = vld [vmem:[#allocation11 + $0xd8] sm:$0xff]
    %v278 = vld [vmem:[#allocation11 + $0xe0] sm:$0xff]
    %v279 = vld [vmem:[#allocation11 + $0xe8] sm:$0xff]
    %v280 = vld [vmem:[#allocation11 + $0xf0] sm:$0xff]
    %v281 = vld [vmem:[#allocation11 + $0xf8] sm:$0xff]
    %v282 = vld [vmem:[#allocation14] sm:$0xf]
    %v284 = vlaneseq
    %v285 = vshrl.u32 %v284, 7
    %v286 = vsub.s32 0, %v285
    %v287 = vrot.slane %v282, %v286
    %v288 = vlaneseq
    %v289 = vshrl.u32 %v288, 7
    %v290 = vsub.s32 1, %v289
    %v291 = vrot.slane %v282, %v290
    %v292 = vlaneseq
    %v293 = vshrl.u32 %v292, 7
    %v294 = vsub.s32 2, %v293
    %v295 = vrot.slane %v282, %v294
    %v296 = vlaneseq
    %v297 = vshrl.u32 %v296, 7
    %v298 = vsub.s32 3, %v297
    %v299 = vrot.slane %v282, %v298
    %v336 = vunpack.c.l.b16 %v250
    %v337 = vunpack.c.h.b16 %v250
    %v338 = vunpack.c.l.b16 %v251
    %v339 = vunpack.c.h.b16 %v251
    %v340 = vunpack.c.l.b16 %v252
    %v341 = vunpack.c.h.b16 %v252
    %v342 = vunpack.c.l.b16 %v253
    %v343 = vunpack.c.h.b16 %v253
    %v344 = vunpack.c.l.b16 %v254
    %v345 = vunpack.c.h.b16 %v254
    %v346 = vunpack.c.l.b16 %v255
    %v347 = vunpack.c.h.b16 %v255
    %v348 = vunpack.c.l.b16 %v256
    %v349 = vunpack.c.h.b16 %v256
    %v350 = vunpack.c.l.b16 %v257
    %v351 = vunpack.c.h.b16 %v257
    %v352 = vunpack.c.l.b16 %v258
    %v353 = vunpack.c.h.b16 %v258
    %v354 = vunpack.c.l.b16 %v259
    %v355 = vunpack.c.h.b16 %v259
    %v356 = vunpack.c.l.b16 %v260
    %v357 = vunpack.c.h.b16 %v260
    %v358 = vunpack.c.l.b16 %v261
    %v359 = vunpack.c.h.b16 %v261
    %v360 = vunpack.c.l.b16 %v262
    %v361 = vunpack.c.h.b16 %v262
    %v362 = vunpack.c.l.b16 %v263
    %v363 = vunpack.c.h.b16 %v263
    %v364 = vunpack.c.l.b16 %v264
    %v365 = vunpack.c.h.b16 %v264
    %v366 = vunpack.c.l.b16 %v265
    %v367 = vunpack.c.h.b16 %v265
    %v368 = vunpack.c.l.b16 %v266
    %v369 = vunpack.c.h.b16 %v266
    %v370 = vunpack.c.l.b16 %v267
    %v371 = vunpack.c.h.b16 %v267
    %v372 = vunpack.c.l.b16 %v268
    %v373 = vunpack.c.h.b16 %v268
    %v374 = vunpack.c.l.b16 %v269
    %v375 = vunpack.c.h.b16 %v269
    %v376 = vunpack.c.l.b16 %v270
    %v377 = vunpack.c.h.b16 %v270
    %v378 = vunpack.c.l.b16 %v271
    %v379 = vunpack.c.h.b16 %v271
    %v380 = vunpack.c.l.b16 %v272
    %v381 = vunpack.c.h.b16 %v272
    %v382 = vunpack.c.l.b16 %v273
    %v383 = vunpack.c.h.b16 %v273
    %v384 = vunpack.c.l.b16 %v274
    %v385 = vunpack.c.h.b16 %v274
    %v386 = vunpack.c.l.b16 %v275
    %v387 = vunpack.c.h.b16 %v275
    %v388 = vunpack.c.l.b16 %v276
    %v389 = vunpack.c.h.b16 %v276
    %v390 = vunpack.c.l.b16 %v277
    %v391 = vunpack.c.h.b16 %v277
    %v392 = vunpack.c.l.b16 %v278
    %v393 = vunpack.c.h.b16 %v278
    %v394 = vunpack.c.l.b16 %v279
    %v395 = vunpack.c.h.b16 %v279
    %v396 = vunpack.c.l.b16 %v280
    %v397 = vunpack.c.h.b16 %v280
    %v398 = vunpack.c.l.b16 %v281
    %v399 = vunpack.c.h.b16 %v281
    %v400 = vpack.c.b16 %v340, %v336
    %v401 = vpack.c.b16 %v341, %v337
    %v402 = vpack.c.b16 %v342, %v338
    %v403 = vpack.c.b16 %v343, %v339
    %v404 = vpack.c.b16 %v348, %v344
    %v405 = vpack.c.b16 %v349, %v345
    %v406 = vpack.c.b16 %v350, %v346
    %v407 = vpack.c.b16 %v351, %v347
    %v408 = vpack.c.b16 %v356, %v352
    %v409 = vpack.c.b16 %v357, %v353
    %v410 = vpack.c.b16 %v358, %v354
    %v411 = vpack.c.b16 %v359, %v355
    %v412 = vpack.c.b16 %v364, %v360
    %v413 = vpack.c.b16 %v365, %v361
    %v414 = vpack.c.b16 %v366, %v362
    %v415 = vpack.c.b16 %v367, %v363
    %v416 = vpack.c.b16 %v372, %v368
    %v417 = vpack.c.b16 %v373, %v369
    %v418 = vpack.c.b16 %v374, %v370
    %v419 = vpack.c.b16 %v375, %v371
    %v420 = vpack.c.b16 %v380, %v376
    %v421 = vpack.c.b16 %v381, %v377
    %v422 = vpack.c.b16 %v382, %v378
    %v423 = vpack.c.b16 %v383, %v379
    %v424 = vpack.c.b16 %v388, %v384
    %v425 = vpack.c.b16 %v389, %v385
    %v426 = vpack.c.b16 %v390, %v386
    %v427 = vpack.c.b16 %v391, %v387
    %v428 = vpack.c.b16 %v396, %v392
    %v429 = vpack.c.b16 %v397, %v393
    %v430 = vpack.c.b16 %v398, %v394
    %v431 = vpack.c.b16 %v399, %v395
    %464 = vmatprep.subr.bf16.mxu0 %v401
    %465 = vmatpush1.bf16.msra.mxu0 %v400
    %466 = vmatprep.subr.bf16.mxu0 %v405
    %467 = vmatpush1.bf16.msra.mxu0 %v404
    %468 = vmatprep.subr.bf16.mxu0 %v409
    %469 = vmatpush1.bf16.msra.mxu0 %v408
    %470 = vmatprep.subr.bf16.mxu0 %v413
    %471 = vmatpush1.bf16.msra.mxu0 %v412
    %472 = vmatprep.subr.bf16.mxu0 %v417
    %473 = vmatpush1.bf16.msra.mxu0 %v416
    %474 = vmatprep.subr.bf16.mxu0 %v421
    %475 = vmatpush1.bf16.msra.mxu0 %v420
    %476 = vmatprep.subr.bf16.mxu0 %v425
    %477 = vmatpush1.bf16.msra.mxu0 %v424
    %478 = vmatprep.subr.bf16.mxu0 %v429
    %479 = vmatpush1.bf16.msra.mxu0 %v428
    %480 = vmatprep.subr.bf16.mxu0 0
    %481 = vmatpush1.bf16.msra.mxu0 0
    %482 = vmatprep.subr.bf16.mxu0 0
    %483 = vmatpush1.bf16.msra.mxu0 0
    %484 = vmatprep.subr.bf16.mxu0 0
    %485 = vmatpush1.bf16.msra.mxu0 0
    %486 = vmatprep.subr.bf16.mxu0 0
    %487 = vmatpush1.bf16.msra.mxu0 0
    %488 = vmatprep.subr.bf16.mxu0 0
    %489 = vmatpush1.bf16.msra.mxu0 0
    %490 = vmatprep.subr.bf16.mxu0 0
    %491 = vmatpush1.bf16.msra.mxu0 0
    %492 = vmatprep.subr.bf16.mxu0 0
    %493 = vmatpush1.bf16.msra.mxu0 0
    %494 = vmatprep.subr.bf16.mxu0 0
    %495 = vmatpush1.bf16.msra.mxu0 0
    %496 = vmatprep.mubr.bf16.mxu0 0
    %497 = vmatmul.mubr.bf16.gmra.mrb[0].mxu0 %v246
    %v498 = vpop.f32.mrb[0].mxu0
    %v499 = vadd.f32 %v287, %v498
    %v500 = vpop.f32.mrb[0].mxu0
    %v501 = vadd.f32 %v291, %v500
    %v502 = vpop.f32.mrb[0].mxu0
    %v503 = vadd.f32 %v287, %v502
    %v504 = vpop.f32.mrb[0].mxu0
    %v505 = vadd.f32 %v291, %v504
    %506 = vmatprep.mubr.bf16.mxu0 0
    %507 = vmatmul.mubr.bf16.gmra.mrb[0].mxu0 %v247
    %v508 = vpop.f32.mrb[0].mxu0
    %v509 = vadd.f32 %v287, %v508
    %v510 = vpop.f32.mrb[0].mxu0
    %v511 = vadd.f32 %v291, %v510
    %v512 = vpop.f32.mrb[0].mxu0
    %v513 = vadd.f32 %v287, %v512
    %v514 = vpop.f32.mrb[0].mxu0
    %v515 = vadd.f32 %v291, %v514
    %516 = vmatprep.mubr.bf16.mxu0 0
    %517 = vmatmul.mubr.bf16.gmra.mrb[0].mxu0 %v248
    %v518 = vpop.f32.mrb[0].mxu0
    %v519 = vadd.f32 %v287, %v518
    %v520 = vpop.f32.mrb[0].mxu0
    %v521 = vadd.f32 %v291, %v520
    %v522 = vpop.f32.mrb[0].mxu0
    %v523 = vadd.f32 %v287, %v522
    %v524 = vpop.f32.mrb[0].mxu0
    %v525 = vadd.f32 %v291, %v524
    %526 = vmatprep.mubr.bf16.mxu0 0
    %527 = vmatmul.mubr.bf16.gmra.mrb[0].mxu0 %v249
    %v528 = vpop.f32.mrb[0].mxu0
    %v529 = vadd.f32 %v287, %v528
    %v530 = vpop.f32.mrb[0].mxu0
    %v531 = vadd.f32 %v291, %v530
    %v532 = vpop.f32.mrb[0].mxu0
    %v533 = vadd.f32 %v287, %v532
    %v534 = vpop.f32.mrb[0].mxu0
    %v535 = vadd.f32 %v291, %v534
    %536 = vdwg.mxu0
    %537 = vmatprep.subr.bf16.mxu0 %v403
    %538 = vmatpush1.bf16.msra.mxu0 %v402
    %539 = vmatprep.subr.bf16.mxu0 %v407
    %540 = vmatpush1.bf16.msra.mxu0 %v406
    %541 = vmatprep.subr.bf16.mxu0 %v411
    %542 = vmatpush1.bf16.msra.mxu0 %v410
    %543 = vmatprep.subr.bf16.mxu0 %v415
    %544 = vmatpush1.bf16.msra.mxu0 %v414
    %545 = vmatprep.subr.bf16.mxu0 %v419
    %546 = vmatpush1.bf16.msra.mxu0 %v418
    %547 = vmatprep.subr.bf16.mxu0 %v423
    %548 = vmatpush1.bf16.msra.mxu0 %v422
    %549 = vmatprep.subr.bf16.mxu0 %v427
    %550 = vmatpush1.bf16.msra.mxu0 %v426
    %551 = vmatprep.subr.bf16.mxu0 %v431
    %552 = vmatpush1.bf16.msra.mxu0 %v430
    %553 = vmatprep.subr.bf16.mxu0 0
    %554 = vmatpush1.bf16.msra.mxu0 0
    %555 = vmatprep.subr.bf16.mxu0 0
    %556 = vmatpush1.bf16.msra.mxu0 0
    %557 = vmatprep.subr.bf16.mxu0 0
    %558 = vmatpush1.bf16.msra.mxu0 0
    %559 = vmatprep.subr.bf16.mxu0 0
    %560 = vmatpush1.bf16.msra.mxu0 0
    %561 = vmatprep.subr.bf16.mxu0 0
    %562 = vmatpush1.bf16.msra.mxu0 0
    %563 = vmatprep.subr.bf16.mxu0 0
    %564 = vmatpush1.bf16.msra.mxu0 0
    %565 = vmatprep.subr.bf16.mxu0 0
    %566 = vmatpush1.bf16.msra.mxu0 0
    %567 = vmatprep.subr.bf16.mxu0 0
    %568 = vmatpush1.bf16.msra.mxu0 0
    %569 = vmatprep.mubr.bf16.mxu0 0
    %570 = vmatmul.mubr.bf16.gmra.mrb[0].mxu0 %v246
    %v571 = vpop.f32.mrb[0].mxu0
    %v572 = vadd.f32 %v295, %v571
    %v573 = vpop.f32.mrb[0].mxu0
    %v574 = vadd.f32 %v299, %v573
    %v575 = vpop.f32.mrb[0].mxu0
    %v576 = vadd.f32 %v295, %v575
    %v577 = vpop.f32.mrb[0].mxu0
    %v578 = vadd.f32 %v299, %v577
    %579 = vmatprep.mubr.bf16.mxu0 0
    %580 = vmatmul.mubr.bf16.gmra.mrb[0].mxu0 %v247
    %v581 = vpop.f32.mrb[0].mxu0
    %v582 = vadd.f32 %v295, %v581
    %v583 = vpop.f32.mrb[0].mxu0
    %v584 = vadd.f32 %v299, %v583
    %v585 = vpop.f32.mrb[0].mxu0
    %v586 = vadd.f32 %v295, %v585
    %v587 = vpop.f32.mrb[0].mxu0
    %v588 = vadd.f32 %v299, %v587
    %589 = vmatprep.mubr.bf16.mxu0 0
    %590 = vmatmul.mubr.bf16.gmra.mrb[0].mxu0 %v248
    %v591 = vpop.f32.mrb[0].mxu0
    %v592 = vadd.f32 %v295, %v591
    %v593 = vpop.f32.mrb[0].mxu0
    %v594 = vadd.f32 %v299, %v593
    %v595 = vpop.f32.mrb[0].mxu0
    %v596 = vadd.f32 %v295, %v595
    %v597 = vpop.f32.mrb[0].mxu0
    %v598 = vadd.f32 %v299, %v597
    %599 = vmatprep.mubr.bf16.mxu0 0
    %600 = vmatmul.mubr.bf16.gmra.mrb[0].mxu0 %v249
    %v601 = vpop.f32.mrb[0].mxu0
    %v602 = vadd.f32 %v295, %v601
    %v603 = vpop.f32.mrb[0].mxu0
    %v604 = vadd.f32 %v299, %v603
    %v605 = vpop.f32.mrb[0].mxu0
    %v606 = vadd.f32 %v295, %v605
    %v607 = vpop.f32.mrb[0].mxu0
    %v608 = vadd.f32 %v299, %v607
    %609 = vdwg.mxu0
    %v610 = vld [vmem:[#allocation6] sm:$0xff]
    %v611 = vld [vmem:[#allocation8] sm:$0xff]
    %v612 = vpack.c.bf16 %v610, %v610
    %v645 = vunpack.c.l.b16 %v214
    %v646 = vunpack.c.h.b16 %v214
    %v647 = vunpack.c.l.b16 %v215
    %v648 = vunpack.c.h.b16 %v215
    %v649 = vunpack.c.l.b16 %v216
    %v650 = vunpack.c.h.b16 %v216
    %v651 = vunpack.c.l.b16 %v217
    %v652 = vunpack.c.h.b16 %v217
    %v653 = vunpack.c.l.b16 %v218
    %v654 = vunpack.c.h.b16 %v218
    %v655 = vunpack.c.l.b16 %v219
    %v656 = vunpack.c.h.b16 %v219
    %v657 = vunpack.c.l.b16 %v220
    %v658 = vunpack.c.h.b16 %v220
    %v659 = vunpack.c.l.b16 %v221
    %v660 = vunpack.c.h.b16 %v221
    %v661 = vunpack.c.l.b16 %v222
    %v662 = vunpack.c.h.b16 %v222
    %v663 = vunpack.c.l.b16 %v223
    %v664 = vunpack.c.h.b16 %v223
    %v665 = vunpack.c.l.b16 %v224
    %v666 = vunpack.c.h.b16 %v224
    %v667 = vunpack.c.l.b16 %v225
    %v668 = vunpack.c.h.b16 %v225
    %v669 = vunpack.c.l.b16 %v226
    %v670 = vunpack.c.h.b16 %v226
    %v671 = vunpack.c.l.b16 %v227
    %v672 = vunpack.c.h.b16 %v227
    %v673 = vunpack.c.l.b16 %v228
    %v674 = vunpack.c.h.b16 %v228
    %v675 = vunpack.c.l.b16 %v229
    %v676 = vunpack.c.h.b16 %v229
    %v677 = vunpack.c.l.b16 %v230
    %v678 = vunpack.c.h.b16 %v230
    %v679 = vunpack.c.l.b16 %v231
    %v680 = vunpack.c.h.b16 %v231
    %v681 = vunpack.c.l.b16 %v232
    %v682 = vunpack.c.h.b16 %v232
    %v683 = vunpack.c.l.b16 %v233
    %v684 = vunpack.c.h.b16 %v233
    %v685 = vunpack.c.l.b16 %v234
    %v686 = vunpack.c.h.b16 %v234
    %v687 = vunpack.c.l.b16 %v235
    %v688 = vunpack.c.h.b16 %v235
    %v689 = vunpack.c.l.b16 %v236
    %v690 = vunpack.c.h.b16 %v236
    %v691 = vunpack.c.l.b16 %v237
    %v692 = vunpack.c.h.b16 %v237
    %v693 = vunpack.c.l.b16 %v238
    %v694 = vunpack.c.h.b16 %v238
    %v695 = vunpack.c.l.b16 %v239
    %v696 = vunpack.c.h.b16 %v239
    %v697 = vunpack.c.l.b16 %v240
    %v698 = vunpack.c.h.b16 %v240
    %v699 = vunpack.c.l.b16 %v241
    %v700 = vunpack.c.h.b16 %v241
    %v701 = vunpack.c.l.b16 %v242
    %v702 = vunpack.c.h.b16 %v242
    %v703 = vunpack.c.l.b16 %v243
    %v704 = vunpack.c.h.b16 %v243
    %v705 = vunpack.c.l.b16 %v244
    %v706 = vunpack.c.h.b16 %v244
    %v707 = vunpack.c.l.b16 %v245
    %v708 = vunpack.c.h.b16 %v245
    %v709 = vpack.c.b16 %v649, %v645
    %v710 = vpack.c.b16 %v650, %v646
    %v711 = vpack.c.b16 %v651, %v647
    %v712 = vpack.c.b16 %v652, %v648
    %v713 = vpack.c.b16 %v657, %v653
    %v714 = vpack.c.b16 %v658, %v654
    %v715 = vpack.c.b16 %v659, %v655
    %v716 = vpack.c.b16 %v660, %v656
    %v717 = vpack.c.b16 %v665, %v661
    %v718 = vpack.c.b16 %v666, %v662
    %v719 = vpack.c.b16 %v667, %v663
    %v720 = vpack.c.b16 %v668, %v664
    %v721 = vpack.c.b16 %v673, %v669
    %v722 = vpack.c.b16 %v674, %v670
    %v723 = vpack.c.b16 %v675, %v671
    %v724 = vpack.c.b16 %v676, %v672
    %v725 = vpack.c.b16 %v681, %v677
    %v726 = vpack.c.b16 %v682, %v678
    %v727 = vpack.c.b16 %v683, %v679
    %v728 = vpack.c.b16 %v684, %v680
    %v729 = vpack.c.b16 %v689, %v685
    %v730 = vpack.c.b16 %v690, %v686
    %v731 = vpack.c.b16 %v691, %v687
    %v732 = vpack.c.b16 %v692, %v688
    %v733 = vpack.c.b16 %v697, %v693
    %v734 = vpack.c.b16 %v698, %v694
    %v735 = vpack.c.b16 %v699, %v695
    %v736 = vpack.c.b16 %v700, %v696
    %v737 = vpack.c.b16 %v705, %v701
    %v738 = vpack.c.b16 %v706, %v702
    %v739 = vpack.c.b16 %v707, %v703
    %v740 = vpack.c.b16 %v708, %v704
    %773 = vmatprep.subr.bf16.mxu0 %v710
    %774 = vmatpush1.bf16.msra.mxu0 %v709
    %775 = vmatprep.subr.bf16.mxu0 %v714
    %776 = vmatpush1.bf16.msra.mxu0 %v713
    %777 = vmatprep.subr.bf16.mxu0 %v718
    %778 = vmatpush1.bf16.msra.mxu0 %v717
    %779 = vmatprep.subr.bf16.mxu0 %v722
    %780 = vmatpush1.bf16.msra.mxu0 %v721
    %781 = vmatprep.subr.bf16.mxu0 %v726
    %782 = vmatpush1.bf16.msra.mxu0 %v725
    %783 = vmatprep.subr.bf16.mxu0 %v730
    %784 = vmatpush1.bf16.msra.mxu0 %v729
    %785 = vmatprep.subr.bf16.mxu0 %v734
    %786 = vmatpush1.bf16.msra.mxu0 %v733
    %787 = vmatprep.subr.bf16.mxu0 %v738
    %788 = vmatpush1.bf16.msra.mxu0 %v737
    %789 = vmatprep.subr.bf16.mxu0 0
    %790 = vmatpush1.bf16.msra.mxu0 0
    %791 = vmatprep.subr.bf16.mxu0 0
    %792 = vmatpush1.bf16.msra.mxu0 0
    %793 = vmatprep.subr.bf16.mxu0 0
    %794 = vmatpush1.bf16.msra.mxu0 0
    %795 = vmatprep.subr.bf16.mxu0 0
    %796 = vmatpush1.bf16.msra.mxu0 0
    %797 = vmatprep.subr.bf16.mxu0 0
    %798 = vmatpush1.bf16.msra.mxu0 0
    %799 = vmatprep.subr.bf16.mxu0 0
    %800 = vmatpush1.bf16.msra.mxu0 0
    %801 = vmatprep.subr.bf16.mxu0 0
    %802 = vmatpush1.bf16.msra.mxu0 0
    %803 = vmatprep.subr.bf16.mxu0 0
    %804 = vmatpush1.bf16.msra.mxu0 0
    %805 = vmatprep.mubr.bf16.mxu0 0
    %806 = vmatmul.mubr.bf16.gmra.mrb[0].mxu0 %v612
    %v807 = vpop.f32.mrb[0].mxu0
    %v808 = vadd.f32 0.0, %v807
    %v809 = vpop.f32.mrb[0].mxu0
    %v810 = vadd.f32 0.0, %v809
    %v811 = vpop.f32.mrb[0].mxu0
    %v812 = vpop.f32.mrb[0].mxu0
    %813 = vdwg.mxu0
    %814 = vmatprep.subr.bf16.mxu0 %v712
    %815 = vmatpush1.bf16.msra.mxu0 %v711
    %816 = vmatprep.subr.bf16.mxu0 %v716
    %817 = vmatpush1.bf16.msra.mxu0 %v715
    %818 = vmatprep.subr.bf16.mxu0 %v720
    %819 = vmatpush1.bf16.msra.mxu0 %v719
    %820 = vmatprep.subr.bf16.mxu0 %v724
    %821 = vmatpush1.bf16.msra.mxu0 %v723
    %822 = vmatprep.subr.bf16.mxu0 %v728
    %823 = vmatpush1.bf16.msra.mxu0 %v727
    %824 = vmatprep.subr.bf16.mxu0 %v732
    %825 = vmatpush1.bf16.msra.mxu0 %v731
    %826 = vmatprep.subr.bf16.mxu0 %v736
    %827 = vmatpush1.bf16.msra.mxu0 %v735
    %828 = vmatprep.subr.bf16.mxu0 %v740
    %829 = vmatpush1.bf16.msra.mxu0 %v739
    %830 = vmatprep.subr.bf16.mxu0 0
    %831 = vmatpush1.bf16.msra.mxu0 0
    %832 = vmatprep.subr.bf16.mxu0 0
    %833 = vmatpush1.bf16.msra.mxu0 0
    %834 = vmatprep.subr.bf16.mxu0 0
    %835 = vmatpush1.bf16.msra.mxu0 0
    %836 = vmatprep.subr.bf16.mxu0 0
    %837 = vmatpush1.bf16.msra.mxu0 0
    %838 = vmatprep.subr.bf16.mxu0 0
    %839 = vmatpush1.bf16.msra.mxu0 0
    %840 = vmatprep.subr.bf16.mxu0 0
    %841 = vmatpush1.bf16.msra.mxu0 0
    %842 = vmatprep.subr.bf16.mxu0 0
    %843 = vmatpush1.bf16.msra.mxu0 0
    %844 = vmatprep.subr.bf16.mxu0 0
    %845 = vmatpush1.bf16.msra.mxu0 0
    %846 = vmatprep.mubr.bf16.mxu0 0
    %847 = vmatmul.mubr.bf16.gmra.mrb[0].mxu0 %v612
    %v848 = vpop.f32.mrb[0].mxu0
    %v849 = vadd.f32 0.0, %v848
    %v850 = vpop.f32.mrb[0].mxu0
    %v851 = vadd.f32 0.0, %v850
    %v852 = vpop.f32.mrb[0].mxu0
    %v853 = vpop.f32.mrb[0].mxu0
    %854 = vdwg.mxu0
    %v855 = vadd.f32 %v499, %v808
    %v856 = vadd.f32 %v501, %v810
    %v857 = vadd.f32 %v572, %v849
    %v858 = vadd.f32 %v574, %v851
    %v859 = vxor.u32 %v855, 2147483648
    %v860 = vmul.f32 %v859, 1.442695
    %v861 = vpow.pop %v860
    %v862 = vadd.f32 %v861, 1.0
    %v863 = vrcp.pop %v862
    %v864 = vmul.f32 1.0, %v863
    %v865 = vxor.u32 %v856, 2147483648
    %v866 = vmul.f32 %v865, 1.442695
    %v867 = vpow.pop %v866
    %v868 = vadd.f32 %v867, 1.0
    %v869 = vrcp.pop %v868
    %v870 = vmul.f32 1.0, %v869
    %v871 = vtanh.pop %v857
    %v872 = vxor.u32 %v858, 2147483648
    %v873 = vmul.f32 %v872, 1.442695
    %v874 = vpow.pop %v873
    %v875 = vadd.f32 %v874, 1.0
    %v876 = vrcp.pop %v875
    %v877 = vmul.f32 1.0, %v876
    %v878 = vmul.f32 %v870, %v611
    %v879 = vmul.f32 %v864, %v871
    %v880 = vadd.f32 %v878, %v879
    %v881 = vtanh.pop %v880
    %v882 = vmul.f32 %v877, %v881
    %883 = vst [vmem:[#allocation2] sm:$0xff] %v882
    %v884 = vpack.c.bf16 %v882, %v882
    %885 = vmatprep.subr.bf16.mxu0 %v710
    %886 = vmatpush1.bf16.msra.mxu0 %v709
    %887 = vmatprep.subr.bf16.mxu0 %v714
    %888 = vmatpush1.bf16.msra.mxu0 %v713
    %889 = vmatprep.subr.bf16.mxu0 %v718
    %890 = vmatpush1.bf16.msra.mxu0 %v717
    %891 = vmatprep.subr.bf16.mxu0 %v722
    %892 = vmatpush1.bf16.msra.mxu0 %v721
    %893 = vmatprep.subr.bf16.mxu0 %v726
    %894 = vmatpush1.bf16.msra.mxu0 %v725
    %895 = vmatprep.subr.bf16.mxu0 %v730
    %896 = vmatpush1.bf16.msra.mxu0 %v729
    %897 = vmatprep.subr.bf16.mxu0 %v734
    %898 = vmatpush1.bf16.msra.mxu0 %v733
    %899 = vmatprep.subr.bf16.mxu0 %v738
    %900 = vmatpush1.bf16.msra.mxu0 %v737
    %901 = vmatprep.subr.bf16.mxu0 0
    %902 = vmatpush1.bf16.msra.mxu0 0
    %903 = vmatprep.subr.bf16.mxu0 0
    %904 = vmatpush1.bf16.msra.mxu0 0
    %905 = vmatprep.subr.bf16.mxu0 0
    %906 = vmatpush1.bf16.msra.mxu0 0
    %907 = vmatprep.subr.bf16.mxu0 0
    %908 = vmatpush1.bf16.msra.mxu0 0
    %909 = vmatprep.subr.bf16.mxu0 0
    %910 = vmatpush1.bf16.msra.mxu0 0
    %911 = vmatprep.subr.bf16.mxu0 0
    %912 = vmatpush1.bf16.msra.mxu0 0
    %913 = vmatprep.subr.bf16.mxu0 0
    %914 = vmatpush1.bf16.msra.mxu0 0
    %915 = vmatprep.subr.bf16.mxu0 0
    %916 = vmatpush1.bf16.msra.mxu0 0
    %917 = vmatprep.mubr.bf16.mxu0 0
    %918 = vmatmul.mubr.bf16.gmra.mrb[0].mxu0 %v884
    %v919 = vpop.f32.mrb[0].mxu0
    %v920 = vadd.f32 0.0, %v919
    %v921 = vpop.f32.mrb[0].mxu0
    %v922 = vadd.f32 0.0, %v921
    %v923 = vpop.f32.mrb[0].mxu0
    %v924 = vpop.f32.mrb[0].mxu0
    %925 = vdwg.mxu0
    %926 = vmatprep.subr.bf16.mxu0 %v712
    %927 = vmatpush1.bf16.msra.mxu0 %v711
    %928 = vmatprep.subr.bf16.mxu0 %v716
    %929 = vmatpush1.bf16.msra.mxu0 %v715
    %930 = vmatprep.subr.bf16.mxu0 %v720
    %931 = vmatpush1.bf16.msra.mxu0 %v719
    %932 = vmatprep.subr.bf16.mxu0 %v724
    %933 = vmatpush1.bf16.msra.mxu0 %v723
    %934 = vmatprep.subr.bf16.mxu0 %v728
    %935 = vmatpush1.bf16.msra.mxu0 %v727
    %936 = vmatprep.subr.bf16.mxu0 %v732
    %937 = vmatpush1.bf16.msra.mxu0 %v731
    %938 = vmatprep.subr.bf16.mxu0 %v736
    %939 = vmatpush1.bf16.msra.mxu0 %v735
    %940 = vmatprep.subr.bf16.mxu0 %v740
    %941 = vmatpush1.bf16.msra.mxu0 %v739
    %942 = vmatprep.subr.bf16.mxu0 0
    %943 = vmatpush1.bf16.msra.mxu0 0
    %944 = vmatprep.subr.bf16.mxu0 0
    %945 = vmatpush1.bf16.msra.mxu0 0
    %946 = vmatprep.subr.bf16.mxu0 0
    %947 = vmatpush1.bf16.msra.mxu0 0
    %948 = vmatprep.subr.bf16.mxu0 0
    %949 = vmatpush1.bf16.msra.mxu0 0
    %950 = vmatprep.subr.bf16.mxu0 0
    %951 = vmatpush1.bf16.msra.mxu0 0
    %952 = vmatprep.subr.bf16.mxu0 0
    %953 = vmatpush1.bf16.msra.mxu0 0
    %954 = vmatprep.subr.bf16.mxu0 0
    %955 = vmatpush1.bf16.msra.mxu0 0
    %956 = vmatprep.subr.bf16.mxu0 0
    %957 = vmatpush1.bf16.msra.mxu0 0
    %958 = vmatprep.mubr.bf16.mxu0 0
    %959 = vmatmul.mubr.bf16.gmra.mrb[0].mxu0 %v884
    %v960 = vpop.f32.mrb[0].mxu0
    %v961 = vadd.f32 0.0, %v960
    %v962 = vpop.f32.mrb[0].mxu0
    %v963 = vadd.f32 0.0, %v962
    %v964 = vpop.f32.mrb[0].mxu0
    %v965 = vpop.f32.mrb[0].mxu0
    %966 = vdwg.mxu0
    %v967 = vadd.f32 %v503, %v920
    %v968 = vadd.f32 %v505, %v922
    %v969 = vadd.f32 %v576, %v961
    %v970 = vadd.f32 %v578, %v963
    %v971 = vxor.u32 %v967, 2147483648
    %v972 = vmul.f32 %v971, 1.442695
    %v973 = vpow.pop %v972
    %v974 = vadd.f32 %v973, 1.0
    %v975 = vrcp.pop %v974
    %v976 = vmul.f32 1.0, %v975
    %v977 = vxor.u32 %v968, 2147483648
    %v978 = vmul.f32 %v977, 1.442695
    %v979 = vpow.pop %v978
    %v980 = vadd.f32 %v979, 1.0
    %v981 = vrcp.pop %v980
    %v982 = vmul.f32 1.0, %v981
    %v983 = vtanh.pop %v969
    %v984 = vxor.u32 %v970, 2147483648
    %v985 = vmul.f32 %v984, 1.442695
    %v986 = vpow.pop %v985
    %v987 = vadd.f32 %v986, 1.0
    %v988 = vrcp.pop %v987
    %v989 = vmul.f32 1.0, %v988
    %v990 = vmul.f32 %v982, %v880
    %v991 = vmul.f32 %v976, %v983
    %v992 = vadd.f32 %v990, %v991
    %v993 = vtanh.pop %v992
    %v994 = vmul.f32 %v989, %v993
    %995 = vst [vmem:[#allocation2 + $0x8] sm:$0xff] %v994
    %v996 = vpack.c.bf16 %v994, %v994
    %997 = vmatprep.subr.bf16.mxu0 %v710
    %998 = vmatpush1.bf16.msra.mxu0 %v709
    %999 = vmatprep.subr.bf16.mxu0 %v714
    %1000 = vmatpush1.bf16.msra.mxu0 %v713
    %1001 = vmatprep.subr.bf16.mxu0 %v718
    %1002 = vmatpush1.bf16.msra.mxu0 %v717
    %1003 = vmatprep.subr.bf16.mxu0 %v722
    %1004 = vmatpush1.bf16.msra.mxu0 %v721
    %1005 = vmatprep.subr.bf16.mxu0 %v726
    %1006 = vmatpush1.bf16.msra.mxu0 %v725
    %1007 = vmatprep.subr.bf16.mxu0 %v730
    %1008 = vmatpush1.bf16.msra.mxu0 %v729
    %1009 = vmatprep.subr.bf16.mxu0 %v734
    %1010 = vmatpush1.bf16.msra.mxu0 %v733
    %1011 = vmatprep.subr.bf16.mxu0 %v738
    %1012 = vmatpush1.bf16.msra.mxu0 %v737
    %1013 = vmatprep.subr.bf16.mxu0 0
    %1014 = vmatpush1.bf16.msra.mxu0 0
    %1015 = vmatprep.subr.bf16.mxu0 0
    %1016 = vmatpush1.bf16.msra.mxu0 0
    %1017 = vmatprep.subr.bf16.mxu0 0
    %1018 = vmatpush1.bf16.msra.mxu0 0
    %1019 = vmatprep.subr.bf16.mxu0 0
    %1020 = vmatpush1.bf16.msra.mxu0 0
    %1021 = vmatprep.subr.bf16.mxu0 0
    %1022 = vmatpush1.bf16.msra.mxu0 0
    %1023 = vmatprep.subr.bf16.mxu0 0
    %1024 = vmatpush1.bf16.msra.mxu0 0
    %1025 = vmatprep.subr.bf16.mxu0 0
    %1026 = vmatpush1.bf16.msra.mxu0 0
    %1027 = vmatprep.subr.bf16.mxu0 0
    %1028 = vmatpush1.bf16.msra.mxu0 0
    %1029 = vmatprep.mubr.bf16.mxu0 0
    %1030 = vmatmul.mubr.bf16.gmra.mrb[0].mxu0 %v996
    %v1031 = vpop.f32.mrb[0].mxu0
    %v1032 = vadd.f32 0.0, %v1031
    %v1033 = vpop.f32.mrb[0].mxu0
    %v1034 = vadd.f32 0.0, %v1033
    %v1035 = vpop.f32.mrb[0].mxu0
    %v1036 = vpop.f32.mrb[0].mxu0
    %1037 = vdwg.mxu0
    %1038 = vmatprep.subr.bf16.mxu0 %v712
    %1039 = vmatpush1.bf16.msra.mxu0 %v711
    %1040 = vmatprep.subr.bf16.mxu0 %v716
    %1041 = vmatpush1.bf16.msra.mxu0 %v715
    %1042 = vmatprep.subr.bf16.mxu0 %v720
    %1043 = vmatpush1.bf16.msra.mxu0 %v719
    %1044 = vmatprep.subr.bf16.mxu0 %v724
    %1045 = vmatpush1.bf16.msra.mxu0 %v723
    %1046 = vmatprep.subr.bf16.mxu0 %v728
    %1047 = vmatpush1.bf16.msra.mxu0 %v727
    %1048 = vmatprep.subr.bf16.mxu0 %v732
    %1049 = vmatpush1.bf16.msra.mxu0 %v731
    %1050 = vmatprep.subr.bf16.mxu0 %v736
    %1051 = vmatpush1.bf16.msra.mxu0 %v735
    %1052 = vmatprep.subr.bf16.mxu0 %v740
    %1053 = vmatpush1.bf16.msra.mxu0 %v739
    %1054 = vmatprep.subr.bf16.mxu0 0
    %1055 = vmatpush1.bf16.msra.mxu0 0
    %1056 = vmatprep.subr.bf16.mxu0 0
    %1057 = vmatpush1.bf16.msra.mxu0 0
    %1058 = vmatprep.subr.bf16.mxu0 0
    %1059 = vmatpush1.bf16.msra.mxu0 0
    %1060 = vmatprep.subr.bf16.mxu0 0
    %1061 = vmatpush1.bf16.msra.mxu0 0
    %1062 = vmatprep.subr.bf16.mxu0 0
    %1063 = vmatpush1.bf16.msra.mxu0 0
    %1064 = vmatprep.subr.bf16.mxu0 0
    %1065 = vmatpush1.bf16.msra.mxu0 0
    %1066 = vmatprep.subr.bf16.mxu0 0
    %1067 = vmatpush1.bf16.msra.mxu0 0
    %1068 = vmatprep.subr.bf16.mxu0 0
    %1069 = vmatpush1.bf16.msra.mxu0 0
    %1070 = vmatprep.mubr.bf16.mxu0 0
    %1071 = vmatmul.mubr.bf16.gmra.mrb[0].mxu0 %v996
    %v1072 = vpop.f32.mrb[0].mxu0
    %v1073 = vadd.f32 0.0, %v1072
    %v1074 = vpop.f32.mrb[0].mxu0
    %v1075 = vadd.f32 0.0, %v1074
    %v1076 = vpop.f32.mrb[0].mxu0
    %v1077 = vpop.f32.mrb[0].mxu0
    %1078 = vdwg.mxu0
    %v1079 = vadd.f32 %v509, %v1032
    %v1080 = vadd.f32 %v511, %v1034
    %v1081 = vadd.f32 %v582, %v1073
    %v1082 = vadd.f32 %v584, %v1075
    %v1083 = vxor.u32 %v1079, 2147483648
    %v1084 = vmul.f32 %v1083, 1.442695
    %v1085 = vpow.pop %v1084
    %v1086 = vadd.f32 %v1085, 1.0
    %v1087 = vrcp.pop %v1086
    %v1088 = vmul.f32 1.0, %v1087
    %v1089 = vxor.u32 %v1080, 2147483648
    %v1090 = vmul.f32 %v1089, 1.442695
    %v1091 = vpow.pop %v1090
    %v1092 = vadd.f32 %v1091, 1.0
    %v1093 = vrcp.pop %v1092
    %v1094 = vmul.f32 1.0, %v1093
    %v1095 = vtanh.pop %v1081
    %v1096 = vxor.u32 %v1082, 2147483648
    %v1097 = vmul.f32 %v1096, 1.442695
    %v1098 = vpow.pop %v1097
    %v1099 = vadd.f32 %v1098, 1.0
    %v1100 = vrcp.pop %v1099
    %v1101 = vmul.f32 1.0, %v1100
    %v1102 = vmul.f32 %v1094, %v992
    %v1103 = vmul.f32 %v1088, %v1095
    %v1104 = vadd.f32 %v1102, %v1103
    %v1105 = vtanh.pop %v1104
    %v1106 = vmul.f32 %v1101, %v1105
    %1107 = vst [vmem:[#allocation2 + $0x10] sm:$0xff] %v1106
    %v1108 = vpack.c.bf16 %v1106, %v1106
    %1109 = vmatprep.subr.bf16.mxu0 %v710
    %1110 = vmatpush1.bf16.msra.mxu0 %v709
    %1111 = vmatprep.subr.bf16.mxu0 %v714
    %1112 = vmatpush1.bf16.msra.mxu0 %v713
    %1113 = vmatprep.subr.bf16.mxu0 %v718
    %1114 = vmatpush1.bf16.msra.mxu0 %v717
    %1115 = vmatprep.subr.bf16.mxu0 %v722
    %1116 = vmatpush1.bf16.msra.mxu0 %v721
    %1117 = vmatprep.subr.bf16.mxu0 %v726
    %1118 = vmatpush1.bf16.msra.mxu0 %v725
    %1119 = vmatprep.subr.bf16.mxu0 %v730
    %1120 = vmatpush1.bf16.msra.mxu0 %v729
    %1121 = vmatprep.subr.bf16.mxu0 %v734
    %1122 = vmatpush1.bf16.msra.mxu0 %v733
    %1123 = vmatprep.subr.bf16.mxu0 %v738
    %1124 = vmatpush1.bf16.msra.mxu0 %v737
    %1125 = vmatprep.subr.bf16.mxu0 0
    %1126 = vmatpush1.bf16.msra.mxu0 0
    %1127 = vmatprep.subr.bf16.mxu0 0
    %1128 = vmatpush1.bf16.msra.mxu0 0
    %1129 = vmatprep.subr.bf16.mxu0 0
    %1130 = vmatpush1.bf16.msra.mxu0 0
    %1131 = vmatprep.subr.bf16.mxu0 0
    %1132 = vmatpush1.bf16.msra.mxu0 0
    %1133 = vmatprep.subr.bf16.mxu0 0
    %1134 = vmatpush1.bf16.msra.mxu0 0
    %1135 = vmatprep.subr.bf16.mxu0 0
    %1136 = vmatpush1.bf16.msra.mxu0 0
    %1137 = vmatprep.subr.bf16.mxu0 0
    %1138 = vmatpush1.bf16.msra.mxu0 0
    %1139 = vmatprep.subr.bf16.mxu0 0
    %1140 = vmatpush1.bf16.msra.mxu0 0
    %1141 = vmatprep.mubr.bf16.mxu0 0
    %1142 = vmatmul.mubr.bf16.gmra.mrb[0].mxu0 %v1108
    %v1143 = vpop.f32.mrb[0].mxu0
    %v1144 = vadd.f32 0.0, %v1143
    %v1145 = vpop.f32.mrb[0].mxu0
    %v1146 = vadd.f32 0.0, %v1145
    %v1147 = vpop.f32.mrb[0].mxu0
    %v1148 = vpop.f32.mrb[0].mxu0
    %1149 = vdwg.mxu0
    %1150 = vmatprep.subr.bf16.mxu0 %v712
    %1151 = vmatpush1.bf16.msra.mxu0 %v711
    %1152 = vmatprep.subr.bf16.mxu0 %v716
    %1153 = vmatpush1.bf16.msra.mxu0 %v715
    %1154 = vmatprep.subr.bf16.mxu0 %v720
    %1155 = vmatpush1.bf16.msra.mxu0 %v719
    %1156 = vmatprep.subr.bf16.mxu0 %v724
    %1157 = vmatpush1.bf16.msra.mxu0 %v723
    %1158 = vmatprep.subr.bf16.mxu0 %v728
    %1159 = vmatpush1.bf16.msra.mxu0 %v727
    %1160 = vmatprep.subr.bf16.mxu0 %v732
    %1161 = vmatpush1.bf16.msra.mxu0 %v731
    %1162 = vmatprep.subr.bf16.mxu0 %v736
    %1163 = vmatpush1.bf16.msra.mxu0 %v735
    %1164 = vmatprep.subr.bf16.mxu0 %v740
    %1165 = vmatpush1.bf16.msra.mxu0 %v739
    %1166 = vmatprep.subr.bf16.mxu0 0
    %1167 = vmatpush1.bf16.msra.mxu0 0
    %1168 = vmatprep.subr.bf16.mxu0 0
    %1169 = vmatpush1.bf16.msra.mxu0 0
    %1170 = vmatprep.subr.bf16.mxu0 0
    %1171 = vmatpush1.bf16.msra.mxu0 0
    %1172 = vmatprep.subr.bf16.mxu0 0
    %1173 = vmatpush1.bf16.msra.mxu0 0
    %1174 = vmatprep.subr.bf16.mxu0 0
    %1175 = vmatpush1.bf16.msra.mxu0 0
    %1176 = vmatprep.subr.bf16.mxu0 0
    %1177 = vmatpush1.bf16.msra.mxu0 0
    %1178 = vmatprep.subr.bf16.mxu0 0
    %1179 = vmatpush1.bf16.msra.mxu0 0
    %1180 = vmatprep.subr.bf16.mxu0 0
    %1181 = vmatpush1.bf16.msra.mxu0 0
    %1182 = vmatprep.mubr.bf16.mxu0 0
    %1183 = vmatmul.mubr.bf16.gmra.mrb[0].mxu0 %v1108
    %v1184 = vpop.f32.mrb[0].mxu0
    %v1185 = vadd.f32 0.0, %v1184
    %v1186 = vpop.f32.mrb[0].mxu0
    %v1187 = vadd.f32 0.0, %v1186
    %v1188 = vpop.f32.mrb[0].mxu0
    %v1189 = vpop.f32.mrb[0].mxu0
    %1190 = vdwg.mxu0
    %v1191 = vadd.f32 %v513, %v1144
    %v1192 = vadd.f32 %v515, %v1146
    %v1193 = vadd.f32 %v586, %v1185
    %v1194 = vadd.f32 %v588, %v1187
    %v1195 = vxor.u32 %v1191, 2147483648
    %v1196 = vmul.f32 %v1195, 1.442695
    %v1197 = vpow.pop %v1196
    %v1198 = vadd.f32 %v1197, 1.0
    %v1199 = vrcp.pop %v1198
    %v1200 = vmul.f32 1.0, %v1199
    %v1201 = vxor.u32 %v1192, 2147483648
    %v1202 = vmul.f32 %v1201, 1.442695
    %v1203 = vpow.pop %v1202
    %v1204 = vadd.f32 %v1203, 1.0
    %v1205 = vrcp.pop %v1204
    %v1206 = vmul.f32 1.0, %v1205
    %v1207 = vtanh.pop %v1193
    %v1208 = vxor.u32 %v1194, 2147483648
    %v1209 = vmul.f32 %v1208, 1.442695
    %v1210 = vpow.pop %v1209
    %v1211 = vadd.f32 %v1210, 1.0
    %v1212 = vrcp.pop %v1211
    %v1213 = vmul.f32 1.0, %v1212
    %v1214 = vmul.f32 %v1206, %v1104
    %v1215 = vmul.f32 %v1200, %v1207
    %v1216 = vadd.f32 %v1214, %v1215
    %v1217 = vtanh.pop %v1216
    %v1218 = vmul.f32 %v1213, %v1217
    %1219 = vst [vmem:[#allocation2 + $0x18] sm:$0xff] %v1218
    %v1220 = vpack.c.bf16 %v1218, %v1218
    %1221 = vmatprep.subr.bf16.mxu0 %v710
    %1222 = vmatpush1.bf16.msra.mxu0 %v709
    %1223 = vmatprep.subr.bf16.mxu0 %v714
    %1224 = vmatpush1.bf16.msra.mxu0 %v713
    %1225 = vmatprep.subr.bf16.mxu0 %v718
    %1226 = vmatpush1.bf16.msra.mxu0 %v717
    %1227 = vmatprep.subr.bf16.mxu0 %v722
    %1228 = vmatpush1.bf16.msra.mxu0 %v721
    %1229 = vmatprep.subr.bf16.mxu0 %v726
    %1230 = vmatpush1.bf16.msra.mxu0 %v725
    %1231 = vmatprep.subr.bf16.mxu0 %v730
    %1232 = vmatpush1.bf16.msra.mxu0 %v729
    %1233 = vmatprep.subr.bf16.mxu0 %v734
    %1234 = vmatpush1.bf16.msra.mxu0 %v733
    %1235 = vmatprep.subr.bf16.mxu0 %v738
    %1236 = vmatpush1.bf16.msra.mxu0 %v737
    %1237 = vmatprep.subr.bf16.mxu0 0
    %1238 = vmatpush1.bf16.msra.mxu0 0
    %1239 = vmatprep.subr.bf16.mxu0 0
    %1240 = vmatpush1.bf16.msra.mxu0 0
    %1241 = vmatprep.subr.bf16.mxu0 0
    %1242 = vmatpush1.bf16.msra.mxu0 0
    %1243 = vmatprep.subr.bf16.mxu0 0
    %1244 = vmatpush1.bf16.msra.mxu0 0
    %1245 = vmatprep.subr.bf16.mxu0 0
    %1246 = vmatpush1.bf16.msra.mxu0 0
    %1247 = vmatprep.subr.bf16.mxu0 0
    %1248 = vmatpush1.bf16.msra.mxu0 0
    %1249 = vmatprep.subr.bf16.mxu0 0
    %1250 = vmatpush1.bf16.msra.mxu0 0
    %1251 = vmatprep.subr.bf16.mxu0 0
    %1252 = vmatpush1.bf16.msra.mxu0 0
    %1253 = vmatprep.mubr.bf16.mxu0 0
    %1254 = vmatmul.mubr.bf16.gmra.mrb[0].mxu0 %v1220
    %v1255 = vpop.f32.mrb[0].mxu0
    %v1256 = vadd.f32 0.0, %v1255
    %v1257 = vpop.f32.mrb[0].mxu0
    %v1258 = vadd.f32 0.0, %v1257
    %v1259 = vpop.f32.mrb[0].mxu0
    %v1260 = vpop.f32.mrb[0].mxu0
    %1261 = vdwg.mxu0
    %1262 = vmatprep.subr.bf16.mxu0 %v712
    %1263 = vmatpush1.bf16.msra.mxu0 %v711
    %1264 = vmatprep.subr.bf16.mxu0 %v716
    %1265 = vmatpush1.bf16.msra.mxu0 %v715
    %1266 = vmatprep.subr.bf16.mxu0 %v720
    %1267 = vmatpush1.bf16.msra.mxu0 %v719
    %1268 = vmatprep.subr.bf16.mxu0 %v724
    %1269 = vmatpush1.bf16.msra.mxu0 %v723
    %1270 = vmatprep.subr.bf16.mxu0 %v728
    %1271 = vmatpush1.bf16.msra.mxu0 %v727
    %1272 = vmatprep.subr.bf16.mxu0 %v732
    %1273 = vmatpush1.bf16.msra.mxu0 %v731
    %1274 = vmatprep.subr.bf16.mxu0 %v736
    %1275 = vmatpush1.bf16.msra.mxu0 %v735
    %1276 = vmatprep.subr.bf16.mxu0 %v740
    %1277 = vmatpush1.bf16.msra.mxu0 %v739
    %1278 = vmatprep.subr.bf16.mxu0 0
    %1279 = vmatpush1.bf16.msra.mxu0 0
    %1280 = vmatprep.subr.bf16.mxu0 0
    %1281 = vmatpush1.bf16.msra.mxu0 0
    %1282 = vmatprep.subr.bf16.mxu0 0
    %1283 = vmatpush1.bf16.msra.mxu0 0
    %1284 = vmatprep.subr.bf16.mxu0 0
    %1285 = vmatpush1.bf16.msra.mxu0 0
    %1286 = vmatprep.subr.bf16.mxu0 0
    %1287 = vmatpush1.bf16.msra.mxu0 0
    %1288 = vmatprep.subr.bf16.mxu0 0
    %1289 = vmatpush1.bf16.msra.mxu0 0
    %1290 = vmatprep.subr.bf16.mxu0 0
    %1291 = vmatpush1.bf16.msra.mxu0 0
    %1292 = vmatprep.subr.bf16.mxu0 0
    %1293 = vmatpush1.bf16.msra.mxu0 0
    %1294 = vmatprep.mubr.bf16.mxu0 0
    %1295 = vmatmul.mubr.bf16.gmra.mrb[0].mxu0 %v1220
    %v1296 = vpop.f32.mrb[0].mxu0
    %v1297 = vadd.f32 0.0, %v1296
    %v1298 = vpop.f32.mrb[0].mxu0
    %v1299 = vadd.f32 0.0, %v1298
    %v1300 = vpop.f32.mrb[0].mxu0
    %v1301 = vpop.f32.mrb[0].mxu0
    %1302 = vdwg.mxu0
    %v1303 = vadd.f32 %v519, %v1256
    %v1304 = vadd.f32 %v521, %v1258
    %v1305 = vadd.f32 %v592, %v1297
    %v1306 = vadd.f32 %v594, %v1299
    %v1307 = vxor.u32 %v1303, 2147483648
    %v1308 = vmul.f32 %v1307, 1.442695
    %v1309 = vpow.pop %v1308
    %v1310 = vadd.f32 %v1309, 1.0
    %v1311 = vrcp.pop %v1310
    %v1312 = vmul.f32 1.0, %v1311
    %v1313 = vxor.u32 %v1304, 2147483648
    %v1314 = vmul.f32 %v1313, 1.442695
    %v1315 = vpow.pop %v1314
    %v1316 = vadd.f32 %v1315, 1.0
    %v1317 = vrcp.pop %v1316
    %v1318 = vmul.f32 1.0, %v1317
    %v1319 = vtanh.pop %v1305
    %v1320 = vxor.u32 %v1306, 2147483648
    %v1321 = vmul.f32 %v1320, 1.442695
    %v1322 = vpow.pop %v1321
    %v1323 = vadd.f32 %v1322, 1.0
    %v1324 = vrcp.pop %v1323
    %v1325 = vmul.f32 1.0, %v1324
    %v1326 = vmul.f32 %v1318, %v1216
    %v1327 = vmul.f32 %v1312, %v1319
    %v1328 = vadd.f32 %v1326, %v1327
    %v1329 = vtanh.pop %v1328
    %v1330 = vmul.f32 %v1325, %v1329
    %1331 = vst [vmem:[#allocation2 + $0x20] sm:$0xff] %v1330
    %v1332 = vpack.c.bf16 %v1330, %v1330
    %1333 = vmatprep.subr.bf16.mxu0 %v710
    %1334 = vmatpush1.bf16.msra.mxu0 %v709
    %1335 = vmatprep.subr.bf16.mxu0 %v714
    %1336 = vmatpush1.bf16.msra.mxu0 %v713
    %1337 = vmatprep.subr.bf16.mxu0 %v718
    %1338 = vmatpush1.bf16.msra.mxu0 %v717
    %1339 = vmatprep.subr.bf16.mxu0 %v722
    %1340 = vmatpush1.bf16.msra.mxu0 %v721
    %1341 = vmatprep.subr.bf16.mxu0 %v726
    %1342 = vmatpush1.bf16.msra.mxu0 %v725
    %1343 = vmatprep.subr.bf16.mxu0 %v730
    %1344 = vmatpush1.bf16.msra.mxu0 %v729
    %1345 = vmatprep.subr.bf16.mxu0 %v734
    %1346 = vmatpush1.bf16.msra.mxu0 %v733
    %1347 = vmatprep.subr.bf16.mxu0 %v738
    %1348 = vmatpush1.bf16.msra.mxu0 %v737
    %1349 = vmatprep.subr.bf16.mxu0 0
    %1350 = vmatpush1.bf16.msra.mxu0 0
    %1351 = vmatprep.subr.bf16.mxu0 0
    %1352 = vmatpush1.bf16.msra.mxu0 0
    %1353 = vmatprep.subr.bf16.mxu0 0
    %1354 = vmatpush1.bf16.msra.mxu0 0
    %1355 = vmatprep.subr.bf16.mxu0 0
    %1356 = vmatpush1.bf16.msra.mxu0 0
    %1357 = vmatprep.subr.bf16.mxu0 0
    %1358 = vmatpush1.bf16.msra.mxu0 0
    %1359 = vmatprep.subr.bf16.mxu0 0
    %1360 = vmatpush1.bf16.msra.mxu0 0
    %1361 = vmatprep.subr.bf16.mxu0 0
    %1362 = vmatpush1.bf16.msra.mxu0 0
    %1363 = vmatprep.subr.bf16.mxu0 0
    %1364 = vmatpush1.bf16.msra.mxu0 0
    %1365 = vmatprep.mubr.bf16.mxu0 0
    %1366 = vmatmul.mubr.bf16.gmra.mrb[0].mxu0 %v1332
    %v1367 = vpop.f32.mrb[0].mxu0
    %v1368 = vadd.f32 0.0, %v1367
    %v1369 = vpop.f32.mrb[0].mxu0
    %v1370 = vadd.f32 0.0, %v1369
    %v1371 = vpop.f32.mrb[0].mxu0
    %v1372 = vpop.f32.mrb[0].mxu0
    %1373 = vdwg.mxu0
    %1374 = vmatprep.subr.bf16.mxu0 %v712
    %1375 = vmatpush1.bf16.msra.mxu0 %v711
    %1376 = vmatprep.subr.bf16.mxu0 %v716
    %1377 = vmatpush1.bf16.msra.mxu0 %v715
    %1378 = vmatprep.subr.bf16.mxu0 %v720
    %1379 = vmatpush1.bf16.msra.mxu0 %v719
    %1380 = vmatprep.subr.bf16.mxu0 %v724
    %1381 = vmatpush1.bf16.msra.mxu0 %v723
    %1382 = vmatprep.subr.bf16.mxu0 %v728
    %1383 = vmatpush1.bf16.msra.mxu0 %v727
    %1384 = vmatprep.subr.bf16.mxu0 %v732
    %1385 = vmatpush1.bf16.msra.mxu0 %v731
    %1386 = vmatprep.subr.bf16.mxu0 %v736
    %1387 = vmatpush1.bf16.msra.mxu0 %v735
    %1388 = vmatprep.subr.bf16.mxu0 %v740
    %1389 = vmatpush1.bf16.msra.mxu0 %v739
    %1390 = vmatprep.subr.bf16.mxu0 0
    %1391 = vmatpush1.bf16.msra.mxu0 0
    %1392 = vmatprep.subr.bf16.mxu0 0
    %1393 = vmatpush1.bf16.msra.mxu0 0
    %1394 = vmatprep.subr.bf16.mxu0 0
    %1395 = vmatpush1.bf16.msra.mxu0 0
    %1396 = vmatprep.subr.bf16.mxu0 0
    %1397 = vmatpush1.bf16.msra.mxu0 0
    %1398 = vmatprep.subr.bf16.mxu0 0
    %1399 = vmatpush1.bf16.msra.mxu0 0
    %1400 = vmatprep.subr.bf16.mxu0 0
    %1401 = vmatpush1.bf16.msra.mxu0 0
    %1402 = vmatprep.subr.bf16.mxu0 0
    %1403 = vmatpush1.bf16.msra.mxu0 0
    %1404 = vmatprep.subr.bf16.mxu0 0
    %1405 = vmatpush1.bf16.msra.mxu0 0
    %1406 = vmatprep.mubr.bf16.mxu0 0
    %1407 = vmatmul.mubr.bf16.gmra.mrb[0].mxu0 %v1332
    %v1408 = vpop.f32.mrb[0].mxu0
    %v1409 = vadd.f32 0.0, %v1408
    %v1410 = vpop.f32.mrb[0].mxu0
    %v1411 = vadd.f32 0.0, %v1410
    %v1412 = vpop.f32.mrb[0].mxu0
    %v1413 = vpop.f32.mrb[0].mxu0
    %1414 = vdwg.mxu0
    %v1415 = vadd.f32 %v523, %v1368
    %v1416 = vadd.f32 %v525, %v1370
    %v1417 = vadd.f32 %v596, %v1409
    %v1418 = vadd.f32 %v598, %v1411
    %v1419 = vxor.u32 %v1415, 2147483648
    %v1420 = vmul.f32 %v1419, 1.442695
    %v1421 = vpow.pop %v1420
    %v1422 = vadd.f32 %v1421, 1.0
    %v1423 = vrcp.pop %v1422
    %v1424 = vmul.f32 1.0, %v1423
    %v1425 = vxor.u32 %v1416, 2147483648
    %v1426 = vmul.f32 %v1425, 1.442695
    %v1427 = vpow.pop %v1426
    %v1428 = vadd.f32 %v1427, 1.0
    %v1429 = vrcp.pop %v1428
    %v1430 = vmul.f32 1.0, %v1429
    %v1431 = vtanh.pop %v1417
    %v1432 = vxor.u32 %v1418, 2147483648
    %v1433 = vmul.f32 %v1432, 1.442695
    %v1434 = vpow.pop %v1433
    %v1435 = vadd.f32 %v1434, 1.0
    %v1436 = vrcp.pop %v1435
    %v1437 = vmul.f32 1.0, %v1436
    %v1438 = vmul.f32 %v1430, %v1328
    %v1439 = vmul.f32 %v1424, %v1431
    %v1440 = vadd.f32 %v1438, %v1439
    %v1441 = vtanh.pop %v1440
    %v1442 = vmul.f32 %v1437, %v1441
    %1443 = vst [vmem:[#allocation2 + $0x28] sm:$0xff] %v1442
    %v1444 = vpack.c.bf16 %v1442, %v1442
    %1445 = vmatprep.subr.bf16.mxu0 %v710
    %1446 = vmatpush1.bf16.msra.mxu0 %v709
    %1447 = vmatprep.subr.bf16.mxu0 %v714
    %1448 = vmatpush1.bf16.msra.mxu0 %v713
    %1449 = vmatprep.subr.bf16.mxu0 %v718
    %1450 = vmatpush1.bf16.msra.mxu0 %v717
    %1451 = vmatprep.subr.bf16.mxu0 %v722
    %1452 = vmatpush1.bf16.msra.mxu0 %v721
    %1453 = vmatprep.subr.bf16.mxu0 %v726
    %1454 = vmatpush1.bf16.msra.mxu0 %v725
    %1455 = vmatprep.subr.bf16.mxu0 %v730
    %1456 = vmatpush1.bf16.msra.mxu0 %v729
    %1457 = vmatprep.subr.bf16.mxu0 %v734
    %1458 = vmatpush1.bf16.msra.mxu0 %v733
    %1459 = vmatprep.subr.bf16.mxu0 %v738
    %1460 = vmatpush1.bf16.msra.mxu0 %v737
    %1461 = vmatprep.subr.bf16.mxu0 0
    %1462 = vmatpush1.bf16.msra.mxu0 0
    %1463 = vmatprep.subr.bf16.mxu0 0
    %1464 = vmatpush1.bf16.msra.mxu0 0
    %1465 = vmatprep.subr.bf16.mxu0 0
    %1466 = vmatpush1.bf16.msra.mxu0 0
    %1467 = vmatprep.subr.bf16.mxu0 0
    %1468 = vmatpush1.bf16.msra.mxu0 0
    %1469 = vmatprep.subr.bf16.mxu0 0
    %1470 = vmatpush1.bf16.msra.mxu0 0
    %1471 = vmatprep.subr.bf16.mxu0 0
    %1472 = vmatpush1.bf16.msra.mxu0 0
    %1473 = vmatprep.subr.bf16.mxu0 0
    %1474 = vmatpush1.bf16.msra.mxu0 0
    %1475 = vmatprep.subr.bf16.mxu0 0
    %1476 = vmatpush1.bf16.msra.mxu0 0
    %1477 = vmatprep.mubr.bf16.mxu0 0
    %1478 = vmatmul.mubr.bf16.gmra.mrb[0].mxu0 %v1444
    %v1479 = vpop.f32.mrb[0].mxu0
    %v1480 = vadd.f32 0.0, %v1479
    %v1481 = vpop.f32.mrb[0].mxu0
    %v1482 = vadd.f32 0.0, %v1481
    %v1483 = vpop.f32.mrb[0].mxu0
    %v1484 = vpop.f32.mrb[0].mxu0
    %1485 = vdwg.mxu0
    %1486 = vmatprep.subr.bf16.mxu0 %v712
    %1487 = vmatpush1.bf16.msra.mxu0 %v711
    %1488 = vmatprep.subr.bf16.mxu0 %v716
    %1489 = vmatpush1.bf16.msra.mxu0 %v715
    %1490 = vmatprep.subr.bf16.mxu0 %v720
    %1491 = vmatpush1.bf16.msra.mxu0 %v719
    %1492 = vmatprep.subr.bf16.mxu0 %v724
    %1493 = vmatpush1.bf16.msra.mxu0 %v723
    %1494 = vmatprep.subr.bf16.mxu0 %v728
    %1495 = vmatpush1.bf16.msra.mxu0 %v727
    %1496 = vmatprep.subr.bf16.mxu0 %v732
    %1497 = vmatpush1.bf16.msra.mxu0 %v731
    %1498 = vmatprep.subr.bf16.mxu0 %v736
    %1499 = vmatpush1.bf16.msra.mxu0 %v735
    %1500 = vmatprep.subr.bf16.mxu0 %v740
    %1501 = vmatpush1.bf16.msra.mxu0 %v739
    %1502 = vmatprep.subr.bf16.mxu0 0
    %1503 = vmatpush1.bf16.msra.mxu0 0
    %1504 = vmatprep.subr.bf16.mxu0 0
    %1505 = vmatpush1.bf16.msra.mxu0 0
    %1506 = vmatprep.subr.bf16.mxu0 0
    %1507 = vmatpush1.bf16.msra.mxu0 0
    %1508 = vmatprep.subr.bf16.mxu0 0
    %1509 = vmatpush1.bf16.msra.mxu0 0
    %1510 = vmatprep.subr.bf16.mxu0 0
    %1511 = vmatpush1.bf16.msra.mxu0 0
    %1512 = vmatprep.subr.bf16.mxu0 0
    %1513 = vmatpush1.bf16.msra.mxu0 0
    %1514 = vmatprep.subr.bf16.mxu0 0
    %1515 = vmatpush1.bf16.msra.mxu0 0
    %1516 = vmatprep.subr.bf16.mxu0 0
    %1517 = vmatpush1.bf16.msra.mxu0 0
    %1518 = vmatprep.mubr.bf16.mxu0 0
    %1519 = vmatmul.mubr.bf16.gmra.mrb[0].mxu0 %v1444
    %v1520 = vpop.f32.mrb[0].mxu0
    %v1521 = vadd.f32 0.0, %v1520
    %v1522 = vpop.f32.mrb[0].mxu0
    %v1523 = vadd.f32 0.0, %v1522
    %v1524 = vpop.f32.mrb[0].mxu0
    %v1525 = vpop.f32.mrb[0].mxu0
    %1526 = vdwg.mxu0
    %v1527 = vadd.f32 %v529, %v1480
    %v1528 = vadd.f32 %v531, %v1482
    %v1529 = vadd.f32 %v602, %v1521
    %v1530 = vadd.f32 %v604, %v1523
    %v1531 = vxor.u32 %v1527, 2147483648
    %v1532 = vmul.f32 %v1531, 1.442695
    %v1533 = vpow.pop %v1532
    %v1534 = vadd.f32 %v1533, 1.0
    %v1535 = vrcp.pop %v1534
    %v1536 = vmul.f32 1.0, %v1535
    %v1537 = vxor.u32 %v1528, 2147483648
    %v1538 = vmul.f32 %v1537, 1.442695
    %v1539 = vpow.pop %v1538
    %v1540 = vadd.f32 %v1539, 1.0
    %v1541 = vrcp.pop %v1540
    %v1542 = vmul.f32 1.0, %v1541
    %v1543 = vtanh.pop %v1529
    %v1544 = vxor.u32 %v1530, 2147483648
    %v1545 = vmul.f32 %v1544, 1.442695
    %v1546 = vpow.pop %v1545
    %v1547 = vadd.f32 %v1546, 1.0
    %v1548 = vrcp.pop %v1547
    %v1549 = vmul.f32 1.0, %v1548
    %v1550 = vmul.f32 %v1542, %v1440
    %v1551 = vmul.f32 %v1536, %v1543
    %v1552 = vadd.f32 %v1550, %v1551
    %v1553 = vtanh.pop %v1552
    %v1554 = vmul.f32 %v1549, %v1553
    %1555 = vst [vmem:[#allocation2 + $0x30] sm:$0xff] %v1554
    %v1556 = vpack.c.bf16 %v1554, %v1554
    %1557 = vmatprep.subr.bf16.mxu0 %v710
    %1558 = vmatpush1.bf16.msra.mxu0 %v709
    %1559 = vmatprep.subr.bf16.mxu0 %v714
    %1560 = vmatpush1.bf16.msra.mxu0 %v713
    %1561 = vmatprep.subr.bf16.mxu0 %v718
    %1562 = vmatpush1.bf16.msra.mxu0 %v717
    %1563 = vmatprep.subr.bf16.mxu0 %v722
    %1564 = vmatpush1.bf16.msra.mxu0 %v721
    %1565 = vmatprep.subr.bf16.mxu0 %v726
    %1566 = vmatpush1.bf16.msra.mxu0 %v725
    %1567 = vmatprep.subr.bf16.mxu0 %v730
    %1568 = vmatpush1.bf16.msra.mxu0 %v729
    %1569 = vmatprep.subr.bf16.mxu0 %v734
    %1570 = vmatpush1.bf16.msra.mxu0 %v733
    %1571 = vmatprep.subr.bf16.mxu0 %v738
    %1572 = vmatpush1.bf16.msra.mxu0 %v737
    %1573 = vmatprep.subr.bf16.mxu0 0
    %1574 = vmatpush1.bf16.msra.mxu0 0
    %1575 = vmatprep.subr.bf16.mxu0 0
    %1576 = vmatpush1.bf16.msra.mxu0 0
    %1577 = vmatprep.subr.bf16.mxu0 0
    %1578 = vmatpush1.bf16.msra.mxu0 0
    %1579 = vmatprep.subr.bf16.mxu0 0
    %1580 = vmatpush1.bf16.msra.mxu0 0
    %1581 = vmatprep.subr.bf16.mxu0 0
    %1582 = vmatpush1.bf16.msra.mxu0 0
    %1583 = vmatprep.subr.bf16.mxu0 0
    %1584 = vmatpush1.bf16.msra.mxu0 0
    %1585 = vmatprep.subr.bf16.mxu0 0
    %1586 = vmatpush1.bf16.msra.mxu0 0
    %1587 = vmatprep.subr.bf16.mxu0 0
    %1588 = vmatpush1.bf16.msra.mxu0 0
    %1589 = vmatprep.mubr.bf16.mxu0 0
    %1590 = vmatmul.mubr.bf16.gmra.mrb[0].mxu0 %v1556
    %v1591 = vpop.f32.mrb[0].mxu0
    %v1592 = vadd.f32 0.0, %v1591
    %v1593 = vpop.f32.mrb[0].mxu0
    %v1594 = vadd.f32 0.0, %v1593
    %v1595 = vpop.f32.mrb[0].mxu0
    %v1596 = vpop.f32.mrb[0].mxu0
    %1597 = vdwg.mxu0
    %1598 = vmatprep.subr.bf16.mxu0 %v712
    %1599 = vmatpush1.bf16.msra.mxu0 %v711
    %1600 = vmatprep.subr.bf16.mxu0 %v716
    %1601 = vmatpush1.bf16.msra.mxu0 %v715
    %1602 = vmatprep.subr.bf16.mxu0 %v720
    %1603 = vmatpush1.bf16.msra.mxu0 %v719
    %1604 = vmatprep.subr.bf16.mxu0 %v724
    %1605 = vmatpush1.bf16.msra.mxu0 %v723
    %1606 = vmatprep.subr.bf16.mxu0 %v728
    %1607 = vmatpush1.bf16.msra.mxu0 %v727
    %1608 = vmatprep.subr.bf16.mxu0 %v732
    %1609 = vmatpush1.bf16.msra.mxu0 %v731
    %1610 = vmatprep.subr.bf16.mxu0 %v736
    %1611 = vmatpush1.bf16.msra.mxu0 %v735
    %1612 = vmatprep.subr.bf16.mxu0 %v740
    %1613 = vmatpush1.bf16.msra.mxu0 %v739
    %1614 = vmatprep.subr.bf16.mxu0 0
    %1615 = vmatpush1.bf16.msra.mxu0 0
    %1616 = vmatprep.subr.bf16.mxu0 0
    %1617 = vmatpush1.bf16.msra.mxu0 0
    %1618 = vmatprep.subr.bf16.mxu0 0
    %1619 = vmatpush1.bf16.msra.mxu0 0
    %1620 = vmatprep.subr.bf16.mxu0 0
    %1621 = vmatpush1.bf16.msra.mxu0 0
    %1622 = vmatprep.subr.bf16.mxu0 0
    %1623 = vmatpush1.bf16.msra.mxu0 0
    %1624 = vmatprep.subr.bf16.mxu0 0
    %1625 = vmatpush1.bf16.msra.mxu0 0
    %1626 = vmatprep.subr.bf16.mxu0 0
    %1627 = vmatpush1.bf16.msra.mxu0 0
    %1628 = vmatprep.subr.bf16.mxu0 0
    %1629 = vmatpush1.bf16.msra.mxu0 0
    %1630 = vmatprep.mubr.bf16.mxu0 0
    %1631 = vmatmul.mubr.bf16.gmra.mrb[0].mxu0 %v1556
    %v1632 = vpop.f32.mrb[0].mxu0
    %v1633 = vadd.f32 0.0, %v1632
    %v1634 = vpop.f32.mrb[0].mxu0
    %v1635 = vadd.f32 0.0, %v1634
    %v1636 = vpop.f32.mrb[0].mxu0
    %v1637 = vpop.f32.mrb[0].mxu0
    %1638 = vdwg.mxu0
    %v1639 = vadd.f32 %v533, %v1592
    %v1640 = vadd.f32 %v535, %v1594
    %v1641 = vadd.f32 %v606, %v1633
    %v1642 = vadd.f32 %v608, %v1635
    %v1643 = vxor.u32 %v1639, 2147483648
    %v1644 = vmul.f32 %v1643, 1.442695
    %v1645 = vpow.pop %v1644
    %v1646 = vadd.f32 %v1645, 1.0
    %v1647 = vrcp.pop %v1646
    %v1648 = vmul.f32 1.0, %v1647
    %v1649 = vxor.u32 %v1640, 2147483648
    %v1650 = vmul.f32 %v1649, 1.442695
    %v1651 = vpow.pop %v1650
    %v1652 = vadd.f32 %v1651, 1.0
    %v1653 = vrcp.pop %v1652
    %v1654 = vmul.f32 1.0, %v1653
    %v1655 = vtanh.pop %v1641
    %v1656 = vxor.u32 %v1642, 2147483648
    %v1657 = vmul.f32 %v1656, 1.442695
    %v1658 = vpow.pop %v1657
    %v1659 = vadd.f32 %v1658, 1.0
    %v1660 = vrcp.pop %v1659
    %v1661 = vmul.f32 1.0, %v1660
    %v1662 = vmul.f32 %v1654, %v1552
    %v1663 = vmul.f32 %v1648, %v1655
    %v1664 = vadd.f32 %v1662, %v1663
    %v1665 = vtanh.pop %v1664
    %v1666 = vmul.f32 %v1661, %v1665
    %1667 = vst [vmem:[#allocation2 + $0x38] sm:$0xff] %v1666
    %v1668 = vld [vmem:[#allocation2] sm:$0xff]
    %v1669 = vld [vmem:[#allocation2 + $0x8] sm:$0xff]
    %v1670 = vld [vmem:[#allocation2 + $0x10] sm:$0xff]
    %v1671 = vld [vmem:[#allocation2 + $0x18] sm:$0xff]
    %v1672 = vld [vmem:[#allocation2 + $0x20] sm:$0xff]
    %v1673 = vld [vmem:[#allocation2 + $0x28] sm:$0xff]
    %v1674 = vld [vmem:[#allocation2 + $0x30] sm:$0xff]
    %v1675 = vld [vmem:[#allocation2 + $0x38] sm:$0xff]
    %v1676 = vadd.f32 %v198, %v1668
    %v1677 = vadd.f32 %v199, %v1669
    %v1678 = vadd.f32 %v200, %v1670
    %v1679 = vadd.f32 %v201, %v1671
    %v1680 = vadd.f32 %v202, %v1672
    %v1681 = vadd.f32 %v203, %v1673
    %v1682 = vadd.f32 %v204, %v1674
    %v1683 = vadd.f32 %v205, %v1675
    %v1684 = vmul.f32 %v1676, 0.70710677
    %v1685 = vmul.f32 %v1677, 0.70710677
    %v1686 = vmul.f32 %v1678, 0.70710677
    %v1687 = vmul.f32 %v1679, 0.70710677
    %v1688 = vmul.f32 %v1680, 0.70710677
    %v1689 = vmul.f32 %v1681, 0.70710677
    %v1690 = vmul.f32 %v1682, 0.70710677
    %v1691 = vmul.f32 %v1683, 0.70710677
    %v1692 = vcombine.low %v1684, %v1686
    %v1693 = vcombine.high %v1684, %v1686
    %v1695 = vunpack.c.l.s4 1983009808
    %v1696 = vunpack.c.0.s8 %v1695
    %v1697 = vlaneseq
    %v1698 = vshrl.u32 %v1697, 7
    %v1699 = vsub.s32 %v1696, %v1698
    %v1700 = vrot.slane %v1692, %v1699
    %v1702 = vunpack.c.l.s4 1983009808
    %v1703 = vunpack.c.0.s8 %v1702
    %v1704 = vlaneseq
    %v1705 = vshrl.u32 %v1704, 7
    %v1706 = vsub.s32 %v1703, %v1705
    %v1707 = vrot.slane %v1693, %v1706
    %v1708 = vcombine.low %v1685, %v1687
    %v1709 = vcombine.high %v1685, %v1687
    %v1711 = vunpack.c.l.s4 1983009808
    %v1712 = vunpack.c.0.s8 %v1711
    %v1713 = vlaneseq
    %v1714 = vshrl.u32 %v1713, 7
    %v1715 = vsub.s32 %v1712, %v1714
    %v1716 = vrot.slane %v1708, %v1715
    %v1718 = vunpack.c.l.s4 1983009808
    %v1719 = vunpack.c.0.s8 %v1718
    %v1720 = vlaneseq
    %v1721 = vshrl.u32 %v1720, 7
    %v1722 = vsub.s32 %v1719, %v1721
    %v1723 = vrot.slane %v1709, %v1722
    %v1724 = vcombine.low %v1688, %v1690
    %v1725 = vcombine.high %v1688, %v1690
    %v1727 = vunpack.c.l.s4 1983009808
    %v1728 = vunpack.c.0.s8 %v1727
    %v1729 = vlaneseq
    %v1730 = vshrl.u32 %v1729, 7
    %v1731 = vsub.s32 %v1728, %v1730
    %v1732 = vrot.slane %v1724, %v1731
    %v1734 = vunpack.c.l.s4 1983009808
    %v1735 = vunpack.c.0.s8 %v1734
    %v1736 = vlaneseq
    %v1737 = vshrl.u32 %v1736, 7
    %v1738 = vsub.s32 %v1735, %v1737
    %v1739 = vrot.slane %v1725, %v1738
    %v1740 = vcombine.low %v1689, %v1691
    %v1741 = vcombine.high %v1689, %v1691
    %v1743 = vunpack.c.l.s4 1983009808
    %v1744 = vunpack.c.0.s8 %v1743
    %v1745 = vlaneseq
    %v1746 = vshrl.u32 %v1745, 7
    %v1747 = vsub.s32 %v1744, %v1746
    %v1748 = vrot.slane %v1740, %v1747
    %v1750 = vunpack.c.l.s4 1983009808
    %v1751 = vunpack.c.0.s8 %v1750
    %v1752 = vlaneseq
    %v1753 = vshrl.u32 %v1752, 7
    %v1754 = vsub.s32 %v1751, %v1753
    %v1755 = vrot.slane %v1741, %v1754
    %v1756 = vcombine.low %v1700, %v1716
    %v1757 = vcombine.high %v1700, %v1716
    %v1759 = vunpack.c.l.s4 1934713408
    %v1760 = vunpack.c.0.s8 %v1759
    %v1761 = vlaneseq
    %v1762 = vshrl.u32 %v1761, 7
    %v1763 = vsub.s32 %v1760, %v1762
    %v1764 = vrot.slane %v1756, %v1763
    %v1766 = vunpack.c.l.s4 1934713408
    %v1767 = vunpack.c.0.s8 %v1766
    %v1768 = vlaneseq
    %v1769 = vshrl.u32 %v1768, 7
    %v1770 = vsub.s32 %v1767, %v1769
    %v1771 = vrot.slane %v1757, %v1770
    %v1772 = vcombine.low %v1707, %v1723
    %v1773 = vcombine.high %v1707, %v1723
    %v1775 = vunpack.c.l.s4 1934713408
    %v1776 = vunpack.c.0.s8 %v1775
    %v1777 = vlaneseq
    %v1778 = vshrl.u32 %v1777, 7
    %v1779 = vsub.s32 %v1776, %v1778
    %v1780 = vrot.slane %v1772, %v1779
    %v1782 = vunpack.c.l.s4 1934713408
    %v1783 = vunpack.c.0.s8 %v1782
    %v1784 = vlaneseq
    %v1785 = vshrl.u32 %v1784, 7
    %v1786 = vsub.s32 %v1783, %v1785
    %v1787 = vrot.slane %v1773, %v1786
    %v1788 = vcombine.low %v1732, %v1748
    %v1789 = vcombine.high %v1732, %v1748
    %v1791 = vunpack.c.l.s4 1934713408
    %v1792 = vunpack.c.0.s8 %v1791
    %v1793 = vlaneseq
    %v1794 = vshrl.u32 %v1793, 7
    %v1795 = vsub.s32 %v1792, %v1794
    %v1796 = vrot.slane %v1788, %v1795
    %v1798 = vunpack.c.l.s4 1934713408
    %v1799 = vunpack.c.0.s8 %v1798
    %v1800 = vlaneseq
    %v1801 = vshrl.u32 %v1800, 7
    %v1802 = vsub.s32 %v1799, %v1801
    %v1803 = vrot.slane %v1789, %v1802
    %v1804 = vcombine.low %v1739, %v1755
    %v1805 = vcombine.high %v1739, %v1755
    %v1807 = vunpack.c.l.s4 1934713408
    %v1808 = vunpack.c.0.s8 %v1807
    %v1809 = vlaneseq
    %v1810 = vshrl.u32 %v1809, 7
    %v1811 = vsub.s32 %v1808, %v1810
    %v1812 = vrot.slane %v1804, %v1811
    %v1814 = vunpack.c.l.s4 1934713408
    %v1815 = vunpack.c.0.s8 %v1814
    %v1816 = vlaneseq
    %v1817 = vshrl.u32 %v1816, 7
    %v1818 = vsub.s32 %v1815, %v1817
    %v1819 = vrot.slane %v1805, %v1818
    %v1820 = vcombine.low %v1764, %v1796
    %v1821 = vcombine.high %v1764, %v1796
    %v1822 = vcombine.low %v1771, %v1803
    %v1823 = vcombine.high %v1771, %v1803
    %v1824 = vcombine.low %v1780, %v1812
    %v1825 = vcombine.high %v1780, %v1812
    %v1826 = vcombine.low %v1787, %v1819
    %v1827 = vcombine.high %v1787, %v1819
    %v1828 = vpack.c.bf16 %v1821, %v1820
    %v1829 = vpack.c.bf16 %v1823, %v1822
    %v1830 = vpack.c.bf16 %v1825, %v1824
    %v1831 = vpack.c.bf16 %v1827, %v1826
    %v1832 = vld [vmem:[#allocation15] sm:$0xf]
    %v1833 = vld [vmem:[#allocation15 + $0x4] sm:$0xf]
    %v1834 = vld [vmem:[#allocation15 + $0x8] sm:$0xf]
    %v1835 = vld [vmem:[#allocation15 + $0xc] sm:$0xf]
    %v1836 = vld [vmem:[#allocation15 + $0x10] sm:$0xf]
    %v1837 = vld [vmem:[#allocation15 + $0x14] sm:$0xf]
    %v1838 = vld [vmem:[#allocation15 + $0x18] sm:$0xf]
    %v1839 = vld [vmem:[#allocation15 + $0x1c] sm:$0xf]
    %v1840 = vld [vmem:[#allocation15 + $0x20] sm:$0xf]
    %v1841 = vld [vmem:[#allocation15 + $0x24] sm:$0xf]
    %v1842 = vld [vmem:[#allocation15 + $0x28] sm:$0xf]
    %v1843 = vld [vmem:[#allocation15 + $0x2c] sm:$0xf]
    %v1844 = vld [vmem:[#allocation15 + $0x30] sm:$0xf]
    %v1845 = vld [vmem:[#allocation15 + $0x34] sm:$0xf]
    %v1846 = vld [vmem:[#allocation15 + $0x38] sm:$0xf]
    %v1847 = vld [vmem:[#allocation15 + $0x3c] sm:$0xf]
    %v1864 = vunpack.c.l.b16 %v1832
    %v1865 = vunpack.c.l.b16 %v1833
    %v1866 = vunpack.c.l.b16 %v1834
    %v1867 = vunpack.c.l.b16 %v1835
    %v1868 = vunpack.c.l.b16 %v1836
    %v1869 = vunpack.c.l.b16 %v1837
    %v1870 = vunpack.c.l.b16 %v1838
    %v1871 = vunpack.c.l.b16 %v1839
    %v1872 = vunpack.c.l.b16 %v1840
    %v1873 = vunpack.c.l.b16 %v1841
    %v1874 = vunpack.c.l.b16 %v1842
    %v1875 = vunpack.c.l.b16 %v1843
    %v1876 = vunpack.c.l.b16 %v1844
    %v1877 = vunpack.c.l.b16 %v1845
    %v1878 = vunpack.c.l.b16 %v1846
    %v1879 = vunpack.c.l.b16 %v1847
    %v1880 = vpack.c.b16 %v1865, %v1864
    %v1881 = vpack.c.b16 %v1867, %v1866
    %v1882 = vpack.c.b16 %v1869, %v1868
    %v1883 = vpack.c.b16 %v1871, %v1870
    %v1884 = vpack.c.b16 %v1873, %v1872
    %v1885 = vpack.c.b16 %v1875, %v1874
    %v1886 = vpack.c.b16 %v1877, %v1876
    %v1887 = vpack.c.b16 %v1879, %v1878
    %1896 = vmatprep.subr.bf16.mxu0 0
    %1897 = vmatpush1.bf16.msra.mxu0 %v1880
    %1898 = vmatprep.subr.bf16.mxu0 0
    %1899 = vmatpush1.bf16.msra.mxu0 %v1881
    %1900 = vmatprep.subr.bf16.mxu0 0
    %1901 = vmatpush1.bf16.msra.mxu0 %v1882
    %1902 = vmatprep.subr.bf16.mxu0 0
    %1903 = vmatpush1.bf16.msra.mxu0 %v1883
    %1904 = vmatprep.subr.bf16.mxu0 0
    %1905 = vmatpush1.bf16.msra.mxu0 %v1884
    %1906 = vmatprep.subr.bf16.mxu0 0
    %1907 = vmatpush1.bf16.msra.mxu0 %v1885
    %1908 = vmatprep.subr.bf16.mxu0 0
    %1909 = vmatpush1.bf16.msra.mxu0 %v1886
    %1910 = vmatprep.subr.bf16.mxu0 0
    %1911 = vmatpush1.bf16.msra.mxu0 %v1887
    %1912 = vmatprep.subr.bf16.mxu0 0
    %1913 = vmatpush1.bf16.msra.mxu0 0
    %1914 = vmatprep.subr.bf16.mxu0 0
    %1915 = vmatpush1.bf16.msra.mxu0 0
    %1916 = vmatprep.subr.bf16.mxu0 0
    %1917 = vmatpush1.bf16.msra.mxu0 0
    %1918 = vmatprep.subr.bf16.mxu0 0
    %1919 = vmatpush1.bf16.msra.mxu0 0
    %1920 = vmatprep.subr.bf16.mxu0 0
    %1921 = vmatpush1.bf16.msra.mxu0 0
    %1922 = vmatprep.subr.bf16.mxu0 0
    %1923 = vmatpush1.bf16.msra.mxu0 0
    %1924 = vmatprep.subr.bf16.mxu0 0
    %1925 = vmatpush1.bf16.msra.mxu0 0
    %1926 = vmatprep.subr.bf16.mxu0 0
    %1927 = vmatpush1.bf16.msra.mxu0 0
    %1928 = vmatprep.mubr.bf16.mxu0 0
    %1929 = vmatmul.mubr.bf16.gmra.mrb[0].mxu0 %v1828
    %v1930 = vpop.f32.mrb[0].mxu0
    %v1931 = vadd.f32 0.0, %v1930
    %v1932 = vpop.f32.mrb[0].mxu0
    %v1933 = vpop.f32.mrb[0].mxu0
    %v1934 = vadd.f32 0.0, %v1933
    %v1935 = vpop.f32.mrb[0].mxu0
    %1936 = vmatprep.mubr.bf16.mxu0 0
    %1937 = vmatmul.mubr.bf16.gmra.mrb[0].mxu0 %v1829
    %v1938 = vpop.f32.mrb[0].mxu0
    %v1939 = vadd.f32 0.0, %v1938
    %v1940 = vpop.f32.mrb[0].mxu0
    %v1941 = vpop.f32.mrb[0].mxu0
    %v1942 = vadd.f32 0.0, %v1941
    %v1943 = vpop.f32.mrb[0].mxu0
    %1944 = vmatprep.mubr.bf16.mxu0 0
    %1945 = vmatmul.mubr.bf16.gmra.mrb[0].mxu0 %v1830
    %v1946 = vpop.f32.mrb[0].mxu0
    %v1947 = vadd.f32 0.0, %v1946
    %v1948 = vpop.f32.mrb[0].mxu0
    %v1949 = vpop.f32.mrb[0].mxu0
    %v1950 = vadd.f32 0.0, %v1949
    %v1951 = vpop.f32.mrb[0].mxu0
    %1952 = vmatprep.mubr.bf16.mxu0 0
    %1953 = vmatmul.mubr.bf16.gmra.mrb[0].mxu0 %v1831
    %v1954 = vpop.f32.mrb[0].mxu0
    %v1955 = vadd.f32 0.0, %v1954
    %v1956 = vpop.f32.mrb[0].mxu0
    %v1957 = vpop.f32.mrb[0].mxu0
    %v1958 = vadd.f32 0.0, %v1957
    %v1959 = vpop.f32.mrb[0].mxu0
    %1960 = vdwg.mxu0
    %v1961 = vpack.c.bf16 %v1931, %v1931
    %v1962 = vpack.c.bf16 %v1934, %v1934
    %v1963 = vpack.c.bf16 %v1939, %v1939
    %v1964 = vpack.c.bf16 %v1942, %v1942
    %v1965 = vpack.c.bf16 %v1947, %v1947
    %v1966 = vpack.c.bf16 %v1950, %v1950
    %v1967 = vpack.c.bf16 %v1955, %v1955
    %v1968 = vpack.c.bf16 %v1958, %v1958
    %1969 = vmatprep.subr.bf16.mxu0 0
    %1970 = vmatpush1.bf16.xpose.msra.mxu0 %v206
    %1971 = vmatprep.subr.bf16.mxu0 0
    %1972 = vmatpush1.bf16.xpose.msra.mxu0 0
    %1973 = vmatprep.subr.bf16.mxu0 0
    %1974 = vmatpush1.bf16.xpose.msra.mxu0 0
    %1975 = vmatprep.subr.bf16.mxu0 0
    %1976 = vmatpush1.bf16.xpose.msra.mxu0 0
    %1977 = vmatprep.subr.bf16.mxu0 0
    %1978 = vmatpush1.bf16.xpose.msra.mxu0 0
    %1979 = vmatprep.subr.bf16.mxu0 0
    %1980 = vmatpush1.bf16.xpose.msra.mxu0 0
    %1981 = vmatprep.subr.bf16.mxu0 0
    %1982 = vmatpush1.bf16.xpose.msra.mxu0 0
    %1983 = vmatprep.subr.bf16.mxu0 0
    %1984 = vmatpush1.bf16.xpose.msra.mxu0 0
    %1985 = vmatprep.subr.bf16.mxu0 0
    %1986 = vmatpush1.bf16.xpose.msra.mxu0 0
    %1987 = vmatprep.subr.bf16.mxu0 0
    %1988 = vmatpush1.bf16.xpose.msra.mxu0 0
    %1989 = vmatprep.subr.bf16.mxu0 0
    %1990 = vmatpush1.bf16.xpose.msra.mxu0 0
    %1991 = vmatprep.subr.bf16.mxu0 0
    %1992 = vmatpush1.bf16.xpose.msra.mxu0 0
    %1993 = vmatprep.subr.bf16.mxu0 0
    %1994 = vmatpush1.bf16.xpose.msra.mxu0 0
    %1995 = vmatprep.subr.bf16.mxu0 0
    %1996 = vmatpush1.bf16.xpose.msra.mxu0 0
    %1997 = vmatprep.subr.bf16.mxu0 0
    %1998 = vmatpush1.bf16.xpose.msra.mxu0 0
    %1999 = vmatprep.subr.bf16.mxu0 0
    %2000 = vmatpush1.bf16.xpose.msra.mxu0 0
    %2001 = vmatprep.mubr.bf16.mxu0 0
    %2002 = vmatmul.mubr.bf16.gmra.mrb[0].mxu0 %v1961
    %v2003 = vpop.f32.mrb[0].mxu0
    %v2004 = vadd.f32 0.0, %v2003
    %v2005 = vpop.f32.mrb[0].mxu0
    %v2006 = vpop.f32.mrb[0].mxu0
    %v2007 = vpop.f32.mrb[0].mxu0
    %2008 = vdwg.mxu0
    %2009 = vmatprep.subr.bf16.mxu0 0
    %2010 = vmatpush1.bf16.xpose.msra.mxu0 %v207
    %2011 = vmatprep.subr.bf16.mxu0 0
    %2012 = vmatpush1.bf16.xpose.msra.mxu0 0
    %2013 = vmatprep.subr.bf16.mxu0 0
    %2014 = vmatpush1.bf16.xpose.msra.mxu0 0
    %2015 = vmatprep.subr.bf16.mxu0 0
    %2016 = vmatpush1.bf16.xpose.msra.mxu0 0
    %2017 = vmatprep.subr.bf16.mxu0 0
    %2018 = vmatpush1.bf16.xpose.msra.mxu0 0
    %2019 = vmatprep.subr.bf16.mxu0 0
    %2020 = vmatpush1.bf16.xpose.msra.mxu0 0
    %2021 = vmatprep.subr.bf16.mxu0 0
    %2022 = vmatpush1.bf16.xpose.msra.mxu0 0
    %2023 = vmatprep.subr.bf16.mxu0 0
    %2024 = vmatpush1.bf16.xpose.msra.mxu0 0
    %2025 = vmatprep.subr.bf16.mxu0 0
    %2026 = vmatpush1.bf16.xpose.msra.mxu0 0
    %2027 = vmatprep.subr.bf16.mxu0 0
    %2028 = vmatpush1.bf16.xpose.msra.mxu0 0
    %2029 = vmatprep.subr.bf16.mxu0 0
    %2030 = vmatpush1.bf16.xpose.msra.mxu0 0
    %2031 = vmatprep.subr.bf16.mxu0 0
    %2032 = vmatpush1.bf16.xpose.msra.mxu0 0
    %2033 = vmatprep.subr.bf16.mxu0 0
    %2034 = vmatpush1.bf16.xpose.msra.mxu0 0
    %2035 = vmatprep.subr.bf16.mxu0 0
    %2036 = vmatpush1.bf16.xpose.msra.mxu0 0
    %2037 = vmatprep.subr.bf16.mxu0 0
    %2038 = vmatpush1.bf16.xpose.msra.mxu0 0
    %2039 = vmatprep.subr.bf16.mxu0 0
    %2040 = vmatpush1.bf16.xpose.msra.mxu0 0
    %2041 = vmatprep.mubr.bf16.mxu0 0
    %2042 = vmatmul.mubr.bf16.gmra.mrb[0].mxu0 %v1962
    %v2043 = vpop.f32.mrb[0].mxu0
    %v2044 = vadd.f32 0.0, %v2043
    %v2045 = vpop.f32.mrb[0].mxu0
    %v2046 = vpop.f32.mrb[0].mxu0
    %v2047 = vpop.f32.mrb[0].mxu0
    %2048 = vdwg.mxu0
    %2049 = vmatprep.subr.bf16.mxu0 0
    %2050 = vmatpush1.bf16.xpose.msra.mxu0 %v208
    %2051 = vmatprep.subr.bf16.mxu0 0
    %2052 = vmatpush1.bf16.xpose.msra.mxu0 0
    %2053 = vmatprep.subr.bf16.mxu0 0
    %2054 = vmatpush1.bf16.xpose.msra.mxu0 0
    %2055 = vmatprep.subr.bf16.mxu0 0
    %2056 = vmatpush1.bf16.xpose.msra.mxu0 0
    %2057 = vmatprep.subr.bf16.mxu0 0
    %2058 = vmatpush1.bf16.xpose.msra.mxu0 0
    %2059 = vmatprep.subr.bf16.mxu0 0
    %2060 = vmatpush1.bf16.xpose.msra.mxu0 0
    %2061 = vmatprep.subr.bf16.mxu0 0
    %2062 = vmatpush1.bf16.xpose.msra.mxu0 0
    %2063 = vmatprep.subr.bf16.mxu0 0
    %2064 = vmatpush1.bf16.xpose.msra.mxu0 0
    %2065 = vmatprep.subr.bf16.mxu0 0
    %2066 = vmatpush1.bf16.xpose.msra.mxu0 0
    %2067 = vmatprep.subr.bf16.mxu0 0
    %2068 = vmatpush1.bf16.xpose.msra.mxu0 0
    %2069 = vmatprep.subr.bf16.mxu0 0
    %2070 = vmatpush1.bf16.xpose.msra.mxu0 0
    %2071 = vmatprep.subr.bf16.mxu0 0
    %2072 = vmatpush1.bf16.xpose.msra.mxu0 0
    %2073 = vmatprep.subr.bf16.mxu0 0
    %2074 = vmatpush1.bf16.xpose.msra.mxu0 0
    %2075 = vmatprep.subr.bf16.mxu0 0
    %2076 = vmatpush1.bf16.xpose.msra.mxu0 0
    %2077 = vmatprep.subr.bf16.mxu0 0
    %2078 = vmatpush1.bf16.xpose.msra.mxu0 0
    %2079 = vmatprep.subr.bf16.mxu0 0
    %2080 = vmatpush1.bf16.xpose.msra.mxu0 0
    %2081 = vmatprep.mubr.bf16.mxu0 0
    %2082 = vmatmul.mubr.bf16.gmra.mrb[0].mxu0 %v1963
    %v2083 = vpop.f32.mrb[0].mxu0
    %v2084 = vadd.f32 0.0, %v2083
    %v2085 = vpop.f32.mrb[0].mxu0
    %v2086 = vpop.f32.mrb[0].mxu0
    %v2087 = vpop.f32.mrb[0].mxu0
    %2088 = vdwg.mxu0
    %2089 = vmatprep.subr.bf16.mxu0 0
    %2090 = vmatpush1.bf16.xpose.msra.mxu0 %v209
    %2091 = vmatprep.subr.bf16.mxu0 0
    %2092 = vmatpush1.bf16.xpose.msra.mxu0 0
    %2093 = vmatprep.subr.bf16.mxu0 0
    %2094 = vmatpush1.bf16.xpose.msra.mxu0 0
    %2095 = vmatprep.subr.bf16.mxu0 0
    %2096 = vmatpush1.bf16.xpose.msra.mxu0 0
    %2097 = vmatprep.subr.bf16.mxu0 0
    %2098 = vmatpush1.bf16.xpose.msra.mxu0 0
    %2099 = vmatprep.subr.bf16.mxu0 0
    %2100 = vmatpush1.bf16.xpose.msra.mxu0 0
    %2101 = vmatprep.subr.bf16.mxu0 0
    %2102 = vmatpush1.bf16.xpose.msra.mxu0 0
    %2103 = vmatprep.subr.bf16.mxu0 0
    %2104 = vmatpush1.bf16.xpose.msra.mxu0 0
    %2105 = vmatprep.subr.bf16.mxu0 0
    %2106 = vmatpush1.bf16.xpose.msra.mxu0 0
    %2107 = vmatprep.subr.bf16.mxu0 0
    %2108 = vmatpush1.bf16.xpose.msra.mxu0 0
    %2109 = vmatprep.subr.bf16.mxu0 0
    %2110 = vmatpush1.bf16.xpose.msra.mxu0 0
    %2111 = vmatprep.subr.bf16.mxu0 0
    %2112 = vmatpush1.bf16.xpose.msra.mxu0 0
    %2113 = vmatprep.subr.bf16.mxu0 0
    %2114 = vmatpush1.bf16.xpose.msra.mxu0 0
    %2115 = vmatprep.subr.bf16.mxu0 0
    %2116 = vmatpush1.bf16.xpose.msra.mxu0 0
    %2117 = vmatprep.subr.bf16.mxu0 0
    %2118 = vmatpush1.bf16.xpose.msra.mxu0 0
    %2119 = vmatprep.subr.bf16.mxu0 0
    %2120 = vmatpush1.bf16.xpose.msra.mxu0 0
    %2121 = vmatprep.mubr.bf16.mxu0 0
    %2122 = vmatmul.mubr.bf16.gmra.mrb[0].mxu0 %v1964
    %v2123 = vpop.f32.mrb[0].mxu0
    %v2124 = vadd.f32 0.0, %v2123
    %v2125 = vpop.f32.mrb[0].mxu0
    %v2126 = vpop.f32.mrb[0].mxu0
    %v2127 = vpop.f32.mrb[0].mxu0
    %2128 = vdwg.mxu0
    %2129 = vmatprep.subr.bf16.mxu0 0
    %2130 = vmatpush1.bf16.xpose.msra.mxu0 %v210
    %2131 = vmatprep.subr.bf16.mxu0 0
    %2132 = vmatpush1.bf16.xpose.msra.mxu0 0
    %2133 = vmatprep.subr.bf16.mxu0 0
    %2134 = vmatpush1.bf16.xpose.msra.mxu0 0
    %2135 = vmatprep.subr.bf16.mxu0 0
    %2136 = vmatpush1.bf16.xpose.msra.mxu0 0
    %2137 = vmatprep.subr.bf16.mxu0 0
    %2138 = vmatpush1.bf16.xpose.msra.mxu0 0
    %2139 = vmatprep.subr.bf16.mxu0 0
    %2140 = vmatpush1.bf16.xpose.msra.mxu0 0
    %2141 = vmatprep.subr.bf16.mxu0 0
    %2142 = vmatpush1.bf16.xpose.msra.mxu0 0
    %2143 = vmatprep.subr.bf16.mxu0 0
    %2144 = vmatpush1.bf16.xpose.msra.mxu0 0
    %2145 = vmatprep.subr.bf16.mxu0 0
    %2146 = vmatpush1.bf16.xpose.msra.mxu0 0
    %2147 = vmatprep.subr.bf16.mxu0 0
    %2148 = vmatpush1.bf16.xpose.msra.mxu0 0
    %2149 = vmatprep.subr.bf16.mxu0 0
    %2150 = vmatpush1.bf16.xpose.msra.mxu0 0
    %2151 = vmatprep.subr.bf16.mxu0 0
    %2152 = vmatpush1.bf16.xpose.msra.mxu0 0
    %2153 = vmatprep.subr.bf16.mxu0 0
    %2154 = vmatpush1.bf16.xpose.msra.mxu0 0
    %2155 = vmatprep.subr.bf16.mxu0 0
    %2156 = vmatpush1.bf16.xpose.msra.mxu0 0
    %2157 = vmatprep.subr.bf16.mxu0 0
    %2158 = vmatpush1.bf16.xpose.msra.mxu0 0
    %2159 = vmatprep.subr.bf16.mxu0 0
    %2160 = vmatpush1.bf16.xpose.msra.mxu0 0
    %2161 = vmatprep.mubr.bf16.mxu0 0
    %2162 = vmatmul.mubr.bf16.gmra.mrb[0].mxu0 %v1965
    %v2163 = vpop.f32.mrb[0].mxu0
    %v2164 = vadd.f32 0.0, %v2163
    %v2165 = vpop.f32.mrb[0].mxu0
    %v2166 = vpop.f32.mrb[0].mxu0
    %v2167 = vpop.f32.mrb[0].mxu0
    %2168 = vdwg.mxu0
    %2169 = vmatprep.subr.bf16.mxu0 0
    %2170 = vmatpush1.bf16.xpose.msra.mxu0 %v211
    %2171 = vmatprep.subr.bf16.mxu0 0
    %2172 = vmatpush1.bf16.xpose.msra.mxu0 0
    %2173 = vmatprep.subr.bf16.mxu0 0
    %2174 = vmatpush1.bf16.xpose.msra.mxu0 0
    %2175 = vmatprep.subr.bf16.mxu0 0
    %2176 = vmatpush1.bf16.xpose.msra.mxu0 0
    %2177 = vmatprep.subr.bf16.mxu0 0
    %2178 = vmatpush1.bf16.xpose.msra.mxu0 0
    %2179 = vmatprep.subr.bf16.mxu0 0
    %2180 = vmatpush1.bf16.xpose.msra.mxu0 0
    %2181 = vmatprep.subr.bf16.mxu0 0
    %2182 = vmatpush1.bf16.xpose.msra.mxu0 0
    %2183 = vmatprep.subr.bf16.mxu0 0
    %2184 = vmatpush1.bf16.xpose.msra.mxu0 0
    %2185 = vmatprep.subr.bf16.mxu0 0
    %2186 = vmatpush1.bf16.xpose.msra.mxu0 0
    %2187 = vmatprep.subr.bf16.mxu0 0
    %2188 = vmatpush1.bf16.xpose.msra.mxu0 0
    %2189 = vmatprep.subr.bf16.mxu0 0
    %2190 = vmatpush1.bf16.xpose.msra.mxu0 0
    %2191 = vmatprep.subr.bf16.mxu0 0
    %2192 = vmatpush1.bf16.xpose.msra.mxu0 0
    %2193 = vmatprep.subr.bf16.mxu0 0
    %2194 = vmatpush1.bf16.xpose.msra.mxu0 0
    %2195 = vmatprep.subr.bf16.mxu0 0
    %2196 = vmatpush1.bf16.xpose.msra.mxu0 0
    %2197 = vmatprep.subr.bf16.mxu0 0
    %2198 = vmatpush1.bf16.xpose.msra.mxu0 0
    %2199 = vmatprep.subr.bf16.mxu0 0
    %2200 = vmatpush1.bf16.xpose.msra.mxu0 0
    %2201 = vmatprep.mubr.bf16.mxu0 0
    %2202 = vmatmul.mubr.bf16.gmra.mrb[0].mxu0 %v1966
    %v2203 = vpop.f32.mrb[0].mxu0
    %v2204 = vadd.f32 0.0, %v2203
    %v2205 = vpop.f32.mrb[0].mxu0
    %v2206 = vpop.f32.mrb[0].mxu0
    %v2207 = vpop.f32.mrb[0].mxu0
    %2208 = vdwg.mxu0
    %2209 = vmatprep.subr.bf16.mxu0 0
    %2210 = vmatpush1.bf16.xpose.msra.mxu0 %v212
    %2211 = vmatprep.subr.bf16.mxu0 0
    %2212 = vmatpush1.bf16.xpose.msra.mxu0 0
    %2213 = vmatprep.subr.bf16.mxu0 0
    %2214 = vmatpush1.bf16.xpose.msra.mxu0 0
    %2215 = vmatprep.subr.bf16.mxu0 0
    %2216 = vmatpush1.bf16.xpose.msra.mxu0 0
    %2217 = vmatprep.subr.bf16.mxu0 0
    %2218 = vmatpush1.bf16.xpose.msra.mxu0 0
    %2219 = vmatprep.subr.bf16.mxu0 0
    %2220 = vmatpush1.bf16.xpose.msra.mxu0 0
    %2221 = vmatprep.subr.bf16.mxu0 0
    %2222 = vmatpush1.bf16.xpose.msra.mxu0 0
    %2223 = vmatprep.subr.bf16.mxu0 0
    %2224 = vmatpush1.bf16.xpose.msra.mxu0 0
    %2225 = vmatprep.subr.bf16.mxu0 0
    %2226 = vmatpush1.bf16.xpose.msra.mxu0 0
    %2227 = vmatprep.subr.bf16.mxu0 0
    %2228 = vmatpush1.bf16.xpose.msra.mxu0 0
    %2229 = vmatprep.subr.bf16.mxu0 0
    %2230 = vmatpush1.bf16.xpose.msra.mxu0 0
    %2231 = vmatprep.subr.bf16.mxu0 0
    %2232 = vmatpush1.bf16.xpose.msra.mxu0 0
    %2233 = vmatprep.subr.bf16.mxu0 0
    %2234 = vmatpush1.bf16.xpose.msra.mxu0 0
    %2235 = vmatprep.subr.bf16.mxu0 0
    %2236 = vmatpush1.bf16.xpose.msra.mxu0 0
    %2237 = vmatprep.subr.bf16.mxu0 0
    %2238 = vmatpush1.bf16.xpose.msra.mxu0 0
    %2239 = vmatprep.subr.bf16.mxu0 0
    %2240 = vmatpush1.bf16.xpose.msra.mxu0 0
    %2241 = vmatprep.mubr.bf16.mxu0 0
    %2242 = vmatmul.mubr.bf16.gmra.mrb[0].mxu0 %v1967
    %v2243 = vpop.f32.mrb[0].mxu0
    %v2244 = vadd.f32 0.0, %v2243
    %v2245 = vpop.f32.mrb[0].mxu0
    %v2246 = vpop.f32.mrb[0].mxu0
    %v2247 = vpop.f32.mrb[0].mxu0
    %2248 = vdwg.mxu0
    %2249 = vmatprep.subr.bf16.mxu0 0
    %2250 = vmatpush1.bf16.xpose.msra.mxu0 %v213
    %2251 = vmatprep.subr.bf16.mxu0 0
    %2252 = vmatpush1.bf16.xpose.msra.mxu0 0
    %2253 = vmatprep.subr.bf16.mxu0 0
    %2254 = vmatpush1.bf16.xpose.msra.mxu0 0
    %2255 = vmatprep.subr.bf16.mxu0 0
    %2256 = vmatpush1.bf16.xpose.msra.mxu0 0
    %2257 = vmatprep.subr.bf16.mxu0 0
    %2258 = vmatpush1.bf16.xpose.msra.mxu0 0
    %2259 = vmatprep.subr.bf16.mxu0 0
    %2260 = vmatpush1.bf16.xpose.msra.mxu0 0
    %2261 = vmatprep.subr.bf16.mxu0 0
    %2262 = vmatpush1.bf16.xpose.msra.mxu0 0
    %2263 = vmatprep.subr.bf16.mxu0 0
    %2264 = vmatpush1.bf16.xpose.msra.mxu0 0
    %2265 = vmatprep.subr.bf16.mxu0 0
    %2266 = vmatpush1.bf16.xpose.msra.mxu0 0
    %2267 = vmatprep.subr.bf16.mxu0 0
    %2268 = vmatpush1.bf16.xpose.msra.mxu0 0
    %2269 = vmatprep.subr.bf16.mxu0 0
    %2270 = vmatpush1.bf16.xpose.msra.mxu0 0
    %2271 = vmatprep.subr.bf16.mxu0 0
    %2272 = vmatpush1.bf16.xpose.msra.mxu0 0
    %2273 = vmatprep.subr.bf16.mxu0 0
    %2274 = vmatpush1.bf16.xpose.msra.mxu0 0
    %2275 = vmatprep.subr.bf16.mxu0 0
    %2276 = vmatpush1.bf16.xpose.msra.mxu0 0
    %2277 = vmatprep.subr.bf16.mxu0 0
    %2278 = vmatpush1.bf16.xpose.msra.mxu0 0
    %2279 = vmatprep.subr.bf16.mxu0 0
    %2280 = vmatpush1.bf16.xpose.msra.mxu0 0
    %2281 = vmatprep.mubr.bf16.mxu0 0
    %2282 = vmatmul.mubr.bf16.gmra.mrb[0].mxu0 %v1968
    %v2283 = vpop.f32.mrb[0].mxu0
    %v2284 = vadd.f32 0.0, %v2283
    %v2285 = vpop.f32.mrb[0].mxu0
    %v2286 = vpop.f32.mrb[0].mxu0
    %v2287 = vpop.f32.mrb[0].mxu0
    %2288 = vdwg.mxu0
    %vm2289 = vcmask 64512
    %v2290 = vsel %vm2289, %v2004, -inf
    %2291 = vmax.xlane.f32.xlu0 %v2290
    %v2292 = vpop.xlane.xlu0 %2291
    %v2293 = vsel %vm2289, %v2044, -inf
    %2294 = vmax.xlane.f32.xlu0 %v2293
    %v2295 = vpop.xlane.xlu0 %2294
    %v2296 = vsel %vm2289, %v2084, -inf
    %2297 = vmax.xlane.f32.xlu0 %v2296
    %v2298 = vpop.xlane.xlu0 %2297
    %v2299 = vsel %vm2289, %v2124, -inf
    %2300 = vmax.xlane.f32.xlu0 %v2299
    %v2301 = vpop.xlane.xlu0 %2300
    %v2302 = vsel %vm2289, %v2164, -inf
    %2303 = vmax.xlane.f32.xlu0 %v2302
    %v2304 = vpop.xlane.xlu0 %2303
    %v2305 = vsel %vm2289, %v2204, -inf
    %2306 = vmax.xlane.f32.xlu0 %v2305
    %v2307 = vpop.xlane.xlu0 %2306
    %v2308 = vsel %vm2289, %v2244, -inf
    %2309 = vmax.xlane.f32.xlu0 %v2308
    %v2310 = vpop.xlane.xlu0 %2309
    %v2311 = vsel %vm2289, %v2284, -inf
    %2312 = vmax.xlane.f32.xlu0 %v2311
    %v2313 = vpop.xlane.xlu0 %2312
    %v2314 = vsub.f32 %v2004, %v2292
    %v2315 = vsub.f32 %v2044, %v2295
    %v2316 = vsub.f32 %v2084, %v2298
    %v2317 = vsub.f32 %v2124, %v2301
    %v2318 = vsub.f32 %v2164, %v2304
    %v2319 = vsub.f32 %v2204, %v2307
    %v2320 = vsub.f32 %v2244, %v2310
    %v2321 = vsub.f32 %v2284, %v2313
    %v2322 = vmul.f32 %v2314, 1.442695
    %v2323 = vpow.pop %v2322
    %v2324 = vmul.f32 %v2315, 1.442695
    %v2325 = vpow.pop %v2324
    %v2326 = vmul.f32 %v2316, 1.442695
    %v2327 = vpow.pop %v2326
    %v2328 = vmul.f32 %v2317, 1.442695
    %v2329 = vpow.pop %v2328
    %v2330 = vmul.f32 %v2318, 1.442695
    %v2331 = vpow.pop %v2330
    %v2332 = vmul.f32 %v2319, 1.442695
    %v2333 = vpow.pop %v2332
    %v2334 = vmul.f32 %v2320, 1.442695
    %v2335 = vpow.pop %v2334
    %v2336 = vmul.f32 %v2321, 1.442695
    %v2337 = vpow.pop %v2336
    %v2338 = vsel %vm2289, %v2323, 0.0
    %2339 = vadd.xlane.f32.xlu0 %v2338
    %v2340 = vpop.xlane.xlu0 %2339
    %v2341 = vsel %vm2289, %v2325, 0.0
    %2342 = vadd.xlane.f32.xlu0 %v2341
    %v2343 = vpop.xlane.xlu0 %2342
    %v2344 = vsel %vm2289, %v2327, 0.0
    %2345 = vadd.xlane.f32.xlu0 %v2344
    %v2346 = vpop.xlane.xlu0 %2345
    %v2347 = vsel %vm2289, %v2329, 0.0
    %2348 = vadd.xlane.f32.xlu0 %v2347
    %v2349 = vpop.xlane.xlu0 %2348
    %v2350 = vsel %vm2289, %v2331, 0.0
    %2351 = vadd.xlane.f32.xlu0 %v2350
    %v2352 = vpop.xlane.xlu0 %2351
    %v2353 = vsel %vm2289, %v2333, 0.0
    %2354 = vadd.xlane.f32.xlu0 %v2353
    %v2355 = vpop.xlane.xlu0 %2354
    %v2356 = vsel %vm2289, %v2335, 0.0
    %2357 = vadd.xlane.f32.xlu0 %v2356
    %v2358 = vpop.xlane.xlu0 %2357
    %v2359 = vsel %vm2289, %v2337, 0.0
    %2360 = vadd.xlane.f32.xlu0 %v2359
    %v2361 = vpop.xlane.xlu0 %2360
    %v2362 = vrcp.pop %v2340
    %v2363 = vrcp.pop %v2343
    %v2364 = vrcp.pop %v2346
    %v2365 = vrcp.pop %v2349
    %v2366 = vrcp.pop %v2352
    %v2367 = vrcp.pop %v2355
    %v2368 = vrcp.pop %v2358
    %v2369 = vrcp.pop %v2361
    %v2370 = vmul.f32 %v2323, %v2362
    %v2371 = vmul.f32 %v2325, %v2363
    %v2372 = vmul.f32 %v2327, %v2364
    %v2373 = vmul.f32 %v2329, %v2365
    %v2374 = vmul.f32 %v2331, %v2366
    %v2375 = vmul.f32 %v2333, %v2367
    %v2376 = vmul.f32 %v2335, %v2368
    %v2377 = vmul.f32 %v2337, %v2369
    %v2378 = vpack.c.bf16 %v2370, %v2370
    %v2379 = vpack.c.bf16 %v2371, %v2371
    %v2380 = vpack.c.bf16 %v2372, %v2372
    %v2381 = vpack.c.bf16 %v2373, %v2373
    %v2382 = vpack.c.bf16 %v2374, %v2374
    %v2383 = vpack.c.bf16 %v2375, %v2375
    %v2384 = vpack.c.bf16 %v2376, %v2376
    %v2385 = vpack.c.bf16 %v2377, %v2377
    %v2387 = vsel %vm2289, %v2378, 0
    %vm2389 = vcmask 1043456
    %v2391 = vsel %vm2389, %v206, 0
    %2393 = vmatprep.subr.bf16.mxu0 0
    %2394 = vmatpush1.bf16.msra.mxu0 %v2391
    %2395 = vmatprep.subr.bf16.mxu0 0
    %2396 = vmatpush1.bf16.msra.mxu0 0
    %2397 = vmatprep.subr.bf16.mxu0 0
    %2398 = vmatpush1.bf16.msra.mxu0 0
    %2399 = vmatprep.subr.bf16.mxu0 0
    %2400 = vmatpush1.bf16.msra.mxu0 0
    %2401 = vmatprep.subr.bf16.mxu0 0
    %2402 = vmatpush1.bf16.msra.mxu0 0
    %2403 = vmatprep.subr.bf16.mxu0 0
    %2404 = vmatpush1.bf16.msra.mxu0 0
    %2405 = vmatprep.subr.bf16.mxu0 0
    %2406 = vmatpush1.bf16.msra.mxu0 0
    %2407 = vmatprep.subr.bf16.mxu0 0
    %2408 = vmatpush1.bf16.msra.mxu0 0
    %2409 = vmatprep.subr.bf16.mxu0 0
    %2410 = vmatpush1.bf16.msra.mxu0 0
    %2411 = vmatprep.subr.bf16.mxu0 0
    %2412 = vmatpush1.bf16.msra.mxu0 0
    %2413 = vmatprep.subr.bf16.mxu0 0
    %2414 = vmatpush1.bf16.msra.mxu0 0
    %2415 = vmatprep.subr.bf16.mxu0 0
    %2416 = vmatpush1.bf16.msra.mxu0 0
    %2417 = vmatprep.subr.bf16.mxu0 0
    %2418 = vmatpush1.bf16.msra.mxu0 0
    %2419 = vmatprep.subr.bf16.mxu0 0
    %2420 = vmatpush1.bf16.msra.mxu0 0
    %2421 = vmatprep.subr.bf16.mxu0 0
    %2422 = vmatpush1.bf16.msra.mxu0 0
    %2423 = vmatprep.subr.bf16.mxu0 0
    %2424 = vmatpush1.bf16.msra.mxu0 0
    %2425 = vmatprep.mubr.bf16.mxu0 0
    %2426 = vmatmul.mubr.bf16.gmra.mrb[0].mxu0 %v2387
    %v2427 = vpop.f32.mrb[0].mxu0
    %v2428 = vadd.f32 0.0, %v2427
    %v2429 = vpop.f32.mrb[0].mxu0
    %v2430 = vpop.f32.mrb[0].mxu0
    %v2431 = vpop.f32.mrb[0].mxu0
    %2432 = vdwg.mxu0
    %v2434 = vsel %vm2289, %v2379, 0
    %v2437 = vsel %vm2389, %v207, 0
    %2439 = vmatprep.subr.bf16.mxu0 0
    %2440 = vmatpush1.bf16.msra.mxu0 %v2437
    %2441 = vmatprep.subr.bf16.mxu0 0
    %2442 = vmatpush1.bf16.msra.mxu0 0
    %2443 = vmatprep.subr.bf16.mxu0 0
    %2444 = vmatpush1.bf16.msra.mxu0 0
    %2445 = vmatprep.subr.bf16.mxu0 0
    %2446 = vmatpush1.bf16.msra.mxu0 0
    %2447 = vmatprep.subr.bf16.mxu0 0
    %2448 = vmatpush1.bf16.msra.mxu0 0
    %2449 = vmatprep.subr.bf16.mxu0 0
    %2450 = vmatpush1.bf16.msra.mxu0 0
    %2451 = vmatprep.subr.bf16.mxu0 0
    %2452 = vmatpush1.bf16.msra.mxu0 0
    %2453 = vmatprep.subr.bf16.mxu0 0
    %2454 = vmatpush1.bf16.msra.mxu0 0
    %2455 = vmatprep.subr.bf16.mxu0 0
    %2456 = vmatpush1.bf16.msra.mxu0 0
    %2457 = vmatprep.subr.bf16.mxu0 0
    %2458 = vmatpush1.bf16.msra.mxu0 0
    %2459 = vmatprep.subr.bf16.mxu0 0
    %2460 = vmatpush1.bf16.msra.mxu0 0
    %2461 = vmatprep.subr.bf16.mxu0 0
    %2462 = vmatpush1.bf16.msra.mxu0 0
    %2463 = vmatprep.subr.bf16.mxu0 0
    %2464 = vmatpush1.bf16.msra.mxu0 0
    %2465 = vmatprep.subr.bf16.mxu0 0
    %2466 = vmatpush1.bf16.msra.mxu0 0
    %2467 = vmatprep.subr.bf16.mxu0 0
    %2468 = vmatpush1.bf16.msra.mxu0 0
    %2469 = vmatprep.subr.bf16.mxu0 0
    %2470 = vmatpush1.bf16.msra.mxu0 0
    %2471 = vmatprep.mubr.bf16.mxu0 0
    %2472 = vmatmul.mubr.bf16.gmra.mrb[0].mxu0 %v2434
    %v2473 = vpop.f32.mrb[0].mxu0
    %v2474 = vadd.f32 0.0, %v2473
    %v2475 = vpop.f32.mrb[0].mxu0
    %v2476 = vpop.f32.mrb[0].mxu0
    %v2477 = vpop.f32.mrb[0].mxu0
    %2478 = vdwg.mxu0
    %v2480 = vsel %vm2289, %v2380, 0
    %v2483 = vsel %vm2389, %v208, 0
    %2485 = vmatprep.subr.bf16.mxu0 0
    %2486 = vmatpush1.bf16.msra.mxu0 %v2483
    %2487 = vmatprep.subr.bf16.mxu0 0
    %2488 = vmatpush1.bf16.msra.mxu0 0
    %2489 = vmatprep.subr.bf16.mxu0 0
    %2490 = vmatpush1.bf16.msra.mxu0 0
    %2491 = vmatprep.subr.bf16.mxu0 0
    %2492 = vmatpush1.bf16.msra.mxu0 0
    %2493 = vmatprep.subr.bf16.mxu0 0
    %2494 = vmatpush1.bf16.msra.mxu0 0
    %2495 = vmatprep.subr.bf16.mxu0 0
    %2496 = vmatpush1.bf16.msra.mxu0 0
    %2497 = vmatprep.subr.bf16.mxu0 0
    %2498 = vmatpush1.bf16.msra.mxu0 0
    %2499 = vmatprep.subr.bf16.mxu0 0
    %2500 = vmatpush1.bf16.msra.mxu0 0
    %2501 = vmatprep.subr.bf16.mxu0 0
    %2502 = vmatpush1.bf16.msra.mxu0 0
    %2503 = vmatprep.subr.bf16.mxu0 0
    %2504 = vmatpush1.bf16.msra.mxu0 0
    %2505 = vmatprep.subr.bf16.mxu0 0
    %2506 = vmatpush1.bf16.msra.mxu0 0
    %2507 = vmatprep.subr.bf16.mxu0 0
    %2508 = vmatpush1.bf16.msra.mxu0 0
    %2509 = vmatprep.subr.bf16.mxu0 0
    %2510 = vmatpush1.bf16.msra.mxu0 0
    %2511 = vmatprep.subr.bf16.mxu0 0
    %2512 = vmatpush1.bf16.msra.mxu0 0
    %2513 = vmatprep.subr.bf16.mxu0 0
    %2514 = vmatpush1.bf16.msra.mxu0 0
    %2515 = vmatprep.subr.bf16.mxu0 0
    %2516 = vmatpush1.bf16.msra.mxu0 0
    %2517 = vmatprep.mubr.bf16.mxu0 0
    %2518 = vmatmul.mubr.bf16.gmra.mrb[0].mxu0 %v2480
    %v2519 = vpop.f32.mrb[0].mxu0
    %v2520 = vadd.f32 0.0, %v2519
    %v2521 = vpop.f32.mrb[0].mxu0
    %v2522 = vpop.f32.mrb[0].mxu0
    %v2523 = vpop.f32.mrb[0].mxu0
    %2524 = vdwg.mxu0
    %v2526 = vsel %vm2289, %v2381, 0
    %v2529 = vsel %vm2389, %v209, 0
    %2531 = vmatprep.subr.bf16.mxu0 0
    %2532 = vmatpush1.bf16.msra.mxu0 %v2529
    %2533 = vmatprep.subr.bf16.mxu0 0
    %2534 = vmatpush1.bf16.msra.mxu0 0
    %2535 = vmatprep.subr.bf16.mxu0 0
    %2536 = vmatpush1.bf16.msra.mxu0 0
    %2537 = vmatprep.subr.bf16.mxu0 0
    %2538 = vmatpush1.bf16.msra.mxu0 0
    %2539 = vmatprep.subr.bf16.mxu0 0
    %2540 = vmatpush1.bf16.msra.mxu0 0
    %2541 = vmatprep.subr.bf16.mxu0 0
    %2542 = vmatpush1.bf16.msra.mxu0 0
    %2543 = vmatprep.subr.bf16.mxu0 0
    %2544 = vmatpush1.bf16.msra.mxu0 0
    %2545 = vmatprep.subr.bf16.mxu0 0
    %2546 = vmatpush1.bf16.msra.mxu0 0
    %2547 = vmatprep.subr.bf16.mxu0 0
    %2548 = vmatpush1.bf16.msra.mxu0 0
    %2549 = vmatprep.subr.bf16.mxu0 0
    %2550 = vmatpush1.bf16.msra.mxu0 0
    %2551 = vmatprep.subr.bf16.mxu0 0
    %2552 = vmatpush1.bf16.msra.mxu0 0
    %2553 = vmatprep.subr.bf16.mxu0 0
    %2554 = vmatpush1.bf16.msra.mxu0 0
    %2555 = vmatprep.subr.bf16.mxu0 0
    %2556 = vmatpush1.bf16.msra.mxu0 0
    %2557 = vmatprep.subr.bf16.mxu0 0
    %2558 = vmatpush1.bf16.msra.mxu0 0
    %2559 = vmatprep.subr.bf16.mxu0 0
    %2560 = vmatpush1.bf16.msra.mxu0 0
    %2561 = vmatprep.subr.bf16.mxu0 0
    %2562 = vmatpush1.bf16.msra.mxu0 0
    %2563 = vmatprep.mubr.bf16.mxu0 0
    %2564 = vmatmul.mubr.bf16.gmra.mrb[0].mxu0 %v2526
    %v2565 = vpop.f32.mrb[0].mxu0
    %v2566 = vadd.f32 0.0, %v2565
    %v2567 = vpop.f32.mrb[0].mxu0
    %v2568 = vpop.f32.mrb[0].mxu0
    %v2569 = vpop.f32.mrb[0].mxu0
    %2570 = vdwg.mxu0
    %v2572 = vsel %vm2289, %v2382, 0
    %v2575 = vsel %vm2389, %v210, 0
    %2577 = vmatprep.subr.bf16.mxu0 0
    %2578 = vmatpush1.bf16.msra.mxu0 %v2575
    %2579 = vmatprep.subr.bf16.mxu0 0
    %2580 = vmatpush1.bf16.msra.mxu0 0
    %2581 = vmatprep.subr.bf16.mxu0 0
    %2582 = vmatpush1.bf16.msra.mxu0 0
    %2583 = vmatprep.subr.bf16.mxu0 0
    %2584 = vmatpush1.bf16.msra.mxu0 0
    %2585 = vmatprep.subr.bf16.mxu0 0
    %2586 = vmatpush1.bf16.msra.mxu0 0
    %2587 = vmatprep.subr.bf16.mxu0 0
    %2588 = vmatpush1.bf16.msra.mxu0 0
    %2589 = vmatprep.subr.bf16.mxu0 0
    %2590 = vmatpush1.bf16.msra.mxu0 0
    %2591 = vmatprep.subr.bf16.mxu0 0
    %2592 = vmatpush1.bf16.msra.mxu0 0
    %2593 = vmatprep.subr.bf16.mxu0 0
    %2594 = vmatpush1.bf16.msra.mxu0 0
    %2595 = vmatprep.subr.bf16.mxu0 0
    %2596 = vmatpush1.bf16.msra.mxu0 0
    %2597 = vmatprep.subr.bf16.mxu0 0
    %2598 = vmatpush1.bf16.msra.mxu0 0
    %2599 = vmatprep.subr.bf16.mxu0 0
    %2600 = vmatpush1.bf16.msra.mxu0 0
    %2601 = vmatprep.subr.bf16.mxu0 0
    %2602 = vmatpush1.bf16.msra.mxu0 0
    %2603 = vmatprep.subr.bf16.mxu0 0
    %2604 = vmatpush1.bf16.msra.mxu0 0
    %2605 = vmatprep.subr.bf16.mxu0 0
    %2606 = vmatpush1.bf16.msra.mxu0 0
    %2607 = vmatprep.subr.bf16.mxu0 0
    %2608 = vmatpush1.bf16.msra.mxu0 0
    %2609 = vmatprep.mubr.bf16.mxu0 0
    %2610 = vmatmul.mubr.bf16.gmra.mrb[0].mxu0 %v2572
    %v2611 = vpop.f32.mrb[0].mxu0
    %v2612 = vadd.f32 0.0, %v2611
    %v2613 = vpop.f32.mrb[0].mxu0
    %v2614 = vpop.f32.mrb[0].mxu0
    %v2615 = vpop.f32.mrb[0].mxu0
    %2616 = vdwg.mxu0
    %v2618 = vsel %vm2289, %v2383, 0
    %v2621 = vsel %vm2389, %v211, 0
    %2623 = vmatprep.subr.bf16.mxu0 0
    %2624 = vmatpush1.bf16.msra.mxu0 %v2621
    %2625 = vmatprep.subr.bf16.mxu0 0
    %2626 = vmatpush1.bf16.msra.mxu0 0
    %2627 = vmatprep.subr.bf16.mxu0 0
    %2628 = vmatpush1.bf16.msra.mxu0 0
    %2629 = vmatprep.subr.bf16.mxu0 0
    %2630 = vmatpush1.bf16.msra.mxu0 0
    %2631 = vmatprep.subr.bf16.mxu0 0
    %2632 = vmatpush1.bf16.msra.mxu0 0
    %2633 = vmatprep.subr.bf16.mxu0 0
    %2634 = vmatpush1.bf16.msra.mxu0 0
    %2635 = vmatprep.subr.bf16.mxu0 0
    %2636 = vmatpush1.bf16.msra.mxu0 0
    %2637 = vmatprep.subr.bf16.mxu0 0
    %2638 = vmatpush1.bf16.msra.mxu0 0
    %2639 = vmatprep.subr.bf16.mxu0 0
    %2640 = vmatpush1.bf16.msra.mxu0 0
    %2641 = vmatprep.subr.bf16.mxu0 0
    %2642 = vmatpush1.bf16.msra.mxu0 0
    %2643 = vmatprep.subr.bf16.mxu0 0
    %2644 = vmatpush1.bf16.msra.mxu0 0
    %2645 = vmatprep.subr.bf16.mxu0 0
    %2646 = vmatpush1.bf16.msra.mxu0 0
    %2647 = vmatprep.subr.bf16.mxu0 0
    %2648 = vmatpush1.bf16.msra.mxu0 0
    %2649 = vmatprep.subr.bf16.mxu0 0
    %2650 = vmatpush1.bf16.msra.mxu0 0
    %2651 = vmatprep.subr.bf16.mxu0 0
    %2652 = vmatpush1.bf16.msra.mxu0 0
    %2653 = vmatprep.subr.bf16.mxu0 0
    %2654 = vmatpush1.bf16.msra.mxu0 0
    %2655 = vmatprep.mubr.bf16.mxu0 0
    %2656 = vmatmul.mubr.bf16.gmra.mrb[0].mxu0 %v2618
    %v2657 = vpop.f32.mrb[0].mxu0
    %v2658 = vadd.f32 0.0, %v2657
    %v2659 = vpop.f32.mrb[0].mxu0
    %v2660 = vpop.f32.mrb[0].mxu0
    %v2661 = vpop.f32.mrb[0].mxu0
    %2662 = vdwg.mxu0
    %v2664 = vsel %vm2289, %v2384, 0
    %v2667 = vsel %vm2389, %v212, 0
    %2669 = vmatprep.subr.bf16.mxu0 0
    %2670 = vmatpush1.bf16.msra.mxu0 %v2667
    %2671 = vmatprep.subr.bf16.mxu0 0
    %2672 = vmatpush1.bf16.msra.mxu0 0
    %2673 = vmatprep.subr.bf16.mxu0 0
    %2674 = vmatpush1.bf16.msra.mxu0 0
    %2675 = vmatprep.subr.bf16.mxu0 0
    %2676 = vmatpush1.bf16.msra.mxu0 0
    %2677 = vmatprep.subr.bf16.mxu0 0
    %2678 = vmatpush1.bf16.msra.mxu0 0
    %2679 = vmatprep.subr.bf16.mxu0 0
    %2680 = vmatpush1.bf16.msra.mxu0 0
    %2681 = vmatprep.subr.bf16.mxu0 0
    %2682 = vmatpush1.bf16.msra.mxu0 0
    %2683 = vmatprep.subr.bf16.mxu0 0
    %2684 = vmatpush1.bf16.msra.mxu0 0
    %2685 = vmatprep.subr.bf16.mxu0 0
    %2686 = vmatpush1.bf16.msra.mxu0 0
    %2687 = vmatprep.subr.bf16.mxu0 0
    %2688 = vmatpush1.bf16.msra.mxu0 0
    %2689 = vmatprep.subr.bf16.mxu0 0
    %2690 = vmatpush1.bf16.msra.mxu0 0
    %2691 = vmatprep.subr.bf16.mxu0 0
    %2692 = vmatpush1.bf16.msra.mxu0 0
    %2693 = vmatprep.subr.bf16.mxu0 0
    %2694 = vmatpush1.bf16.msra.mxu0 0
    %2695 = vmatprep.subr.bf16.mxu0 0
    %2696 = vmatpush1.bf16.msra.mxu0 0
    %2697 = vmatprep.subr.bf16.mxu0 0
    %2698 = vmatpush1.bf16.msra.mxu0 0
    %2699 = vmatprep.subr.bf16.mxu0 0
    %2700 = vmatpush1.bf16.msra.mxu0 0
    %2701 = vmatprep.mubr.bf16.mxu0 0
    %2702 = vmatmul.mubr.bf16.gmra.mrb[0].mxu0 %v2664
    %v2703 = vpop.f32.mrb[0].mxu0
    %v2704 = vadd.f32 0.0, %v2703
    %v2705 = vpop.f32.mrb[0].mxu0
    %v2706 = vpop.f32.mrb[0].mxu0
    %v2707 = vpop.f32.mrb[0].mxu0
    %2708 = vdwg.mxu0
    %v2710 = vsel %vm2289, %v2385, 0
    %v2713 = vsel %vm2389, %v213, 0
    %2715 = vmatprep.subr.bf16.mxu0 0
    %2716 = vmatpush1.bf16.msra.mxu0 %v2713
    %2717 = vmatprep.subr.bf16.mxu0 0
    %2718 = vmatpush1.bf16.msra.mxu0 0
    %2719 = vmatprep.subr.bf16.mxu0 0
    %2720 = vmatpush1.bf16.msra.mxu0 0
    %2721 = vmatprep.subr.bf16.mxu0 0
    %2722 = vmatpush1.bf16.msra.mxu0 0
    %2723 = vmatprep.subr.bf16.mxu0 0
    %2724 = vmatpush1.bf16.msra.mxu0 0
    %2725 = vmatprep.subr.bf16.mxu0 0
    %2726 = vmatpush1.bf16.msra.mxu0 0
    %2727 = vmatprep.subr.bf16.mxu0 0
    %2728 = vmatpush1.bf16.msra.mxu0 0
    %2729 = vmatprep.subr.bf16.mxu0 0
    %2730 = vmatpush1.bf16.msra.mxu0 0
    %2731 = vmatprep.subr.bf16.mxu0 0
    %2732 = vmatpush1.bf16.msra.mxu0 0
    %2733 = vmatprep.subr.bf16.mxu0 0
    %2734 = vmatpush1.bf16.msra.mxu0 0
    %2735 = vmatprep.subr.bf16.mxu0 0
    %2736 = vmatpush1.bf16.msra.mxu0 0
    %2737 = vmatprep.subr.bf16.mxu0 0
    %2738 = vmatpush1.bf16.msra.mxu0 0
    %2739 = vmatprep.subr.bf16.mxu0 0
    %2740 = vmatpush1.bf16.msra.mxu0 0
    %2741 = vmatprep.subr.bf16.mxu0 0
    %2742 = vmatpush1.bf16.msra.mxu0 0
    %2743 = vmatprep.subr.bf16.mxu0 0
    %2744 = vmatpush1.bf16.msra.mxu0 0
    %2745 = vmatprep.subr.bf16.mxu0 0
    %2746 = vmatpush1.bf16.msra.mxu0 0
    %2747 = vmatprep.mubr.bf16.mxu0 0
    %2748 = vmatmul.mubr.bf16.gmra.mrb[0].mxu0 %v2710
    %v2749 = vpop.f32.mrb[0].mxu0
    %v2750 = vadd.f32 0.0, %v2749
    %v2751 = vpop.f32.mrb[0].mxu0
    %v2752 = vpop.f32.mrb[0].mxu0
    %v2753 = vpop.f32.mrb[0].mxu0
    %2754 = vdwg.mxu0
    %v2755 = vpack.c.bf16 %v2474, %v2428
    %v2756 = vpack.c.bf16 %v2566, %v2520
    %v2757 = vpack.c.bf16 %v2658, %v2612
    %v2758 = vpack.c.bf16 %v2750, %v2704
    %v2759 = vld [vmem:[#allocation17] sm:$0xf]
    %v2760 = vld [vmem:[#allocation17 + $0x4] sm:$0xf]
    %v2761 = vld [vmem:[#allocation17 + $0x8] sm:$0xf]
    %v2762 = vld [vmem:[#allocation17 + $0xc] sm:$0xf]
    %v2763 = vld [vmem:[#allocation17 + $0x10] sm:$0xf]
    %v2764 = vld [vmem:[#allocation17 + $0x14] sm:$0xf]
    %v2765 = vld [vmem:[#allocation17 + $0x18] sm:$0xf]
    %v2766 = vld [vmem:[#allocation17 + $0x1c] sm:$0xf]
    %v2767 = vld [vmem:[#allocation17 + $0x20] sm:$0xf]
    %v2768 = vld [vmem:[#allocation17 + $0x24] sm:$0xf]
    %v2769 = vld [vmem:[#allocation17 + $0x28] sm:$0xf]
    %v2770 = vld [vmem:[#allocation17 + $0x2c] sm:$0xf]
    %v2771 = vld [vmem:[#allocation17 + $0x30] sm:$0xf]
    %v2772 = vld [vmem:[#allocation17 + $0x34] sm:$0xf]
    %v2773 = vld [vmem:[#allocation17 + $0x38] sm:$0xf]
    %v2774 = vld [vmem:[#allocation17 + $0x3c] sm:$0xf]
    %v2775 = vld [vmem:[#allocation18] sm:$0xf]
    %v2776 = vld [vmem:[#allocation18 + $0x4] sm:$0xf]
    %v2777 = vld [vmem:[#allocation18 + $0x8] sm:$0xf]
    %v2778 = vld [vmem:[#allocation18 + $0xc] sm:$0xf]
    %v2779 = vld [vmem:[#allocation18 + $0x10] sm:$0xf]
    %v2780 = vld [vmem:[#allocation18 + $0x14] sm:$0xf]
    %v2781 = vld [vmem:[#allocation18 + $0x18] sm:$0xf]
    %v2782 = vld [vmem:[#allocation18 + $0x1c] sm:$0xf]
    %v2783 = vld [vmem:[#allocation18 + $0x20] sm:$0xf]
    %v2784 = vld [vmem:[#allocation18 + $0x24] sm:$0xf]
    %v2785 = vld [vmem:[#allocation18 + $0x28] sm:$0xf]
    %v2786 = vld [vmem:[#allocation18 + $0x2c] sm:$0xf]
    %v2787 = vld [vmem:[#allocation18 + $0x30] sm:$0xf]
    %v2788 = vld [vmem:[#allocation18 + $0x34] sm:$0xf]
    %v2789 = vld [vmem:[#allocation18 + $0x38] sm:$0xf]
    %v2790 = vld [vmem:[#allocation18 + $0x3c] sm:$0xf]
    %v2807 = vunpack.c.l.b16 %v2775
    %v2808 = vunpack.c.l.b16 %v2776
    %v2809 = vunpack.c.l.b16 %v2777
    %v2810 = vunpack.c.l.b16 %v2778
    %v2811 = vunpack.c.l.b16 %v2779
    %v2812 = vunpack.c.l.b16 %v2780
    %v2813 = vunpack.c.l.b16 %v2781
    %v2814 = vunpack.c.l.b16 %v2782
    %v2815 = vunpack.c.l.b16 %v2783
    %v2816 = vunpack.c.l.b16 %v2784
    %v2817 = vunpack.c.l.b16 %v2785
    %v2818 = vunpack.c.l.b16 %v2786
    %v2819 = vunpack.c.l.b16 %v2787
    %v2820 = vunpack.c.l.b16 %v2788
    %v2821 = vunpack.c.l.b16 %v2789
    %v2822 = vunpack.c.l.b16 %v2790
    %v2823 = vpack.c.b16 %v2808, %v2807
    %v2824 = vpack.c.b16 %v2810, %v2809
    %v2825 = vpack.c.b16 %v2812, %v2811
    %v2826 = vpack.c.b16 %v2814, %v2813
    %v2827 = vpack.c.b16 %v2816, %v2815
    %v2828 = vpack.c.b16 %v2818, %v2817
    %v2829 = vpack.c.b16 %v2820, %v2819
    %v2830 = vpack.c.b16 %v2822, %v2821
    %2839 = vmatprep.subr.bf16.mxu0 0
    %2840 = vmatpush1.bf16.msra.mxu0 %v2823
    %2841 = vmatprep.subr.bf16.mxu0 0
    %2842 = vmatpush1.bf16.msra.mxu0 %v2824
    %2843 = vmatprep.subr.bf16.mxu0 0
    %2844 = vmatpush1.bf16.msra.mxu0 %v2825
    %2845 = vmatprep.subr.bf16.mxu0 0
    %2846 = vmatpush1.bf16.msra.mxu0 %v2826
    %2847 = vmatprep.subr.bf16.mxu0 0
    %2848 = vmatpush1.bf16.msra.mxu0 %v2827
    %2849 = vmatprep.subr.bf16.mxu0 0
    %2850 = vmatpush1.bf16.msra.mxu0 %v2828
    %2851 = vmatprep.subr.bf16.mxu0 0
    %2852 = vmatpush1.bf16.msra.mxu0 %v2829
    %2853 = vmatprep.subr.bf16.mxu0 0
    %2854 = vmatpush1.bf16.msra.mxu0 %v2830
    %2855 = vmatprep.subr.bf16.mxu0 0
    %2856 = vmatpush1.bf16.msra.mxu0 0
    %2857 = vmatprep.subr.bf16.mxu0 0
    %2858 = vmatpush1.bf16.msra.mxu0 0
    %2859 = vmatprep.subr.bf16.mxu0 0
    %2860 = vmatpush1.bf16.msra.mxu0 0
    %2861 = vmatprep.subr.bf16.mxu0 0
    %2862 = vmatpush1.bf16.msra.mxu0 0
    %2863 = vmatprep.subr.bf16.mxu0 0
    %2864 = vmatpush1.bf16.msra.mxu0 0
    %2865 = vmatprep.subr.bf16.mxu0 0
    %2866 = vmatpush1.bf16.msra.mxu0 0
    %2867 = vmatprep.subr.bf16.mxu0 0
    %2868 = vmatpush1.bf16.msra.mxu0 0
    %2869 = vmatprep.subr.bf16.mxu0 0
    %2870 = vmatpush1.bf16.msra.mxu0 0
    %2871 = vmatprep.mubr.bf16.mxu0 0
    %2872 = vmatmul.mubr.bf16.gmra.mrb[0].mxu0 %v1828
    %v2873 = vpop.f32.mrb[0].mxu0
    %v2874 = vadd.f32 0.0, %v2873
    %v2875 = vpop.f32.mrb[0].mxu0
    %v2876 = vpop.f32.mrb[0].mxu0
    %v2877 = vadd.f32 0.0, %v2876
    %v2878 = vpop.f32.mrb[0].mxu0
    %2879 = vmatprep.mubr.bf16.mxu0 0
    %2880 = vmatmul.mubr.bf16.gmra.mrb[0].mxu0 %v1829
    %v2881 = vpop.f32.mrb[0].mxu0
    %v2882 = vadd.f32 0.0, %v2881
    %v2883 = vpop.f32.mrb[0].mxu0
    %v2884 = vpop.f32.mrb[0].mxu0
    %v2885 = vadd.f32 0.0, %v2884
    %v2886 = vpop.f32.mrb[0].mxu0
    %2887 = vmatprep.mubr.bf16.mxu0 0
    %2888 = vmatmul.mubr.bf16.gmra.mrb[0].mxu0 %v1830
    %v2889 = vpop.f32.mrb[0].mxu0
    %v2890 = vadd.f32 0.0, %v2889
    %v2891 = vpop.f32.mrb[0].mxu0
    %v2892 = vpop.f32.mrb[0].mxu0
    %v2893 = vadd.f32 0.0, %v2892
    %v2894 = vpop.f32.mrb[0].mxu0
    %2895 = vmatprep.mubr.bf16.mxu0 0
    %2896 = vmatmul.mubr.bf16.gmra.mrb[0].mxu0 %v1831
    %v2897 = vpop.f32.mrb[0].mxu0
    %v2898 = vadd.f32 0.0, %v2897
    %v2899 = vpop.f32.mrb[0].mxu0
    %v2900 = vpop.f32.mrb[0].mxu0
    %v2901 = vadd.f32 0.0, %v2900
    %v2902 = vpop.f32.mrb[0].mxu0
    %2903 = vdwg.mxu0
    %v2920 = vunpack.c.l.b16 %v2759
    %v2921 = vunpack.c.l.b16 %v2760
    %v2922 = vunpack.c.l.b16 %v2761
    %v2923 = vunpack.c.l.b16 %v2762
    %v2924 = vunpack.c.l.b16 %v2763
    %v2925 = vunpack.c.l.b16 %v2764
    %v2926 = vunpack.c.l.b16 %v2765
    %v2927 = vunpack.c.l.b16 %v2766
    %v2928 = vunpack.c.l.b16 %v2767
    %v2929 = vunpack.c.l.b16 %v2768
    %v2930 = vunpack.c.l.b16 %v2769
    %v2931 = vunpack.c.l.b16 %v2770
    %v2932 = vunpack.c.l.b16 %v2771
    %v2933 = vunpack.c.l.b16 %v2772
    %v2934 = vunpack.c.l.b16 %v2773
    %v2935 = vunpack.c.l.b16 %v2774
    %v2936 = vpack.c.b16 %v2921, %v2920
    %v2937 = vpack.c.b16 %v2923, %v2922
    %v2938 = vpack.c.b16 %v2925, %v2924
    %v2939 = vpack.c.b16 %v2927, %v2926
    %v2940 = vpack.c.b16 %v2929, %v2928
    %v2941 = vpack.c.b16 %v2931, %v2930
    %v2942 = vpack.c.b16 %v2933, %v2932
    %v2943 = vpack.c.b16 %v2935, %v2934
    %2952 = vmatprep.subr.bf16.mxu0 0
    %2953 = vmatpush1.bf16.msra.mxu0 %v2936
    %2954 = vmatprep.subr.bf16.mxu0 0
    %2955 = vmatpush1.bf16.msra.mxu0 %v2937
    %2956 = vmatprep.subr.bf16.mxu0 0
    %2957 = vmatpush1.bf16.msra.mxu0 %v2938
    %2958 = vmatprep.subr.bf16.mxu0 0
    %2959 = vmatpush1.bf16.msra.mxu0 %v2939
    %2960 = vmatprep.subr.bf16.mxu0 0
    %2961 = vmatpush1.bf16.msra.mxu0 %v2940
    %2962 = vmatprep.subr.bf16.mxu0 0
    %2963 = vmatpush1.bf16.msra.mxu0 %v2941
    %2964 = vmatprep.subr.bf16.mxu0 0
    %2965 = vmatpush1.bf16.msra.mxu0 %v2942
    %2966 = vmatprep.subr.bf16.mxu0 0
    %2967 = vmatpush1.bf16.msra.mxu0 %v2943
    %2968 = vmatprep.subr.bf16.mxu0 0
    %2969 = vmatpush1.bf16.msra.mxu0 0
    %2970 = vmatprep.subr.bf16.mxu0 0
    %2971 = vmatpush1.bf16.msra.mxu0 0
    %2972 = vmatprep.subr.bf16.mxu0 0
    %2973 = vmatpush1.bf16.msra.mxu0 0
    %2974 = vmatprep.subr.bf16.mxu0 0
    %2975 = vmatpush1.bf16.msra.mxu0 0
    %2976 = vmatprep.subr.bf16.mxu0 0
    %2977 = vmatpush1.bf16.msra.mxu0 0
    %2978 = vmatprep.subr.bf16.mxu0 0
    %2979 = vmatpush1.bf16.msra.mxu0 0
    %2980 = vmatprep.subr.bf16.mxu0 0
    %2981 = vmatpush1.bf16.msra.mxu0 0
    %2982 = vmatprep.subr.bf16.mxu0 0
    %2983 = vmatpush1.bf16.msra.mxu0 0
    %2984 = vmatprep.mubr.bf16.mxu0 0
    %2985 = vmatmul.mubr.bf16.gmra.mrb[0].mxu0 %v2755
    %v2986 = vpop.f32.mrb[0].mxu0
    %v2987 = vadd.f32 %v2874, %v2986
    %v2988 = vpop.f32.mrb[0].mxu0
    %v2989 = vpop.f32.mrb[0].mxu0
    %v2990 = vadd.f32 %v2877, %v2989
    %v2991 = vpop.f32.mrb[0].mxu0
    %2992 = vmatprep.mubr.bf16.mxu0 0
    %2993 = vmatmul.mubr.bf16.gmra.mrb[0].mxu0 %v2756
    %v2994 = vpop.f32.mrb[0].mxu0
    %v2995 = vadd.f32 %v2882, %v2994
    %v2996 = vpop.f32.mrb[0].mxu0
    %v2997 = vpop.f32.mrb[0].mxu0
    %v2998 = vadd.f32 %v2885, %v2997
    %v2999 = vpop.f32.mrb[0].mxu0
    %3000 = vmatprep.mubr.bf16.mxu0 0
    %3001 = vmatmul.mubr.bf16.gmra.mrb[0].mxu0 %v2757
    %v3002 = vpop.f32.mrb[0].mxu0
    %v3003 = vadd.f32 %v2890, %v3002
    %v3004 = vpop.f32.mrb[0].mxu0
    %v3005 = vpop.f32.mrb[0].mxu0
    %v3006 = vadd.f32 %v2893, %v3005
    %v3007 = vpop.f32.mrb[0].mxu0
    %3008 = vmatprep.mubr.bf16.mxu0 0
    %3009 = vmatmul.mubr.bf16.gmra.mrb[0].mxu0 %v2758
    %v3010 = vpop.f32.mrb[0].mxu0
    %v3011 = vadd.f32 %v2898, %v3010
    %v3012 = vpop.f32.mrb[0].mxu0
    %v3013 = vpop.f32.mrb[0].mxu0
    %v3014 = vadd.f32 %v2901, %v3013
    %v3015 = vpop.f32.mrb[0].mxu0
    %3016 = vdwg.mxu0
    %v3017 = vtanh.pop %v2987
    %v3018 = vtanh.pop %v2990
    %v3019 = vtanh.pop %v2995
    %v3020 = vtanh.pop %v2998
    %v3021 = vtanh.pop %v3003
    %v3022 = vtanh.pop %v3006
    %v3023 = vtanh.pop %v3011
    %v3024 = vtanh.pop %v3014
    %v3025 = vadd.f32 %v1820, %v3017
    %v3026 = vadd.f32 %v1821, %v3018
    %v3027 = vadd.f32 %v1822, %v3019
    %v3028 = vadd.f32 %v1823, %v3020
    %v3029 = vadd.f32 %v1824, %v3021
    %v3030 = vadd.f32 %v1825, %v3022
    %v3031 = vadd.f32 %v1826, %v3023
    %v3032 = vadd.f32 %v1827, %v3024
    %v3033 = vmul.f32 %v3025, 0.70710677
    %v3034 = vmul.f32 %v3026, 0.70710677
    %v3035 = vmul.f32 %v3027, 0.70710677
    %v3036 = vmul.f32 %v3028, 0.70710677
    %v3037 = vmul.f32 %v3029, 0.70710677
    %v3038 = vmul.f32 %v3030, 0.70710677
    %v3039 = vmul.f32 %v3031, 0.70710677
    %v3040 = vmul.f32 %v3032, 0.70710677
    %v3041 = vpack.c.bf16 %v3034, %v3033
    %v3042 = vpack.c.bf16 %v3036, %v3035
    %v3043 = vpack.c.bf16 %v3038, %v3037
    %v3044 = vpack.c.bf16 %v3040, %v3039
    %v3045 = vld [vmem:[#allocation20] sm:$0xf]
    %v3046 = vld [vmem:[#allocation20 + $0x4] sm:$0xf]
    %v3047 = vld [vmem:[#allocation20 + $0x8] sm:$0xf]
    %v3048 = vld [vmem:[#allocation20 + $0xc] sm:$0xf]
    %v3049 = vld [vmem:[#allocation20 + $0x10] sm:$0xf]
    %v3050 = vld [vmem:[#allocation20 + $0x14] sm:$0xf]
    %v3051 = vld [vmem:[#allocation20 + $0x18] sm:$0xf]
    %v3052 = vld [vmem:[#allocation20 + $0x1c] sm:$0xf]
    %v3053 = vld [vmem:[#allocation20 + $0x20] sm:$0xf]
    %v3054 = vld [vmem:[#allocation20 + $0x24] sm:$0xf]
    %v3055 = vld [vmem:[#allocation20 + $0x28] sm:$0xf]
    %v3056 = vld [vmem:[#allocation20 + $0x2c] sm:$0xf]
    %v3057 = vld [vmem:[#allocation20 + $0x30] sm:$0xf]
    %v3058 = vld [vmem:[#allocation20 + $0x34] sm:$0xf]
    %v3059 = vld [vmem:[#allocation20 + $0x38] sm:$0xf]
    %v3060 = vld [vmem:[#allocation20 + $0x3c] sm:$0xf]
    %v3061 = vld [vmem:[#allocation21] sm:$0x1]
    %v3063 = vlaneseq
    %v3064 = vshrl.u32 %v3063, 7
    %v3065 = vsub.s32 0, %v3064
    %v3066 = vrot.slane %v3061, %v3065
    %v3084 = vunpack.c.l.b16 %v3045
    %v3085 = vunpack.c.l.b16 %v3046
    %v3086 = vunpack.c.l.b16 %v3047
    %v3087 = vunpack.c.l.b16 %v3048
    %v3088 = vunpack.c.l.b16 %v3049
    %v3089 = vunpack.c.l.b16 %v3050
    %v3090 = vunpack.c.l.b16 %v3051
    %v3091 = vunpack.c.l.b16 %v3052
    %v3092 = vunpack.c.l.b16 %v3053
    %v3093 = vunpack.c.l.b16 %v3054
    %v3094 = vunpack.c.l.b16 %v3055
    %v3095 = vunpack.c.l.b16 %v3056
    %v3096 = vunpack.c.l.b16 %v3057
    %v3097 = vunpack.c.l.b16 %v3058
    %v3098 = vunpack.c.l.b16 %v3059
    %v3099 = vunpack.c.l.b16 %v3060
    %v3100 = vpack.c.b16 %v3085, %v3084
    %v3101 = vpack.c.b16 %v3087, %v3086
    %v3102 = vpack.c.b16 %v3089, %v3088
    %v3103 = vpack.c.b16 %v3091, %v3090
    %v3104 = vpack.c.b16 %v3093, %v3092
    %v3105 = vpack.c.b16 %v3095, %v3094
    %v3106 = vpack.c.b16 %v3097, %v3096
    %v3107 = vpack.c.b16 %v3099, %v3098
    %3116 = vmatprep.subr.bf16.mxu0 0
    %3117 = vmatpush1.bf16.msra.mxu0 %v3100
    %3118 = vmatprep.subr.bf16.mxu0 0
    %3119 = vmatpush1.bf16.msra.mxu0 %v3101
    %3120 = vmatprep.subr.bf16.mxu0 0
    %3121 = vmatpush1.bf16.msra.mxu0 %v3102
    %3122 = vmatprep.subr.bf16.mxu0 0
    %3123 = vmatpush1.bf16.msra.mxu0 %v3103
    %3124 = vmatprep.subr.bf16.mxu0 0
    %3125 = vmatpush1.bf16.msra.mxu0 %v3104
    %3126 = vmatprep.subr.bf16.mxu0 0
    %3127 = vmatpush1.bf16.msra.mxu0 %v3105
    %3128 = vmatprep.subr.bf16.mxu0 0
    %3129 = vmatpush1.bf16.msra.mxu0 %v3106
    %3130 = vmatprep.subr.bf16.mxu0 0
    %3131 = vmatpush1.bf16.msra.mxu0 %v3107
    %3132 = vmatprep.subr.bf16.mxu0 0
    %3133 = vmatpush1.bf16.msra.mxu0 0
    %3134 = vmatprep.subr.bf16.mxu0 0
    %3135 = vmatpush1.bf16.msra.mxu0 0
    %3136 = vmatprep.subr.bf16.mxu0 0
    %3137 = vmatpush1.bf16.msra.mxu0 0
    %3138 = vmatprep.subr.bf16.mxu0 0
    %3139 = vmatpush1.bf16.msra.mxu0 0
    %3140 = vmatprep.subr.bf16.mxu0 0
    %3141 = vmatpush1.bf16.msra.mxu0 0
    %3142 = vmatprep.subr.bf16.mxu0 0
    %3143 = vmatpush1.bf16.msra.mxu0 0
    %3144 = vmatprep.subr.bf16.mxu0 0
    %3145 = vmatpush1.bf16.msra.mxu0 0
    %3146 = vmatprep.subr.bf16.mxu0 0
    %3147 = vmatpush1.bf16.msra.mxu0 0
    %3148 = vmatprep.mubr.bf16.mxu0 0
    %3149 = vmatmul.mubr.bf16.gmra.mrb[0].mxu0 %v3041
    %v3150 = vpop.f32.mrb[0].mxu0
    %v3151 = vadd.f32 %v3066, %v3150
    %v3152 = vpop.f32.mrb[0].mxu0
    %v3153 = vpop.f32.mrb[0].mxu0
    %v3154 = vadd.f32 %v3066, %v3153
    %v3155 = vpop.f32.mrb[0].mxu0
    %3156 = vmatprep.mubr.bf16.mxu0 0
    %3157 = vmatmul.mubr.bf16.gmra.mrb[0].mxu0 %v3042
    %v3158 = vpop.f32.mrb[0].mxu0
    %v3159 = vadd.f32 %v3066, %v3158
    %v3160 = vpop.f32.mrb[0].mxu0
    %v3161 = vpop.f32.mrb[0].mxu0
    %v3162 = vadd.f32 %v3066, %v3161
    %v3163 = vpop.f32.mrb[0].mxu0
    %3164 = vmatprep.mubr.bf16.mxu0 0
    %3165 = vmatmul.mubr.bf16.gmra.mrb[0].mxu0 %v3043
    %v3166 = vpop.f32.mrb[0].mxu0
    %v3167 = vadd.f32 %v3066, %v3166
    %v3168 = vpop.f32.mrb[0].mxu0
    %v3169 = vpop.f32.mrb[0].mxu0
    %v3170 = vadd.f32 %v3066, %v3169
    %v3171 = vpop.f32.mrb[0].mxu0
    %3172 = vmatprep.mubr.bf16.mxu0 0
    %3173 = vmatmul.mubr.bf16.gmra.mrb[0].mxu0 %v3044
    %v3174 = vpop.f32.mrb[0].mxu0
    %v3175 = vadd.f32 %v3066, %v3174
    %v3176 = vpop.f32.mrb[0].mxu0
    %v3177 = vpop.f32.mrb[0].mxu0
    %v3178 = vadd.f32 %v3066, %v3177
    %v3179 = vpop.f32.mrb[0].mxu0
    %3180 = vdwg.mxu0
    %3181 = vmax.xlane.f32.xlu0 %v3151
    %v3182 = vpop.xlane.xlu0 %3181
    %3183 = vmax.xlane.f32.xlu0 %v3154
    %v3184 = vpop.xlane.xlu0 %3183
    %3185 = vmax.xlane.f32.xlu0 %v3159
    %v3186 = vpop.xlane.xlu0 %3185
    %3187 = vmax.xlane.f32.xlu0 %v3162
    %v3188 = vpop.xlane.xlu0 %3187
    %3189 = vmax.xlane.f32.xlu0 %v3167
    %v3190 = vpop.xlane.xlu0 %3189
    %3191 = vmax.xlane.f32.xlu0 %v3170
    %v3192 = vpop.xlane.xlu0 %3191
    %3193 = vmax.xlane.f32.xlu0 %v3175
    %v3194 = vpop.xlane.xlu0 %3193
    %3195 = vmax.xlane.f32.xlu0 %v3178
    %v3196 = vpop.xlane.xlu0 %3195
    %v3197 = vsub.f32 %v3151, %v3182
    %v3198 = vsub.f32 %v3154, %v3184
    %v3199 = vsub.f32 %v3159, %v3186
    %v3200 = vsub.f32 %v3162, %v3188
    %v3201 = vsub.f32 %v3167, %v3190
    %v3202 = vsub.f32 %v3170, %v3192
    %v3203 = vsub.f32 %v3175, %v3194
    %v3204 = vsub.f32 %v3178, %v3196
    %v3205 = vmul.f32 %v3197, 1.442695
    %v3206 = vpow.pop %v3205
    %v3207 = vmul.f32 %v3198, 1.442695
    %v3208 = vpow.pop %v3207
    %v3209 = vmul.f32 %v3199, 1.442695
    %v3210 = vpow.pop %v3209
    %v3211 = vmul.f32 %v3200, 1.442695
    %v3212 = vpow.pop %v3211
    %v3213 = vmul.f32 %v3201, 1.442695
    %v3214 = vpow.pop %v3213
    %v3215 = vmul.f32 %v3202, 1.442695
    %v3216 = vpow.pop %v3215
    %v3217 = vmul.f32 %v3203, 1.442695
    %v3218 = vpow.pop %v3217
    %v3219 = vmul.f32 %v3204, 1.442695
    %v3220 = vpow.pop %v3219
    %3221 = vadd.xlane.f32.xlu0 %v3206
    %v3222 = vpop.xlane.xlu0 %3221
    %3223 = vadd.xlane.f32.xlu0 %v3208
    %v3224 = vpop.xlane.xlu0 %3223
    %3225 = vadd.xlane.f32.xlu0 %v3210
    %v3226 = vpop.xlane.xlu0 %3225
    %3227 = vadd.xlane.f32.xlu0 %v3212
    %v3228 = vpop.xlane.xlu0 %3227
    %3229 = vadd.xlane.f32.xlu0 %v3214
    %v3230 = vpop.xlane.xlu0 %3229
    %3231 = vadd.xlane.f32.xlu0 %v3216
    %v3232 = vpop.xlane.xlu0 %3231
    %3233 = vadd.xlane.f32.xlu0 %v3218
    %v3234 = vpop.xlane.xlu0 %3233
    %3235 = vadd.xlane.f32.xlu0 %v3220
    %v3236 = vpop.xlane.xlu0 %3235
    %v3237 = vlog2.pop %v3222
    %v3238 = vmul.f32 %v3237, 0.6931472
    %v3239 = vlog2.pop %v3224
    %v3240 = vmul.f32 %v3239, 0.6931472
    %v3241 = vlog2.pop %v3226
    %v3242 = vmul.f32 %v3241, 0.6931472
    %v3243 = vlog2.pop %v3228
    %v3244 = vmul.f32 %v3243, 0.6931472
    %v3245 = vlog2.pop %v3230
    %v3246 = vmul.f32 %v3245, 0.6931472
    %v3247 = vlog2.pop %v3232
    %v3248 = vmul.f32 %v3247, 0.6931472
    %v3249 = vlog2.pop %v3234
    %v3250 = vmul.f32 %v3249, 0.6931472
    %v3251 = vlog2.pop %v3236
    %v3252 = vmul.f32 %v3251, 0.6931472
    %v3253 = vadd.f32 %v3238, %v3182
    %v3254 = vadd.f32 %v3240, %v3184
    %v3255 = vadd.f32 %v3242, %v3186
    %v3256 = vadd.f32 %v3244, %v3188
    %v3257 = vadd.f32 %v3246, %v3190
    %v3258 = vadd.f32 %v3248, %v3192
    %v3259 = vadd.f32 %v3250, %v3194
    %v3260 = vadd.f32 %v3252, %v3196
    %v3261 = vsub.f32 %v3151, %v3253
    %v3262 = vsub.f32 %v3154, %v3254
    %v3263 = vsub.f32 %v3159, %v3255
    %v3264 = vsub.f32 %v3162, %v3256
    %v3265 = vsub.f32 %v3167, %v3257
    %v3266 = vsub.f32 %v3170, %v3258
    %v3267 = vsub.f32 %v3175, %v3259
    %v3268 = vsub.f32 %v3178, %v3260
    %3269 = vst [vmem:[#allocation23] sm:$0xff] %v3261
    %3270 = vst [vmem:[#allocation23 + $0x8] sm:$0xff] %v3262
    %3271 = vst [vmem:[#allocation23 + $0x10] sm:$0xff] %v3263
    %3272 = vst [vmem:[#allocation23 + $0x18] sm:$0xff] %v3264
    %3273 = vst [vmem:[#allocation23 + $0x20] sm:$0xff] %v3265
    %3274 = vst [vmem:[#allocation23 + $0x28] sm:$0xff] %v3266
    %3275 = vst [vmem:[#allocation23 + $0x30] sm:$0xff] %v3267
    %3276 = vst [vmem:[#allocation23 + $0x38] sm:$0xff] %v3268
    // Predicated region
    $region98: #{tpu_custom_call.1} parent=1 // pred_check
      _
    $region99: #{tpu_custom_call.1} parent=1 // pred_check_branch
      %3278 = sbr.rel (0) target = $region101
    $region100: #{tpu_custom_call.1} parent=1 // pred_region
      %s3280 = ssub.s32 1024, 1024
      %3281 = vsyncadd [#allocation5], %s3280
      %s3282 = sshll.u32 [#allocation23], 4
      %s3283 = int_to_ptr.vmem [resolvable:$true] %s3282
      %3288 = dma.vmem_to_hbm [thread:$0]  %s3283, 1024, %s12, [#allocation5], 128, 128, 8
    $region101: #{tpu_custom_call.1} parent=1 // pred_fallthru
      _
    // Predicated region
    $region102: #{tpu_custom_call.1} parent=1 // pred_check
      _
    $region103: #{tpu_custom_call.1} parent=1 // pred_check_branch
      %3290 = sbr.rel (0) target = $region105
    $region104: #{tpu_custom_call.1} parent=1 // pred_region
      %3291 = dma.done [#allocation5], 1024
    $region105: #{tpu_custom_call.1} parent=1 // pred_fallthru
      _
    %3292 = vsyncpa [#allocation4], 1
    %3293 = vsyncpa [#allocation7], 1
    %3294 = vsyncpa [#allocation10], 1
    %3295 = vsyncpa [#allocation13], 1
    %3296 = vsyncpa [#allocation16], 1
    %3297 = vsyncpa [#allocation19], 1
    %3298 = vsyncpa [#allocation22], 1
    %3299 = vsyncpa [#allocation5], 1

</llo_original>
